<compile_context>
chip_gen: v6e
topology: v6e:2x2x1
jax: 0.10.0
libtpu: 0.0.40
codegen_flags: <defaults>
</compile_context>

<pallas_src>
import functools

import jax
import jax.numpy as jnp
from jax.experimental import pallas as pl
from jax.experimental.pallas import tpu as pltpu


def _round_up(n, m):
    return ((n + m - 1) // m) * m


# ----------------------------- Pallas kernel --------------------------------
def _dsn_kernel(x_ref,
                wp_ref, ws_ref, wdp_ref, wds_ref, w128_ref, w512_ref,
                bias_ref,
                priv_ref, sh_ref, rec_ref, e128_ref, e512_ref,
                *, bias_off):
    def bias(name):
        off, n = bias_off[name]
        return bias_ref[:, off:off + n]                     # (1, n) f32, static slice

    x = x_ref[...].astype(jnp.bfloat16)                     # (TB, 400)

    # encoders: bf16 MXU matmul, f32 accumulation, f32 bias add (VPU)
    priv = jnp.dot(x, wp_ref[...], preferred_element_type=jnp.float32) + bias('bp')
    sh = jnp.dot(x, ws_ref[...], preferred_element_type=jnp.float32) + bias('bs')

    priv_bf = priv.astype(jnp.bfloat16)
    sh_bf = sh.astype(jnp.bfloat16)

    # rec_code = concat([priv, sh], 1) @ W_dec + b_dec   (split matmul, same math;
    # padded shared lanes are zero on both operands, so they contribute nothing)
    rec = (jnp.dot(priv_bf, wdp_ref[...], preferred_element_type=jnp.float32)
           + jnp.dot(sh_bf, wds_ref[...], preferred_element_type=jnp.float32)
           + bias('bd'))

    e128 = jnp.dot(sh_bf, w128_ref[...], preferred_element_type=jnp.float32) + bias('b128')
    e512 = jnp.dot(priv_bf, w512_ref[...], preferred_element_type=jnp.float32) + bias('b512')

    priv_ref[...] = priv
    sh_ref[...] = sh
    rec_ref[...] = rec
    e128_ref[...] = e128
    e512_ref[...] = e512


# ----------------------------- Forward builder --------------------------------
def _build_forward(bias_off, shared_real):
    kernel = functools.partial(_dsn_kernel, bias_off=bias_off)

    @jax.jit
    def fwd(x, wp, ws, wdp, wds, w128, w512, biases):
        B, F = x.shape
        TB = min(128, _round_up(B, 8))          # batch tile (multiple of 8 sublanes)
        Bp = _round_up(B, TB)
        if Bp != B:
            x = jnp.pad(x, ((0, Bp - B), (0, 0)))
        grid = (Bp // TB,)

        n_priv = wp.shape[1]
        n_sh = ws.shape[1]                       # padded shared dim (128)
        n_rec = wdp.shape[1]
        n_128 = w128.shape[1]
        n_512 = w512.shape[1]

        def weight_spec(shape):
            return pl.BlockSpec(shape, lambda i: (0, 0))     # resident across batch tiles

        def row_spec(n):
            return pl.BlockSpec((TB, n), lambda i: (i, 0))

        flops = 2 * Bp * (F * n_priv + F * shared_real
                          + n_priv * n_rec + shared_real * n_rec
                          + shared_real * n_128 + n_priv * n_512)
        bytes_accessed = (2 * (wp.size + ws.size + wdp.size + wds.size + w128.size + w512.size)
                          + 4 * (x.size + biases.size
                                 + Bp * (n_priv + n_sh + n_rec + n_128 + n_512)))

        outs = pl.pallas_call(
            kernel,
            out_shape=(
                jax.ShapeDtypeStruct((Bp, n_priv), jnp.float32),   # private_code
                jax.ShapeDtypeStruct((Bp, n_sh), jnp.float32),     # shared_code (padded)
                jax.ShapeDtypeStruct((Bp, n_rec), jnp.float32),    # rec_code
                jax.ShapeDtypeStruct((Bp, n_128), jnp.float32),    # embedding128
                jax.ShapeDtypeStruct((Bp, n_512), jnp.float32),    # embedding512
            ),
            grid=grid,
            in_specs=[
                row_spec(F),
                weight_spec(wp.shape), weight_spec(ws.shape),
                weight_spec(wdp.shape), weight_spec(wds.shape),
                weight_spec(w128.shape), weight_spec(w512.shape),
                weight_spec(biases.shape),
            ],
            out_specs=(row_spec(n_priv), row_spec(n_sh), row_spec(n_rec),
                       row_spec(n_128), row_spec(n_512)),
            compiler_params=pltpu.CompilerParams(
                dimension_semantics=("parallel",)),
            cost_estimate=pl.CostEstimate(flops=flops, transcendentals=0,
                                          bytes_accessed=bytes_accessed),
        )(x, wp, ws, wdp, wds, w128, w512, biases)

        priv, sh, rec, e128, e512 = outs
        if Bp != B:
            priv, sh, rec, e128, e512 = (o[:B] for o in (priv, sh, rec, e128, e512))
        sh = sh[:, :shared_real]                 # drop lane padding of shared_code
        return priv, sh, rec, e128, e512

    return fwd


# ----------------------------- Parameter setup -------------------------------
def _init_linear(key, in_f, out_f):
    """PyTorch nn.Linear default init: U(-1/sqrt(in_f), 1/sqrt(in_f))."""
    kw, kb = jax.random.split(key)
    bound = 1.0 / (in_f ** 0.5)
    # stored PyTorch-style as (out, in); transposed/cast once in __init__
    w = jax.random.uniform(kw, (out_f, in_f), jnp.float32, -bound, bound)
    b = jax.random.uniform(kb, (out_f,), jnp.float32, -bound, bound)
    return w, b


class DSNPallas:
    def __init__(self, key, code_size=100, n_class=10, inputsize=400, outputsize=200):
        del code_size, n_class  # fc/pred heads are not used in forward()
        output = int(outputsize * 2)                 # 400  (private dim)
        shared_out = int(outputsize / 2)             # 100
        dec_in = shared_out + output                 # 500
        emb512_out = int(output * 2)                 # 800

        keys = jax.random.split(key, 6)
        self.w_src, self.b_src = _init_linear(keys[0], inputsize, output)
        self.w_tgt, self.b_tgt = _init_linear(keys[1], inputsize, output)
        self.w_sh, self.b_sh = _init_linear(keys[2], inputsize, shared_out)
        self.w_dec, self.b_dec = _init_linear(keys[3], dec_in, inputsize)
        self.w_e128, self.b_e128 = _init_linear(keys[4], shared_out, outputsize)
        self.w_e512, self.b_e512 = _init_linear(keys[5], output, emb512_out)

        shared_pad = _round_up(shared_out, 128)      # 128

        # ----- one-time weight preprocessing (hoisted out of __call__) -----
        # transpose to (in, out), pad shared dims to 128 lanes with zeros, cast to bf16
        self._wp = {'source': self.w_src.T.astype(jnp.bfloat16),
                    'target': self.w_tgt.T.astype(jnp.bfloat16)}        # (400, 400)
        ws_t = jnp.zeros((inputsize, shared_pad), jnp.float32).at[:, :shared_out].set(self.w_sh.T)
        self._ws = ws_t.astype(jnp.bfloat16)                            # (400, 128)
        wdec_t = self.w_dec.T                                           # (500, 400)
        self._wdp = wdec_t[:output].astype(jnp.bfloat16)                # (400, 400)
        wds_p = jnp.zeros((shared_pad, inputsize), jnp.float32).at[:shared_out].set(wdec_t[output:])
        self._wds = wds_p.astype(jnp.bfloat16)                          # (128, 400)
        w128_p = jnp.zeros((shared_pad, outputsize), jnp.float32).at[:shared_out].set(self.w_e128.T)
        self._w128 = w128_p.astype(jnp.bfloat16)                        # (128, 200)
        self._w512 = self.w_e512.T.astype(jnp.bfloat16)                 # (400, 800)

        # ----- pack all biases into one lane-padded (1, N) f32 row (one DMA) -----
        bs_pad = jnp.zeros((shared_pad,), jnp.float32).at[:shared_out].set(self.b_sh)

        def pack(bp_vec):
            segs, off, cur = [], {}, 0
            for name, vec in (('bp', bp_vec), ('bs', bs_pad), ('bd', self.b_dec),
                              ('b128', self.b_e128), ('b512', self.b_e512)):
                n = int(vec.shape[0])
                npad = _round_up(n, 128)
                segs.append(jnp.zeros((npad,), jnp.float32).at[:n].set(vec))
                off[name] = (cur, n)
                cur += npad
            return jnp.concatenate(segs)[None, :], off

        bias_src, bias_off = pack(self.b_src)
        bias_tgt, _ = pack(self.b_tgt)
        self._bias = {'source': bias_src, 'target': bias_tgt}

        self._forward = _build_forward(bias_off, shared_out)

        # force preprocessing to materialize now, not on first call
        jax.block_until_ready((self._wp['source'], self._wp['target'], self._ws, self._wdp,
                               self._wds, self._w128, self._w512, bias_src, bias_tgt))

    def __call__(self, input_data, mode, rec_scheme, p=0.0):
        assert rec_scheme == 'all', "only rec_scheme='all' is shape-consistent with the defaults"
        if mode not in ('source', 'target'):
            raise ValueError(mode)

        priv, sh, rec, e128, e512 = self._forward(
            input_data, self._wp[mode], self._ws, self._wdp, self._wds,
            self._w128, self._w512, self._bias[mode])

        result = [priv, sh, 0]
        if mode == 'source':
            result.append([])   # class_label placeholder, exactly as in the PyTorch forward
        result.extend([rec, e128, e512])
        return result


# ----------------------------------- main ------------------------------------
if __name__ == "__main__":
    key = jax.random.PRNGKey(0)
    k_params, k_x = jax.random.split(key)

    model = DSNPallas(k_params, code_size=100, n_class=10, inputsize=400, outputsize=200)

    B, INPUTSIZE = 8, 400
    x = jax.random.normal(k_x, (B, INPUTSIZE), jnp.float32)

    out = model(x, mode='source', rec_scheme='all')
    private_code, shared_code, domain_label, class_label, rec_code, emb128, emb512 = out

    jax.block_until_ready((private_code, shared_code, rec_code, emb128, emb512))

    assert private_code.shape == (B, 400)
    assert shared_code.shape == (B, 100)
    assert rec_code.shape == (B, 400)
    assert emb128.shape == (B, 200)
    assert emb512.shape == (B, 800)

    # cross-check against a plain-JAX reference using the same bf16-cast weights
    def ref_linear(a, w, b):
        return jnp.dot(a.astype(jnp.bfloat16), w.T.astype(jnp.bfloat16),
                       preferred_element_type=jnp.float32) + b

    ref_priv = ref_linear(x, model.w_src, model.b_src)
    ref_sh = ref_linear(x, model.w_sh, model.b_sh)
    ref_union = jnp.concatenate([ref_priv, ref_sh], axis=1)
    ref_rec = ref_linear(ref_union, model.w_dec, model.b_dec)
    ref_e128 = ref_linear(ref_sh, model.w_e128, model.b_e128)
    ref_e512 = ref_linear(ref_priv, model.w_e512, model.b_e512)
    for got, ref in [(private_code, ref_priv), (shared_code, ref_sh),
                     (rec_code, ref_rec), (emb128, ref_e128), (emb512, ref_e512)]:
        assert jnp.allclose(got, ref, atol=2e-3, rtol=2e-3)

    # coarse sanity check vs the full-f32 PyTorch-equivalent math (bf16 weights => ~1% error)
    f32_priv = x @ model.w_src.T + model.b_src
    f32_sh = x @ model.w_sh.T + model.b_sh
    f32_rec = jnp.concatenate([f32_priv, f32_sh], axis=1) @ model.w_dec.T + model.b_dec
    f32_e128 = f32_sh @ model.w_e128.T + model.b_e128
    f32_e512 = f32_priv @ model.w_e512.T + model.b_e512
    for got, ref in [(private_code, f32_priv), (shared_code, f32_sh),
                     (rec_code, f32_rec), (emb128, f32_e128), (emb512, f32_e512)]:
        assert jnp.allclose(got, ref, atol=5e-2, rtol=5e-2)

    print("KERNEL_OK")
</pallas_src>

<mosaic_0001>
module attributes {stable_mosaic.version = 11 : i64} {
  func.func @_dsn_kernel(%arg0: i32, %arg1: memref<8x400xf32, #tpu.memory_space<vmem>>, %arg2: memref<400x400xbf16, #tpu.memory_space<vmem>>, %arg3: memref<400x128xbf16, #tpu.memory_space<vmem>>, %arg4: memref<400x400xbf16, #tpu.memory_space<vmem>>, %arg5: memref<128x400xbf16, #tpu.memory_space<vmem>>, %arg6: memref<128x200xbf16, #tpu.memory_space<vmem>>, %arg7: memref<400x800xbf16, #tpu.memory_space<vmem>>, %arg8: memref<1x2304xf32, #tpu.memory_space<vmem>>, %arg9: memref<8x400xf32, #tpu.memory_space<vmem>>, %arg10: memref<8x128xf32, #tpu.memory_space<vmem>>, %arg11: memref<8x400xf32, #tpu.memory_space<vmem>>, %arg12: memref<8x200xf32, #tpu.memory_space<vmem>>, %arg13: memref<8x800xf32, #tpu.memory_space<vmem>>) attributes {dimension_semantics = [#tpu.dimension_semantics<parallel>], iteration_bounds = array<i64: 1>, scalar_prefetch = 0 : i64, scratch_operands = 0 : i64, tpu.core_type = #tpu.core_type<tc>, window_params = [{transform_indices = @transform_0, window_bounds = array<i64: 8, 400>}, {pipeline_mode = #tpu.pipeline_mode<synchronous>, transform_indices = @transform_1, window_bounds = array<i64: 400, 400>}, {pipeline_mode = #tpu.pipeline_mode<synchronous>, transform_indices = @transform_2, window_bounds = array<i64: 400, 128>}, {pipeline_mode = #tpu.pipeline_mode<synchronous>, transform_indices = @transform_3, window_bounds = array<i64: 400, 400>}, {pipeline_mode = #tpu.pipeline_mode<synchronous>, transform_indices = @transform_4, window_bounds = array<i64: 128, 400>}, {pipeline_mode = #tpu.pipeline_mode<synchronous>, transform_indices = @transform_5, window_bounds = array<i64: 128, 200>}, {pipeline_mode = #tpu.pipeline_mode<synchronous>, transform_indices = @transform_6, window_bounds = array<i64: 400, 800>}, {pipeline_mode = #tpu.pipeline_mode<synchronous>, transform_indices = @transform_7, window_bounds = array<i64: 1, 2304>}, {transform_indices = @transform_8, window_bounds = array<i64: 8, 400>}, {transform_indices = @transform_9, window_bounds = array<i64: 8, 128>}, {transform_indices = @transform_10, window_bounds = array<i64: 8, 400>}, {transform_indices = @transform_11, window_bounds = array<i64: 8, 200>}, {transform_indices = @transform_12, window_bounds = array<i64: 8, 800>}]} {
    %c0 = arith.constant 0 : index
    %c0_0 = arith.constant 0 : index
    %0 = vector.load %arg1[%c0, %c0_0] : memref<8x400xf32, #tpu.memory_space<vmem>>, vector<8x400xf32>
    %1 = arith.truncf %0 : vector<8x400xf32> to vector<8x400xbf16>
    %c0_1 = arith.constant 0 : index
    %c0_2 = arith.constant 0 : index
    %2 = vector.load %arg2[%c0_1, %c0_2] : memref<400x400xbf16, #tpu.memory_space<vmem>>, vector<400x400xbf16>
    %cst = arith.constant dense<0.000000e+00> : vector<8x400xf32>
    %3 = tpu.matmul %1, %2, %cst {dimension_numbers = #tpu.dot_dimension_numbers<[1], [0], [0], [1], [0, 0, 1, 1], [], []>} : vector<8x400xbf16>, vector<400x400xbf16>, vector<8x400xf32> -> vector<8x400xf32>
    %c0_3 = arith.constant 0 : index
    %c0_4 = arith.constant 0 : index
    %4 = vector.load %arg8[%c0_3, %c0_4] : memref<1x2304xf32, #tpu.memory_space<vmem>>, vector<1x400xf32>
    %5 = vector.broadcast %4 : vector<1x400xf32> to vector<8x400xf32>
    %6 = arith.addf %3, %5 : vector<8x400xf32>
    %c0_5 = arith.constant 0 : index
    %c0_6 = arith.constant 0 : index
    %7 = vector.load %arg3[%c0_5, %c0_6] : memref<400x128xbf16, #tpu.memory_space<vmem>>, vector<400x128xbf16>
    %cst_7 = arith.constant dense<0.000000e+00> : vector<8x128xf32>
    %8 = tpu.matmul %1, %7, %cst_7 {dimension_numbers = #tpu.dot_dimension_numbers<[1], [0], [0], [1], [0, 0, 1, 1], [], []>} : vector<8x400xbf16>, vector<400x128xbf16>, vector<8x128xf32> -> vector<8x128xf32>
    %c0_8 = arith.constant 0 : index
    %c512 = arith.constant 512 : index
    %9 = vector.load %arg8[%c0_8, %c512] : memref<1x2304xf32, #tpu.memory_space<vmem>>, vector<1x128xf32>
    %10 = vector.broadcast %9 : vector<1x128xf32> to vector<8x128xf32>
    %11 = arith.addf %8, %10 : vector<8x128xf32>
    %12 = arith.truncf %6 : vector<8x400xf32> to vector<8x400xbf16>
    %13 = arith.truncf %11 : vector<8x128xf32> to vector<8x128xbf16>
    %c0_9 = arith.constant 0 : index
    %c0_10 = arith.constant 0 : index
    %14 = vector.load %arg4[%c0_9, %c0_10] : memref<400x400xbf16, #tpu.memory_space<vmem>>, vector<400x400xbf16>
    %cst_11 = arith.constant dense<0.000000e+00> : vector<8x400xf32>
    %15 = tpu.matmul %12, %14, %cst_11 {dimension_numbers = #tpu.dot_dimension_numbers<[1], [0], [0], [1], [0, 0, 1, 1], [], []>} : vector<8x400xbf16>, vector<400x400xbf16>, vector<8x400xf32> -> vector<8x400xf32>
    %c0_12 = arith.constant 0 : index
    %c0_13 = arith.constant 0 : index
    %16 = vector.load %arg5[%c0_12, %c0_13] : memref<128x400xbf16, #tpu.memory_space<vmem>>, vector<128x400xbf16>
    %cst_14 = arith.constant dense<0.000000e+00> : vector<8x400xf32>
    %17 = tpu.matmul %13, %16, %cst_14 {dimension_numbers = #tpu.dot_dimension_numbers<[1], [0], [0], [1], [0, 0, 1, 1], [], []>} : vector<8x128xbf16>, vector<128x400xbf16>, vector<8x400xf32> -> vector<8x400xf32>
    %18 = arith.addf %15, %17 : vector<8x400xf32>
    %c0_15 = arith.constant 0 : index
    %c640 = arith.constant 640 : index
    %19 = vector.load %arg8[%c0_15, %c640] : memref<1x2304xf32, #tpu.memory_space<vmem>>, vector<1x400xf32>
    %20 = vector.broadcast %19 : vector<1x400xf32> to vector<8x400xf32>
    %21 = arith.addf %18, %20 : vector<8x400xf32>
    %c0_16 = arith.constant 0 : index
    %c0_17 = arith.constant 0 : index
    %22 = vector.load %arg6[%c0_16, %c0_17] : memref<128x200xbf16, #tpu.memory_space<vmem>>, vector<128x200xbf16>
    %cst_18 = arith.constant dense<0.000000e+00> : vector<8x200xf32>
    %23 = tpu.matmul %13, %22, %cst_18 {dimension_numbers = #tpu.dot_dimension_numbers<[1], [0], [0], [1], [0, 0, 1, 1], [], []>} : vector<8x128xbf16>, vector<128x200xbf16>, vector<8x200xf32> -> vector<8x200xf32>
    %c0_19 = arith.constant 0 : index
    %c1152 = arith.constant 1152 : index
    %24 = vector.load %arg8[%c0_19, %c1152] : memref<1x2304xf32, #tpu.memory_space<vmem>>, vector<1x200xf32>
    %25 = vector.broadcast %24 : vector<1x200xf32> to vector<8x200xf32>
    %26 = arith.addf %23, %25 : vector<8x200xf32>
    %c0_20 = arith.constant 0 : index
    %c0_21 = arith.constant 0 : index
    %27 = vector.load %arg7[%c0_20, %c0_21] : memref<400x800xbf16, #tpu.memory_space<vmem>>, vector<400x800xbf16>
    %cst_22 = arith.constant dense<0.000000e+00> : vector<8x800xf32>
    %28 = tpu.matmul %12, %27, %cst_22 {dimension_numbers = #tpu.dot_dimension_numbers<[1], [0], [0], [1], [0, 0, 1, 1], [], []>} : vector<8x400xbf16>, vector<400x800xbf16>, vector<8x800xf32> -> vector<8x800xf32>
    %c0_23 = arith.constant 0 : index
    %c1408 = arith.constant 1408 : index
    %29 = vector.load %arg8[%c0_23, %c1408] : memref<1x2304xf32, #tpu.memory_space<vmem>>, vector<1x800xf32>
    %30 = vector.broadcast %29 : vector<1x800xf32> to vector<8x800xf32>
    %31 = arith.addf %28, %30 : vector<8x800xf32>
    %c0_24 = arith.constant 0 : index
    %c0_25 = arith.constant 0 : index
    %32 = vector.load %arg9[%c0_24, %c0_25] : memref<8x400xf32, #tpu.memory_space<vmem>>, vector<8x400xf32>
    tpu.vector_store %arg9[%c0_24, %c0_25], %6 {strides = array<i32>} : memref<8x400xf32, #tpu.memory_space<vmem>>, vector<8x400xf32>,
    %c0_26 = arith.constant 0 : index
    %c0_27 = arith.constant 0 : index
    %33 = vector.load %arg10[%c0_26, %c0_27] : memref<8x128xf32, #tpu.memory_space<vmem>>, vector<8x128xf32>
    tpu.vector_store %arg10[%c0_26, %c0_27], %11 {strides = array<i32>} : memref<8x128xf32, #tpu.memory_space<vmem>>, vector<8x128xf32>,
    %c0_28 = arith.constant 0 : index
    %c0_29 = arith.constant 0 : index
    %34 = vector.load %arg11[%c0_28, %c0_29] : memref<8x400xf32, #tpu.memory_space<vmem>>, vector<8x400xf32>
    tpu.vector_store %arg11[%c0_28, %c0_29], %21 {strides = array<i32>} : memref<8x400xf32, #tpu.memory_space<vmem>>, vector<8x400xf32>,
    %c0_30 = arith.constant 0 : index
    %c0_31 = arith.constant 0 : index
    %35 = vector.load %arg12[%c0_30, %c0_31] : memref<8x200xf32, #tpu.memory_space<vmem>>, vector<8x200xf32>
    tpu.vector_store %arg12[%c0_30, %c0_31], %26 {strides = array<i32>} : memref<8x200xf32, #tpu.memory_space<vmem>>, vector<8x200xf32>,
    %c0_32 = arith.constant 0 : index
    %c0_33 = arith.constant 0 : index
    %36 = vector.load %arg13[%c0_32, %c0_33] : memref<8x800xf32, #tpu.memory_space<vmem>>, vector<8x800xf32>
    tpu.vector_store %arg13[%c0_32, %c0_33], %31 {strides = array<i32>} : memref<8x800xf32, #tpu.memory_space<vmem>>, vector<8x800xf32>,
    return
  }
  func.func @transform_0(%arg0: i32) -> (i32, i32) {
    %c0_i32 = arith.constant 0 : i32
    %c0_i32_0 = arith.constant 0 : i32
    return %arg0, %c0_i32 : i32, i32
  }
  func.func @transform_1(%arg0: i32) -> (i32, i32) {
    %c0_i32 = arith.constant 0 : i32
    %c0_i32_0 = arith.constant 0 : i32
    %c0_i32_1 = arith.constant 0 : i32
    return %c0_i32, %c0_i32_0 : i32, i32
  }
  func.func @transform_2(%arg0: i32) -> (i32, i32) {
    %c0_i32 = arith.constant 0 : i32
    %c0_i32_0 = arith.constant 0 : i32
    %c0_i32_1 = arith.constant 0 : i32
    return %c0_i32, %c0_i32_0 : i32, i32
  }
  func.func @transform_3(%arg0: i32) -> (i32, i32) {
    %c0_i32 = arith.constant 0 : i32
    %c0_i32_0 = arith.constant 0 : i32
    %c0_i32_1 = arith.constant 0 : i32
    return %c0_i32, %c0_i32_0 : i32, i32
  }
  func.func @transform_4(%arg0: i32) -> (i32, i32) {
    %c0_i32 = arith.constant 0 : i32
    %c0_i32_0 = arith.constant 0 : i32
    %c0_i32_1 = arith.constant 0 : i32
    return %c0_i32, %c0_i32_0 : i32, i32
  }
  func.func @transform_5(%arg0: i32) -> (i32, i32) {
    %c0_i32 = arith.constant 0 : i32
    %c0_i32_0 = arith.constant 0 : i32
    %c0_i32_1 = arith.constant 0 : i32
    return %c0_i32, %c0_i32_0 : i32, i32
  }
  func.func @transform_6(%arg0: i32) -> (i32, i32) {
    %c0_i32 = arith.constant 0 : i32
    %c0_i32_0 = arith.constant 0 : i32
    %c0_i32_1 = arith.constant 0 : i32
    return %c0_i32, %c0_i32_0 : i32, i32
  }
  func.func @transform_7(%arg0: i32) -> (i32, i32) {
    %c0_i32 = arith.constant 0 : i32
    %c0_i32_0 = arith.constant 0 : i32
    %c0_i32_1 = arith.constant 0 : i32
    return %c0_i32, %c0_i32_0 : i32, i32
  }
  func.func @transform_8(%arg0: i32) -> (i32, i32) {
    %c0_i32 = arith.constant 0 : i32
    %c0_i32_0 = arith.constant 0 : i32
    return %arg0, %c0_i32 : i32, i32
  }
  func.func @transform_9(%arg0: i32) -> (i32, i32) {
    %c0_i32 = arith.constant 0 : i32
    %c0_i32_0 = arith.constant 0 : i32
    return %arg0, %c0_i32 : i32, i32
  }
  func.func @transform_10(%arg0: i32) -> (i32, i32) {
    %c0_i32 = arith.constant 0 : i32
    %c0_i32_0 = arith.constant 0 : i32
    return %arg0, %c0_i32 : i32, i32
  }
  func.func @transform_11(%arg0: i32) -> (i32, i32) {
    %c0_i32 = arith.constant 0 : i32
    %c0_i32_0 = arith.constant 0 : i32
    return %arg0, %c0_i32 : i32, i32
  }
  func.func @transform_12(%arg0: i32) -> (i32, i32) {
    %c0_i32 = arith.constant 0 : i32
    %c0_i32_0 = arith.constant 0 : i32
    return %arg0, %c0_i32 : i32, i32
  }
}

</mosaic_0001>

<llo_original>
// kernel: fwd.1
$region0: #{fwd.1}
  #allocation0 [shape = 'u32[]', space=smem, size = 0x4, offset = 0x4, fixed_abs, tag = 'smem constant byte address 0x4 - core index']
  #allocation1 [shape = 'u32[144,128]{1,0:T(1,128)}', space=vmem, size = 0x12000, scoped, tag = 'internal scratch']
  %s0 = inlined_call_operand.vmem [shape: f32[8,400], index: 0, kind: input, shape index: {}]
  %s1 = inlined_call_operand.hbm [shape: bf16[400,400], index: 1, kind: input, shape index: {}]
  %s2 = inlined_call_operand.vmem [shape: bf16[400,128], index: 2, kind: input, shape index: {}]
  %s3 = inlined_call_operand.hbm [shape: bf16[400,400], index: 3, kind: input, shape index: {}]
  %s4 = inlined_call_operand.vmem [shape: bf16[128,400], index: 4, kind: input, shape index: {}]
  %s5 = inlined_call_operand.vmem [shape: bf16[128,200], index: 5, kind: input, shape index: {}]
  %s6 = inlined_call_operand.hbm [shape: bf16[400,800], index: 6, kind: input, shape index: {}]
  %s7 = inlined_call_operand.vmem [shape: f32[1,2304], index: 7, kind: input, shape index: {}]
  %s8 = inlined_call_operand.hbm [shape: f32[8,400], index: 8, kind: output, shape index: {0}]
  %s9 = inlined_call_operand.hbm [shape: f32[8,128], index: 9, kind: output, shape index: {1}]
  %s10 = inlined_call_operand.hbm [shape: f32[8,400], index: 10, kind: output, shape index: {2}]
  %s11 = inlined_call_operand.hbm [shape: f32[8,200], index: 11, kind: output, shape index: {3}]
  %s12 = inlined_call_operand.hbm [shape: f32[8,800], index: 12, kind: output, shape index: {4}]
  %13 = xla_tuple %s8, %s9, %s10, %s11, %s12
  %s14 = sld [smem:[#allocation0]]
  $region86: #{fwd.1} parent=0
    _
  %s16 = ssub.s32 1, %s14
  %s17 = scalar_select 0, %s16, %s14
  $region1: #{fwd.1} parent=0
    #allocation2 [shape = 'u8[409600]{0}', space=vmem, size = 0x64000, scoped, tag = 'input window, operand 1, single buffered']
    #allocation3 [shape = 's32[1]{0}', space=sflag, size = 0x4, scoped, tag = 'scoped memory for fwd.1']
    #allocation4 [shape = 's32[1]{0}', space=sflag, size = 0x4, scoped, tag = 'scoped memory for fwd.1']
    #allocation5 [shape = 'u8[409600]{0}', space=vmem, size = 0x64000, scoped, tag = 'input window, operand 3, single buffered']
    #allocation6 [shape = 's32[1]{0}', space=sflag, size = 0x4, scoped, tag = 'scoped memory for fwd.1']
    #allocation7 [shape = 'u8[716800]{0}', space=vmem, size = 0xaf000, scoped, tag = 'input window, operand 6, single buffered']
    #allocation8 [shape = 'u8[16384]{0}', space=vmem, size = 0x4000, scoped, tag = 'output window, operand 0, single buffered']
    #allocation9 [shape = 'u8[4096]{0}', space=vmem, size = 0x1000, scoped, tag = 'output window, operand 1, single buffered']
    #allocation10 [shape = 's32[1]{0}', space=sflag, size = 0x4, scoped, tag = 'scoped memory for fwd.1']
    #allocation11 [shape = 'u8[16384]{0}', space=vmem, size = 0x4000, scoped, tag = 'output window, operand 2, single buffered']
    #allocation12 [shape = 'u8[8192]{0}', space=vmem, size = 0x2000, scoped, tag = 'output window, operand 3, single buffered']
    #allocation13 [shape = 's32[1]{0}', space=sflag, size = 0x4, scoped, tag = 'scoped memory for fwd.1']
    #allocation14 [shape = 'u8[28672]{0}', space=vmem, size = 0x7000, scoped, tag = 'output window, operand 4, single buffered']
    %18 = vsyncpa [#allocation3], 0
    %19 = vsyncpa [#allocation6], 0
    %20 = vsyncpa [#allocation4], 0
    %21 = vsyncpa [#allocation10], 0
    %22 = vsyncpa [#allocation13], 0
    // Predicated region
    $region2: #{fwd.1} parent=1 // pred_check
      _
    $region3: #{fwd.1} parent=1 // pred_check_branch
      %24 = sbr.rel (0) target = $region5
    $region4: #{fwd.1} parent=1 // pred_region
      _
    $region5: #{fwd.1} parent=1 // pred_fallthru
      _
    // Predicated region
    $region6: #{fwd.1} parent=1 // pred_check
      _
    $region7: #{fwd.1} parent=1 // pred_check_branch
      %26 = sbr.rel (0) target = $region9
    $region8: #{fwd.1} parent=1 // pred_region
      %s28 = ssub.s32 12800, 12800
      %29 = vsyncadd [#allocation3], %s28
      %s30 = sshll.u32 [#allocation2], 4
      %s31 = int_to_ptr.vmem [resolvable:$true] %s30
      %36 = dma.hbm_to_vmem [thread:$0]  %s1, 12800, %s31, [#allocation3], 256, 256, 16
    $region9: #{fwd.1} parent=1 // pred_fallthru
      _
    // Predicated region
    $region10: #{fwd.1} parent=1 // pred_check
      _
    $region11: #{fwd.1} parent=1 // pred_check_branch
      %38 = sbr.rel (0) target = $region13
    $region12: #{fwd.1} parent=1 // pred_region
      _
    $region13: #{fwd.1} parent=1 // pred_fallthru
      _
    // Predicated region
    $region14: #{fwd.1} parent=1 // pred_check
      _
    $region15: #{fwd.1} parent=1 // pred_check_branch
      %40 = sbr.rel (0) target = $region17
    $region16: #{fwd.1} parent=1 // pred_region
      %s42 = ssub.s32 12800, 12800
      %43 = vsyncadd [#allocation6], %s42
      %s44 = sshll.u32 [#allocation5], 4
      %s45 = int_to_ptr.vmem [resolvable:$true] %s44
      %50 = dma.hbm_to_vmem [thread:$0]  %s3, 12800, %s45, [#allocation6], 256, 256, 16
    $region17: #{fwd.1} parent=1 // pred_fallthru
      _
    // Predicated region
    $region18: #{fwd.1} parent=1 // pred_check
      _
    $region19: #{fwd.1} parent=1 // pred_check_branch
      %52 = sbr.rel (0) target = $region21
    $region20: #{fwd.1} parent=1 // pred_region
      _
    $region21: #{fwd.1} parent=1 // pred_fallthru
      _
    // Predicated region
    $region22: #{fwd.1} parent=1 // pred_check
      _
    $region23: #{fwd.1} parent=1 // pred_check_branch
      %54 = sbr.rel (0) target = $region25
    $region24: #{fwd.1} parent=1 // pred_region
      _
    $region25: #{fwd.1} parent=1 // pred_fallthru
      _
    // Predicated region
    $region26: #{fwd.1} parent=1 // pred_check
      _
    $region27: #{fwd.1} parent=1 // pred_check_branch
      %56 = sbr.rel (0) target = $region29
    $region28: #{fwd.1} parent=1 // pred_region
      %s58 = ssub.s32 22400, 22400
      %59 = vsyncadd [#allocation6], %s58
      %s60 = sshll.u32 [#allocation7], 4
      %s61 = int_to_ptr.vmem [resolvable:$true] %s60
      %66 = dma.hbm_to_vmem [thread:$0]  %s6, 22400, %s61, [#allocation6], 448, 448, 28
    $region29: #{fwd.1} parent=1 // pred_fallthru
      _
    // Predicated region
    $region30: #{fwd.1} parent=1 // pred_check
      _
    $region31: #{fwd.1} parent=1 // pred_check_branch
      %68 = sbr.rel (0) target = $region33
    $region32: #{fwd.1} parent=1 // pred_region
      _
    $region33: #{fwd.1} parent=1 // pred_fallthru
      _
    // Predicated region
    $region34: #{fwd.1} parent=1 // pred_check
      _
    $region35: #{fwd.1} parent=1 // pred_check_branch
      %70 = sbr.rel (0) target = $region37
    $region36: #{fwd.1} parent=1 // pred_region
      %71 = dma.done [#allocation3], 12800
    $region37: #{fwd.1} parent=1 // pred_fallthru
      _
    // Predicated region
    $region38: #{fwd.1} parent=1 // pred_check
      _
    $region39: #{fwd.1} parent=1 // pred_check_branch
      %73 = sbr.rel (0) target = $region41
    $region40: #{fwd.1} parent=1 // pred_region
      %74 = dma.done [#allocation6], 12800
    $region41: #{fwd.1} parent=1 // pred_fallthru
      _
    // Predicated region
    $region42: #{fwd.1} parent=1 // pred_check
      _
    $region43: #{fwd.1} parent=1 // pred_check_branch
      %76 = sbr.rel (0) target = $region45
    $region44: #{fwd.1} parent=1 // pred_region
      %77 = dma.done [#allocation6], 22400
    $region45: #{fwd.1} parent=1 // pred_fallthru
      _
    %v79 = vld [vmem:[%s0] sm:$0xff]
    %v80 = vld [vmem:[%s0 + $0x8] sm:$0xff]
    %v81 = vld [vmem:[%s0 + $0x10] sm:$0xff]
    %v82 = vld [vmem:[%s0 + $0x18] sm:$0xff]
    %v83 = vpack.c.bf16 %v79, %v79
    %v84 = vpack.c.bf16 %v80, %v80
    %v85 = vpack.c.bf16 %v81, %v81
    %v86 = vpack.c.bf16 %v82, %v82
    %v87 = vld [vmem:[#allocation2] sm:$0xff]
    %v88 = vld [vmem:[#allocation2 + $0x8] sm:$0xff]
    %v89 = vld [vmem:[#allocation2 + $0x10] sm:$0xff]
    %v90 = vld [vmem:[#allocation2 + $0x18] sm:$0xff]
    %v91 = vld [vmem:[#allocation2 + $0x20] sm:$0xff]
    %v92 = vld [vmem:[#allocation2 + $0x28] sm:$0xff]
    %v93 = vld [vmem:[#allocation2 + $0x30] sm:$0xff]
    %v94 = vld [vmem:[#allocation2 + $0x38] sm:$0xff]
    %v95 = vld [vmem:[#allocation2 + $0x40] sm:$0xff]
    %v96 = vld [vmem:[#allocation2 + $0x48] sm:$0xff]
    %v97 = vld [vmem:[#allocation2 + $0x50] sm:$0xff]
    %v98 = vld [vmem:[#allocation2 + $0x58] sm:$0xff]
    %v99 = vld [vmem:[#allocation2 + $0x60] sm:$0xff]
    %v100 = vld [vmem:[#allocation2 + $0x68] sm:$0xff]
    %v101 = vld [vmem:[#allocation2 + $0x70] sm:$0xff]
    %v102 = vld [vmem:[#allocation2 + $0x78] sm:$0xff]
    %v103 = vld [vmem:[#allocation2 + $0x80] sm:$0xff]
    %v104 = vld [vmem:[#allocation2 + $0x88] sm:$0xff]
    %v105 = vld [vmem:[#allocation2 + $0x90] sm:$0xff]
    %v106 = vld [vmem:[#allocation2 + $0x98] sm:$0xff]
    %v107 = vld [vmem:[#allocation2 + $0xa0] sm:$0xff]
    %v108 = vld [vmem:[#allocation2 + $0xa8] sm:$0xff]
    %v109 = vld [vmem:[#allocation2 + $0xb0] sm:$0xff]
    %v110 = vld [vmem:[#allocation2 + $0xb8] sm:$0xff]
    %v111 = vld [vmem:[#allocation2 + $0xc0] sm:$0xff]
    %v112 = vld [vmem:[#allocation2 + $0xc8] sm:$0xff]
    %v113 = vld [vmem:[#allocation2 + $0xd0] sm:$0xff]
    %v114 = vld [vmem:[#allocation2 + $0xd8] sm:$0xff]
    %v115 = vld [vmem:[#allocation2 + $0xe0] sm:$0xff]
    %v116 = vld [vmem:[#allocation2 + $0xe8] sm:$0xff]
    %v117 = vld [vmem:[#allocation2 + $0xf0] sm:$0xff]
    %v118 = vld [vmem:[#allocation2 + $0xf8] sm:$0xff]
    %v119 = vld [vmem:[#allocation2 + $0x100] sm:$0xff]
    %v120 = vld [vmem:[#allocation2 + $0x108] sm:$0xff]
    %v121 = vld [vmem:[#allocation2 + $0x110] sm:$0xff]
    %v122 = vld [vmem:[#allocation2 + $0x118] sm:$0xff]
    %v123 = vld [vmem:[#allocation2 + $0x120] sm:$0xff]
    %v124 = vld [vmem:[#allocation2 + $0x128] sm:$0xff]
    %v125 = vld [vmem:[#allocation2 + $0x130] sm:$0xff]
    %v126 = vld [vmem:[#allocation2 + $0x138] sm:$0xff]
    %v127 = vld [vmem:[#allocation2 + $0x140] sm:$0xff]
    %v128 = vld [vmem:[#allocation2 + $0x148] sm:$0xff]
    %v129 = vld [vmem:[#allocation2 + $0x150] sm:$0xff]
    %v130 = vld [vmem:[#allocation2 + $0x158] sm:$0xff]
    %v131 = vld [vmem:[#allocation2 + $0x160] sm:$0xff]
    %v132 = vld [vmem:[#allocation2 + $0x168] sm:$0xff]
    %v133 = vld [vmem:[#allocation2 + $0x170] sm:$0xff]
    %v134 = vld [vmem:[#allocation2 + $0x178] sm:$0xff]
    %v135 = vld [vmem:[#allocation2 + $0x180] sm:$0xff]
    %v136 = vld [vmem:[#allocation2 + $0x188] sm:$0xff]
    %v137 = vld [vmem:[#allocation2 + $0x190] sm:$0xff]
    %v138 = vld [vmem:[#allocation2 + $0x198] sm:$0xff]
    %v139 = vld [vmem:[#allocation2 + $0x1a0] sm:$0xff]
    %v140 = vld [vmem:[#allocation2 + $0x1a8] sm:$0xff]
    %v141 = vld [vmem:[#allocation2 + $0x1b0] sm:$0xff]
    %v142 = vld [vmem:[#allocation2 + $0x1b8] sm:$0xff]
    %v143 = vld [vmem:[#allocation2 + $0x1c0] sm:$0xff]
    %v144 = vld [vmem:[#allocation2 + $0x1c8] sm:$0xff]
    %v145 = vld [vmem:[#allocation2 + $0x1d0] sm:$0xff]
    %v146 = vld [vmem:[#allocation2 + $0x1d8] sm:$0xff]
    %v147 = vld [vmem:[#allocation2 + $0x1e0] sm:$0xff]
    %v148 = vld [vmem:[#allocation2 + $0x1e8] sm:$0xff]
    %v149 = vld [vmem:[#allocation2 + $0x1f0] sm:$0xff]
    %v150 = vld [vmem:[#allocation2 + $0x1f8] sm:$0xff]
    %v151 = vld [vmem:[#allocation2 + $0x200] sm:$0xff]
    %v152 = vld [vmem:[#allocation2 + $0x208] sm:$0xff]
    %v153 = vld [vmem:[#allocation2 + $0x210] sm:$0xff]
    %v154 = vld [vmem:[#allocation2 + $0x218] sm:$0xff]
    %v155 = vld [vmem:[#allocation2 + $0x220] sm:$0xff]
    %v156 = vld [vmem:[#allocation2 + $0x228] sm:$0xff]
    %v157 = vld [vmem:[#allocation2 + $0x230] sm:$0xff]
    %v158 = vld [vmem:[#allocation2 + $0x238] sm:$0xff]
    %v159 = vld [vmem:[#allocation2 + $0x240] sm:$0xff]
    %v160 = vld [vmem:[#allocation2 + $0x248] sm:$0xff]
    %v161 = vld [vmem:[#allocation2 + $0x250] sm:$0xff]
    %v162 = vld [vmem:[#allocation2 + $0x258] sm:$0xff]
    %v163 = vld [vmem:[#allocation2 + $0x260] sm:$0xff]
    %v164 = vld [vmem:[#allocation2 + $0x268] sm:$0xff]
    %v165 = vld [vmem:[#allocation2 + $0x270] sm:$0xff]
    %v166 = vld [vmem:[#allocation2 + $0x278] sm:$0xff]
    %v167 = vld [vmem:[#allocation2 + $0x280] sm:$0xff]
    %v168 = vld [vmem:[#allocation2 + $0x288] sm:$0xff]
    %v169 = vld [vmem:[#allocation2 + $0x290] sm:$0xff]
    %v170 = vld [vmem:[#allocation2 + $0x298] sm:$0xff]
    %v171 = vld [vmem:[#allocation2 + $0x2a0] sm:$0xff]
    %v172 = vld [vmem:[#allocation2 + $0x2a8] sm:$0xff]
    %v173 = vld [vmem:[#allocation2 + $0x2b0] sm:$0xff]
    %v174 = vld [vmem:[#allocation2 + $0x2b8] sm:$0xff]
    %v175 = vld [vmem:[#allocation2 + $0x2c0] sm:$0xff]
    %v176 = vld [vmem:[#allocation2 + $0x2c8] sm:$0xff]
    %v177 = vld [vmem:[#allocation2 + $0x2d0] sm:$0xff]
    %v178 = vld [vmem:[#allocation2 + $0x2d8] sm:$0xff]
    %v179 = vld [vmem:[#allocation2 + $0x2e0] sm:$0xff]
    %v180 = vld [vmem:[#allocation2 + $0x2e8] sm:$0xff]
    %v181 = vld [vmem:[#allocation2 + $0x2f0] sm:$0xff]
    %v182 = vld [vmem:[#allocation2 + $0x2f8] sm:$0xff]
    %v183 = vld [vmem:[#allocation2 + $0x300] sm:$0xff]
    %v184 = vld [vmem:[#allocation2 + $0x308] sm:$0xff]
    %v185 = vld [vmem:[#allocation2 + $0x310] sm:$0xff]
    %v186 = vld [vmem:[#allocation2 + $0x318] sm:$0xff]
    %v187 = vld [vmem:[%s7] sm:$0xf]
    %v189 = vlaneseq
    %v190 = vshrl.u32 %v189, 7
    %v191 = vsub.s32 0, %v190
    %v192 = vrot.slane %v187, %v191
    %v193 = vlaneseq
    %v194 = vshrl.u32 %v193, 7
    %v195 = vsub.s32 1, %v194
    %v196 = vrot.slane %v187, %v195
    %v197 = vlaneseq
    %v198 = vshrl.u32 %v197, 7
    %v199 = vsub.s32 2, %v198
    %v200 = vrot.slane %v187, %v199
    %v201 = vlaneseq
    %v202 = vshrl.u32 %v201, 7
    %v203 = vsub.s32 3, %v202
    %v204 = vrot.slane %v187, %v203
    %v309 = vunpack.c.l.b16 %v87
    %v310 = vunpack.c.h.b16 %v87
    %v311 = vunpack.c.l.b16 %v88
    %v312 = vunpack.c.h.b16 %v88
    %v313 = vunpack.c.l.b16 %v89
    %v314 = vunpack.c.h.b16 %v89
    %v315 = vunpack.c.l.b16 %v90
    %v316 = vunpack.c.h.b16 %v90
    %v317 = vunpack.c.l.b16 %v91
    %v318 = vunpack.c.h.b16 %v91
    %v319 = vunpack.c.l.b16 %v92
    %v320 = vunpack.c.h.b16 %v92
    %v321 = vunpack.c.l.b16 %v93
    %v322 = vunpack.c.h.b16 %v93
    %v323 = vunpack.c.l.b16 %v94
    %v324 = vunpack.c.h.b16 %v94
    %v325 = vunpack.c.l.b16 %v95
    %v326 = vunpack.c.h.b16 %v95
    %v327 = vunpack.c.l.b16 %v96
    %v328 = vunpack.c.h.b16 %v96
    %v329 = vunpack.c.l.b16 %v97
    %v330 = vunpack.c.h.b16 %v97
    %v331 = vunpack.c.l.b16 %v98
    %v332 = vunpack.c.h.b16 %v98
    %v333 = vunpack.c.l.b16 %v99
    %v334 = vunpack.c.h.b16 %v99
    %v335 = vunpack.c.l.b16 %v100
    %v336 = vunpack.c.h.b16 %v100
    %v337 = vunpack.c.l.b16 %v101
    %v338 = vunpack.c.h.b16 %v101
    %v339 = vunpack.c.l.b16 %v102
    %v340 = vunpack.c.h.b16 %v102
    %v341 = vunpack.c.l.b16 %v103
    %v342 = vunpack.c.h.b16 %v103
    %v343 = vunpack.c.l.b16 %v104
    %v344 = vunpack.c.h.b16 %v104
    %v345 = vunpack.c.l.b16 %v105
    %v346 = vunpack.c.h.b16 %v105
    %v347 = vunpack.c.l.b16 %v106
    %v348 = vunpack.c.h.b16 %v106
    %v349 = vunpack.c.l.b16 %v107
    %v350 = vunpack.c.h.b16 %v107
    %v351 = vunpack.c.l.b16 %v108
    %v352 = vunpack.c.h.b16 %v108
    %v353 = vunpack.c.l.b16 %v109
    %v354 = vunpack.c.h.b16 %v109
    %v355 = vunpack.c.l.b16 %v110
    %v356 = vunpack.c.h.b16 %v110
    %v357 = vunpack.c.l.b16 %v111
    %v358 = vunpack.c.h.b16 %v111
    %v359 = vunpack.c.l.b16 %v112
    %v360 = vunpack.c.h.b16 %v112
    %v361 = vunpack.c.l.b16 %v113
    %v362 = vunpack.c.h.b16 %v113
    %v363 = vunpack.c.l.b16 %v114
    %v364 = vunpack.c.h.b16 %v114
    %v365 = vunpack.c.l.b16 %v115
    %v366 = vunpack.c.h.b16 %v115
    %v367 = vunpack.c.l.b16 %v116
    %v368 = vunpack.c.h.b16 %v116
    %v369 = vunpack.c.l.b16 %v117
    %v370 = vunpack.c.h.b16 %v117
    %v371 = vunpack.c.l.b16 %v118
    %v372 = vunpack.c.h.b16 %v118
    %v373 = vunpack.c.l.b16 %v119
    %v374 = vunpack.c.h.b16 %v119
    %v375 = vunpack.c.l.b16 %v120
    %v376 = vunpack.c.h.b16 %v120
    %v377 = vunpack.c.l.b16 %v121
    %v378 = vunpack.c.h.b16 %v121
    %v379 = vunpack.c.l.b16 %v122
    %v380 = vunpack.c.h.b16 %v122
    %v381 = vunpack.c.l.b16 %v123
    %v382 = vunpack.c.h.b16 %v123
    %v383 = vunpack.c.l.b16 %v124
    %v384 = vunpack.c.h.b16 %v124
    %v385 = vunpack.c.l.b16 %v125
    %v386 = vunpack.c.h.b16 %v125
    %v387 = vunpack.c.l.b16 %v126
    %v388 = vunpack.c.h.b16 %v126
    %v389 = vunpack.c.l.b16 %v127
    %v390 = vunpack.c.h.b16 %v127
    %v391 = vunpack.c.l.b16 %v128
    %v392 = vunpack.c.h.b16 %v128
    %v393 = vunpack.c.l.b16 %v129
    %v394 = vunpack.c.h.b16 %v129
    %v395 = vunpack.c.l.b16 %v130
    %v396 = vunpack.c.h.b16 %v130
    %v397 = vunpack.c.l.b16 %v131
    %v398 = vunpack.c.h.b16 %v131
    %v399 = vunpack.c.l.b16 %v132
    %v400 = vunpack.c.h.b16 %v132
    %v401 = vunpack.c.l.b16 %v133
    %v402 = vunpack.c.h.b16 %v133
    %v403 = vunpack.c.l.b16 %v134
    %v404 = vunpack.c.h.b16 %v134
    %v405 = vunpack.c.l.b16 %v135
    %v406 = vunpack.c.h.b16 %v135
    %v407 = vunpack.c.l.b16 %v136
    %v408 = vunpack.c.h.b16 %v136
    %v409 = vunpack.c.l.b16 %v137
    %v410 = vunpack.c.h.b16 %v137
    %v411 = vunpack.c.l.b16 %v138
    %v412 = vunpack.c.h.b16 %v138
    %v413 = vunpack.c.l.b16 %v139
    %v414 = vunpack.c.h.b16 %v139
    %v415 = vunpack.c.l.b16 %v140
    %v416 = vunpack.c.h.b16 %v140
    %v417 = vunpack.c.l.b16 %v141
    %v418 = vunpack.c.h.b16 %v141
    %v419 = vunpack.c.l.b16 %v142
    %v420 = vunpack.c.h.b16 %v142
    %v421 = vunpack.c.l.b16 %v143
    %v422 = vunpack.c.h.b16 %v143
    %v423 = vunpack.c.l.b16 %v144
    %v424 = vunpack.c.h.b16 %v144
    %v425 = vunpack.c.l.b16 %v145
    %v426 = vunpack.c.h.b16 %v145
    %v427 = vunpack.c.l.b16 %v146
    %v428 = vunpack.c.h.b16 %v146
    %v429 = vunpack.c.l.b16 %v147
    %v430 = vunpack.c.h.b16 %v147
    %v431 = vunpack.c.l.b16 %v148
    %v432 = vunpack.c.h.b16 %v148
    %v433 = vunpack.c.l.b16 %v149
    %v434 = vunpack.c.h.b16 %v149
    %v435 = vunpack.c.l.b16 %v150
    %v436 = vunpack.c.h.b16 %v150
    %v437 = vunpack.c.l.b16 %v151
    %v438 = vunpack.c.h.b16 %v151
    %v439 = vunpack.c.l.b16 %v152
    %v440 = vunpack.c.h.b16 %v152
    %v441 = vunpack.c.l.b16 %v153
    %v442 = vunpack.c.h.b16 %v153
    %v443 = vunpack.c.l.b16 %v154
    %v444 = vunpack.c.h.b16 %v154
    %v445 = vunpack.c.l.b16 %v155
    %v446 = vunpack.c.h.b16 %v155
    %v447 = vunpack.c.l.b16 %v156
    %v448 = vunpack.c.h.b16 %v156
    %v449 = vunpack.c.l.b16 %v157
    %v450 = vunpack.c.h.b16 %v157
    %v451 = vunpack.c.l.b16 %v158
    %v452 = vunpack.c.h.b16 %v158
    %v453 = vunpack.c.l.b16 %v159
    %v454 = vunpack.c.h.b16 %v159
    %v455 = vunpack.c.l.b16 %v160
    %v456 = vunpack.c.h.b16 %v160
    %v457 = vunpack.c.l.b16 %v161
    %v458 = vunpack.c.h.b16 %v161
    %v459 = vunpack.c.l.b16 %v162
    %v460 = vunpack.c.h.b16 %v162
    %v461 = vunpack.c.l.b16 %v163
    %v462 = vunpack.c.h.b16 %v163
    %v463 = vunpack.c.l.b16 %v164
    %v464 = vunpack.c.h.b16 %v164
    %v465 = vunpack.c.l.b16 %v165
    %v466 = vunpack.c.h.b16 %v165
    %v467 = vunpack.c.l.b16 %v166
    %v468 = vunpack.c.h.b16 %v166
    %v469 = vunpack.c.l.b16 %v167
    %v470 = vunpack.c.h.b16 %v167
    %v471 = vunpack.c.l.b16 %v168
    %v472 = vunpack.c.h.b16 %v168
    %v473 = vunpack.c.l.b16 %v169
    %v474 = vunpack.c.h.b16 %v169
    %v475 = vunpack.c.l.b16 %v170
    %v476 = vunpack.c.h.b16 %v170
    %v477 = vunpack.c.l.b16 %v171
    %v478 = vunpack.c.h.b16 %v171
    %v479 = vunpack.c.l.b16 %v172
    %v480 = vunpack.c.h.b16 %v172
    %v481 = vunpack.c.l.b16 %v173
    %v482 = vunpack.c.h.b16 %v173
    %v483 = vunpack.c.l.b16 %v174
    %v484 = vunpack.c.h.b16 %v174
    %v485 = vunpack.c.l.b16 %v175
    %v486 = vunpack.c.h.b16 %v175
    %v487 = vunpack.c.l.b16 %v176
    %v488 = vunpack.c.h.b16 %v176
    %v489 = vunpack.c.l.b16 %v177
    %v490 = vunpack.c.h.b16 %v177
    %v491 = vunpack.c.l.b16 %v178
    %v492 = vunpack.c.h.b16 %v178
    %v493 = vunpack.c.l.b16 %v179
    %v494 = vunpack.c.h.b16 %v179
    %v495 = vunpack.c.l.b16 %v180
    %v496 = vunpack.c.h.b16 %v180
    %v497 = vunpack.c.l.b16 %v181
    %v498 = vunpack.c.h.b16 %v181
    %v499 = vunpack.c.l.b16 %v182
    %v500 = vunpack.c.h.b16 %v182
    %v501 = vunpack.c.l.b16 %v183
    %v502 = vunpack.c.h.b16 %v183
    %v503 = vunpack.c.l.b16 %v184
    %v504 = vunpack.c.h.b16 %v184
    %v505 = vunpack.c.l.b16 %v185
    %v506 = vunpack.c.h.b16 %v185
    %v507 = vunpack.c.l.b16 %v186
    %v508 = vunpack.c.h.b16 %v186
    %v509 = vpack.c.b16 %v313, %v309
    %v510 = vpack.c.b16 %v314, %v310
    %v511 = vpack.c.b16 %v315, %v311
    %v512 = vpack.c.b16 %v316, %v312
    %v513 = vpack.c.b16 %v321, %v317
    %v514 = vpack.c.b16 %v322, %v318
    %v515 = vpack.c.b16 %v323, %v319
    %v516 = vpack.c.b16 %v324, %v320
    %v517 = vpack.c.b16 %v329, %v325
    %v518 = vpack.c.b16 %v330, %v326
    %v519 = vpack.c.b16 %v331, %v327
    %v520 = vpack.c.b16 %v332, %v328
    %v521 = vpack.c.b16 %v337, %v333
    %v522 = vpack.c.b16 %v338, %v334
    %v523 = vpack.c.b16 %v339, %v335
    %v524 = vpack.c.b16 %v340, %v336
    %v525 = vpack.c.b16 %v345, %v341
    %v526 = vpack.c.b16 %v346, %v342
    %v527 = vpack.c.b16 %v347, %v343
    %v528 = vpack.c.b16 %v348, %v344
    %v529 = vpack.c.b16 %v353, %v349
    %v530 = vpack.c.b16 %v354, %v350
    %v531 = vpack.c.b16 %v355, %v351
    %v532 = vpack.c.b16 %v356, %v352
    %v533 = vpack.c.b16 %v361, %v357
    %v534 = vpack.c.b16 %v362, %v358
    %v535 = vpack.c.b16 %v363, %v359
    %v536 = vpack.c.b16 %v364, %v360
    %v537 = vpack.c.b16 %v369, %v365
    %v538 = vpack.c.b16 %v370, %v366
    %v539 = vpack.c.b16 %v371, %v367
    %v540 = vpack.c.b16 %v372, %v368
    %v541 = vpack.c.b16 %v377, %v373
    %v542 = vpack.c.b16 %v378, %v374
    %v543 = vpack.c.b16 %v379, %v375
    %v544 = vpack.c.b16 %v380, %v376
    %v545 = vpack.c.b16 %v385, %v381
    %v546 = vpack.c.b16 %v386, %v382
    %v547 = vpack.c.b16 %v387, %v383
    %v548 = vpack.c.b16 %v388, %v384
    %v549 = vpack.c.b16 %v393, %v389
    %v550 = vpack.c.b16 %v394, %v390
    %v551 = vpack.c.b16 %v395, %v391
    %v552 = vpack.c.b16 %v396, %v392
    %v553 = vpack.c.b16 %v401, %v397
    %v554 = vpack.c.b16 %v402, %v398
    %v555 = vpack.c.b16 %v403, %v399
    %v556 = vpack.c.b16 %v404, %v400
    %v557 = vpack.c.b16 %v409, %v405
    %v558 = vpack.c.b16 %v410, %v406
    %v559 = vpack.c.b16 %v411, %v407
    %v560 = vpack.c.b16 %v412, %v408
    %v561 = vpack.c.b16 %v417, %v413
    %v562 = vpack.c.b16 %v418, %v414
    %v563 = vpack.c.b16 %v419, %v415
    %v564 = vpack.c.b16 %v420, %v416
    %v565 = vpack.c.b16 %v425, %v421
    %v566 = vpack.c.b16 %v426, %v422
    %v567 = vpack.c.b16 %v427, %v423
    %v568 = vpack.c.b16 %v428, %v424
    %v569 = vpack.c.b16 %v433, %v429
    %v570 = vpack.c.b16 %v434, %v430
    %v571 = vpack.c.b16 %v435, %v431
    %v572 = vpack.c.b16 %v436, %v432
    %v573 = vpack.c.b16 %v441, %v437
    %v574 = vpack.c.b16 %v442, %v438
    %v575 = vpack.c.b16 %v443, %v439
    %v576 = vpack.c.b16 %v444, %v440
    %v577 = vpack.c.b16 %v449, %v445
    %v578 = vpack.c.b16 %v450, %v446
    %v579 = vpack.c.b16 %v451, %v447
    %v580 = vpack.c.b16 %v452, %v448
    %v581 = vpack.c.b16 %v457, %v453
    %v582 = vpack.c.b16 %v458, %v454
    %v583 = vpack.c.b16 %v459, %v455
    %v584 = vpack.c.b16 %v460, %v456
    %v585 = vpack.c.b16 %v465, %v461
    %v586 = vpack.c.b16 %v466, %v462
    %v587 = vpack.c.b16 %v467, %v463
    %v588 = vpack.c.b16 %v468, %v464
    %v589 = vpack.c.b16 %v473, %v469
    %v590 = vpack.c.b16 %v474, %v470
    %v591 = vpack.c.b16 %v475, %v471
    %v592 = vpack.c.b16 %v476, %v472
    %v593 = vpack.c.b16 %v481, %v477
    %v594 = vpack.c.b16 %v482, %v478
    %v595 = vpack.c.b16 %v483, %v479
    %v596 = vpack.c.b16 %v484, %v480
    %v597 = vpack.c.b16 %v489, %v485
    %v598 = vpack.c.b16 %v490, %v486
    %v599 = vpack.c.b16 %v491, %v487
    %v600 = vpack.c.b16 %v492, %v488
    %v601 = vpack.c.b16 %v497, %v493
    %v602 = vpack.c.b16 %v498, %v494
    %v603 = vpack.c.b16 %v499, %v495
    %v604 = vpack.c.b16 %v500, %v496
    %v605 = vpack.c.b16 %v505, %v501
    %v606 = vpack.c.b16 %v506, %v502
    %v607 = vpack.c.b16 %v507, %v503
    %v608 = vpack.c.b16 %v508, %v504
    %vm709 = vcmask 130048
    %v711 = vsel %vm709, %v86, 0
    %713 = vmatprep.subr.bf16.mxu0 %v538
    %714 = vmatpush1.bf16.msra.mxu0 %v537
    %715 = vmatprep.subr.bf16.mxu0 %v534
    %716 = vmatpush1.bf16.msra.mxu0 %v533
    %717 = vmatprep.subr.bf16.mxu0 %v530
    %718 = vmatpush1.bf16.msra.mxu0 %v529
    %719 = vmatprep.subr.bf16.mxu0 %v526
    %720 = vmatpush1.bf16.msra.mxu0 %v525
    %721 = vmatprep.subr.bf16.mxu0 %v522
    %722 = vmatpush1.bf16.msra.mxu0 %v521
    %723 = vmatprep.subr.bf16.mxu0 %v518
    %724 = vmatpush1.bf16.msra.mxu0 %v517
    %725 = vmatprep.subr.bf16.mxu0 %v514
    %726 = vmatpush1.bf16.msra.mxu0 %v513
    %727 = vmatprep.subr.bf16.mxu0 %v510
    %728 = vmatpush1.bf16.msra.mxu0 %v509
    %729 = vmatprep.subr.bf16.mxu0 %v570
    %730 = vmatpush2.bf16.msra.mxu0 %v569
    %731 = vmatprep.subr.bf16.mxu0 %v566
    %732 = vmatpush2.bf16.msra.mxu0 %v565
    %733 = vmatprep.subr.bf16.mxu0 %v562
    %734 = vmatpush2.bf16.msra.mxu0 %v561
    %735 = vmatprep.subr.bf16.mxu0 %v558
    %736 = vmatpush2.bf16.msra.mxu0 %v557
    %737 = vmatprep.subr.bf16.mxu0 %v554
    %738 = vmatpush2.bf16.msra.mxu0 %v553
    %739 = vmatprep.subr.bf16.mxu0 %v550
    %740 = vmatpush2.bf16.msra.mxu0 %v549
    %741 = vmatprep.subr.bf16.mxu0 %v546
    %742 = vmatpush2.bf16.msra.mxu0 %v545
    %743 = vmatprep.subr.bf16.mxu0 %v542
    %744 = vmatpush2.bf16.msra.mxu0 %v541
    %745 = vmatprep.mubr.bf16.mxu0 %v84
    %746 = vmatmul.mubr.bf16.gmra.mxu0 %v83
    %v747 = vpop.f32.mrf.mxu0
    %v748 = vadd.f32 %v192, %v747
    %v749 = vpop.f32.mrf.mxu0
    %v750 = vadd.f32 %v196, %v749
    %v751 = vpop.f32.mrf.mxu0
    %v752 = vpop.f32.mrf.mxu0
    %753 = vdwg.mxu0
    %754 = vmatprep.subr.bf16.mxu0 %v602
    %755 = vmatpush1.bf16.msra.mxu0 %v601
    %756 = vmatprep.subr.bf16.mxu0 %v598
    %757 = vmatpush1.bf16.msra.mxu0 %v597
    %758 = vmatprep.subr.bf16.mxu0 %v594
    %759 = vmatpush1.bf16.msra.mxu0 %v593
    %760 = vmatprep.subr.bf16.mxu0 %v590
    %761 = vmatpush1.bf16.msra.mxu0 %v589
    %762 = vmatprep.subr.bf16.mxu0 %v586
    %763 = vmatpush1.bf16.msra.mxu0 %v585
    %764 = vmatprep.subr.bf16.mxu0 %v582
    %765 = vmatpush1.bf16.msra.mxu0 %v581
    %766 = vmatprep.subr.bf16.mxu0 %v578
    %767 = vmatpush1.bf16.msra.mxu0 %v577
    %768 = vmatprep.subr.bf16.mxu0 %v574
    %769 = vmatpush1.bf16.msra.mxu0 %v573
    %770 = vmatprep.subr.bf16.mxu0 0
    %771 = vmatpush2.bf16.msra.mxu0 0
    %772 = vmatprep.subr.bf16.mxu0 0
    %773 = vmatpush2.bf16.msra.mxu0 0
    %774 = vmatprep.subr.bf16.mxu0 0
    %775 = vmatpush2.bf16.msra.mxu0 0
    %776 = vmatprep.subr.bf16.mxu0 0
    %777 = vmatpush2.bf16.msra.mxu0 0
    %778 = vmatprep.subr.bf16.mxu0 0
    %779 = vmatpush2.bf16.msra.mxu0 0
    %780 = vmatprep.subr.bf16.mxu0 0
    %781 = vmatpush2.bf16.msra.mxu0 0
    %782 = vmatprep.subr.bf16.mxu0 0
    %783 = vmatpush2.bf16.msra.mxu0 0
    %784 = vmatprep.subr.bf16.mxu0 %v606
    %785 = vmatpush2.bf16.msra.mxu0 %v605
    %786 = vmatprep.mubr.bf16.mxu0 %v711
    %787 = vmatmul.mubr.bf16.gmra.mxu0 %v85
    %v788 = vpop.f32.mrf.mxu0
    %v789 = vadd.f32 %v748, %v788
    %v790 = vpop.f32.mrf.mxu0
    %v791 = vadd.f32 %v750, %v790
    %v792 = vpop.f32.mrf.mxu0
    %v793 = vpop.f32.mrf.mxu0
    %794 = vdwg.mxu0
    %795 = vmatprep.subr.bf16.mxu0 %v540
    %796 = vmatpush1.bf16.msra.mxu0 %v539
    %797 = vmatprep.subr.bf16.mxu0 %v536
    %798 = vmatpush1.bf16.msra.mxu0 %v535
    %799 = vmatprep.subr.bf16.mxu0 %v532
    %800 = vmatpush1.bf16.msra.mxu0 %v531
    %801 = vmatprep.subr.bf16.mxu0 %v528
    %802 = vmatpush1.bf16.msra.mxu0 %v527
    %803 = vmatprep.subr.bf16.mxu0 %v524
    %804 = vmatpush1.bf16.msra.mxu0 %v523
    %805 = vmatprep.subr.bf16.mxu0 %v520
    %806 = vmatpush1.bf16.msra.mxu0 %v519
    %807 = vmatprep.subr.bf16.mxu0 %v516
    %808 = vmatpush1.bf16.msra.mxu0 %v515
    %809 = vmatprep.subr.bf16.mxu0 %v512
    %810 = vmatpush1.bf16.msra.mxu0 %v511
    %811 = vmatprep.subr.bf16.mxu0 %v572
    %812 = vmatpush2.bf16.msra.mxu0 %v571
    %813 = vmatprep.subr.bf16.mxu0 %v568
    %814 = vmatpush2.bf16.msra.mxu0 %v567
    %815 = vmatprep.subr.bf16.mxu0 %v564
    %816 = vmatpush2.bf16.msra.mxu0 %v563
    %817 = vmatprep.subr.bf16.mxu0 %v560
    %818 = vmatpush2.bf16.msra.mxu0 %v559
    %819 = vmatprep.subr.bf16.mxu0 %v556
    %820 = vmatpush2.bf16.msra.mxu0 %v555
    %821 = vmatprep.subr.bf16.mxu0 %v552
    %822 = vmatpush2.bf16.msra.mxu0 %v551
    %823 = vmatprep.subr.bf16.mxu0 %v548
    %824 = vmatpush2.bf16.msra.mxu0 %v547
    %825 = vmatprep.subr.bf16.mxu0 %v544
    %826 = vmatpush2.bf16.msra.mxu0 %v543
    %827 = vmatprep.mubr.bf16.mxu0 %v84
    %828 = vmatmul.mubr.bf16.gmra.mxu0 %v83
    %v829 = vpop.f32.mrf.mxu0
    %v830 = vadd.f32 %v200, %v829
    %v831 = vpop.f32.mrf.mxu0
    %v832 = vadd.f32 %v204, %v831
    %v833 = vpop.f32.mrf.mxu0
    %v834 = vpop.f32.mrf.mxu0
    %835 = vdwg.mxu0
    %836 = vmatprep.subr.bf16.mxu0 %v604
    %837 = vmatpush1.bf16.msra.mxu0 %v603
    %838 = vmatprep.subr.bf16.mxu0 %v600
    %839 = vmatpush1.bf16.msra.mxu0 %v599
    %840 = vmatprep.subr.bf16.mxu0 %v596
    %841 = vmatpush1.bf16.msra.mxu0 %v595
    %842 = vmatprep.subr.bf16.mxu0 %v592
    %843 = vmatpush1.bf16.msra.mxu0 %v591
    %844 = vmatprep.subr.bf16.mxu0 %v588
    %845 = vmatpush1.bf16.msra.mxu0 %v587
    %846 = vmatprep.subr.bf16.mxu0 %v584
    %847 = vmatpush1.bf16.msra.mxu0 %v583
    %848 = vmatprep.subr.bf16.mxu0 %v580
    %849 = vmatpush1.bf16.msra.mxu0 %v579
    %850 = vmatprep.subr.bf16.mxu0 %v576
    %851 = vmatpush1.bf16.msra.mxu0 %v575
    %852 = vmatprep.subr.bf16.mxu0 0
    %853 = vmatpush2.bf16.msra.mxu0 0
    %854 = vmatprep.subr.bf16.mxu0 0
    %855 = vmatpush2.bf16.msra.mxu0 0
    %856 = vmatprep.subr.bf16.mxu0 0
    %857 = vmatpush2.bf16.msra.mxu0 0
    %858 = vmatprep.subr.bf16.mxu0 0
    %859 = vmatpush2.bf16.msra.mxu0 0
    %860 = vmatprep.subr.bf16.mxu0 0
    %861 = vmatpush2.bf16.msra.mxu0 0
    %862 = vmatprep.subr.bf16.mxu0 0
    %863 = vmatpush2.bf16.msra.mxu0 0
    %864 = vmatprep.subr.bf16.mxu0 0
    %865 = vmatpush2.bf16.msra.mxu0 0
    %866 = vmatprep.subr.bf16.mxu0 %v608
    %867 = vmatpush2.bf16.msra.mxu0 %v607
    %868 = vmatprep.mubr.bf16.mxu0 %v711
    %869 = vmatmul.mubr.bf16.gmra.mxu0 %v85
    %v870 = vpop.f32.mrf.mxu0
    %v871 = vadd.f32 %v830, %v870
    %v872 = vpop.f32.mrf.mxu0
    %v873 = vadd.f32 %v832, %v872
    %v874 = vpop.f32.mrf.mxu0
    %v875 = vpop.f32.mrf.mxu0
    %876 = vdwg.mxu0
    %v877 = vld [vmem:[%s2] sm:$0xf]
    %v878 = vld [vmem:[%s2 + $0x4] sm:$0xf]
    %v879 = vld [vmem:[%s2 + $0x8] sm:$0xf]
    %v880 = vld [vmem:[%s2 + $0xc] sm:$0xf]
    %v881 = vld [vmem:[%s2 + $0x10] sm:$0xf]
    %v882 = vld [vmem:[%s2 + $0x14] sm:$0xf]
    %v883 = vld [vmem:[%s2 + $0x18] sm:$0xf]
    %v884 = vld [vmem:[%s2 + $0x1c] sm:$0xf]
    %v885 = vld [vmem:[%s2 + $0x20] sm:$0xf]
    %v886 = vld [vmem:[%s2 + $0x24] sm:$0xf]
    %v887 = vld [vmem:[%s2 + $0x28] sm:$0xf]
    %v888 = vld [vmem:[%s2 + $0x2c] sm:$0xf]
    %v889 = vld [vmem:[%s2 + $0x30] sm:$0xf]
    %v890 = vld [vmem:[%s2 + $0x34] sm:$0xf]
    %v891 = vld [vmem:[%s2 + $0x38] sm:$0xf]
    %v892 = vld [vmem:[%s2 + $0x3c] sm:$0xf]
    %v893 = vld [vmem:[%s2 + $0x40] sm:$0xf]
    %v894 = vld [vmem:[%s2 + $0x44] sm:$0xf]
    %v895 = vld [vmem:[%s2 + $0x48] sm:$0xf]
    %v896 = vld [vmem:[%s2 + $0x4c] sm:$0xf]
    %v897 = vld [vmem:[%s2 + $0x50] sm:$0xf]
    %v898 = vld [vmem:[%s2 + $0x54] sm:$0xf]
    %v899 = vld [vmem:[%s2 + $0x58] sm:$0xf]
    %v900 = vld [vmem:[%s2 + $0x5c] sm:$0xf]
    %v901 = vld [vmem:[%s2 + $0x60] sm:$0xf]
    %v902 = vld [vmem:[%s2 + $0x64] sm:$0xf]
    %v903 = vld [vmem:[%s2 + $0x68] sm:$0xf]
    %v904 = vld [vmem:[%s2 + $0x6c] sm:$0xf]
    %v905 = vld [vmem:[%s2 + $0x70] sm:$0xf]
    %v906 = vld [vmem:[%s2 + $0x74] sm:$0xf]
    %v907 = vld [vmem:[%s2 + $0x78] sm:$0xf]
    %v908 = vld [vmem:[%s2 + $0x7c] sm:$0xf]
    %v909 = vld [vmem:[%s2 + $0x80] sm:$0xf]
    %v910 = vld [vmem:[%s2 + $0x84] sm:$0xf]
    %v911 = vld [vmem:[%s2 + $0x88] sm:$0xf]
    %v912 = vld [vmem:[%s2 + $0x8c] sm:$0xf]
    %v913 = vld [vmem:[%s2 + $0x90] sm:$0xf]
    %v914 = vld [vmem:[%s2 + $0x94] sm:$0xf]
    %v915 = vld [vmem:[%s2 + $0x98] sm:$0xf]
    %v916 = vld [vmem:[%s2 + $0x9c] sm:$0xf]
    %v917 = vld [vmem:[%s2 + $0xa0] sm:$0xf]
    %v918 = vld [vmem:[%s2 + $0xa4] sm:$0xf]
    %v919 = vld [vmem:[%s2 + $0xa8] sm:$0xf]
    %v920 = vld [vmem:[%s2 + $0xac] sm:$0xf]
    %v921 = vld [vmem:[%s2 + $0xb0] sm:$0xf]
    %v922 = vld [vmem:[%s2 + $0xb4] sm:$0xf]
    %v923 = vld [vmem:[%s2 + $0xb8] sm:$0xf]
    %v924 = vld [vmem:[%s2 + $0xbc] sm:$0xf]
    %v925 = vld [vmem:[%s2 + $0xc0] sm:$0xf]
    %v926 = vld [vmem:[%s2 + $0xc4] sm:$0xf]
    %v927 = vld [vmem:[%s7 + $0x4] sm:$0x1]
    %v929 = vlaneseq
    %v930 = vshrl.u32 %v929, 7
    %v931 = vsub.s32 0, %v930
    %v932 = vrot.slane %v927, %v931
    %v984 = vunpack.c.l.b16 %v877
    %v985 = vunpack.c.l.b16 %v878
    %v986 = vunpack.c.l.b16 %v879
    %v987 = vunpack.c.l.b16 %v880
    %v988 = vunpack.c.l.b16 %v881
    %v989 = vunpack.c.l.b16 %v882
    %v990 = vunpack.c.l.b16 %v883
    %v991 = vunpack.c.l.b16 %v884
    %v992 = vunpack.c.l.b16 %v885
    %v993 = vunpack.c.l.b16 %v886
    %v994 = vunpack.c.l.b16 %v887
    %v995 = vunpack.c.l.b16 %v888
    %v996 = vunpack.c.l.b16 %v889
    %v997 = vunpack.c.l.b16 %v890
    %v998 = vunpack.c.l.b16 %v891
    %v999 = vunpack.c.l.b16 %v892
    %v1000 = vunpack.c.l.b16 %v893
    %v1001 = vunpack.c.l.b16 %v894
    %v1002 = vunpack.c.l.b16 %v895
    %v1003 = vunpack.c.l.b16 %v896
    %v1004 = vunpack.c.l.b16 %v897
    %v1005 = vunpack.c.l.b16 %v898
    %v1006 = vunpack.c.l.b16 %v899
    %v1007 = vunpack.c.l.b16 %v900
    %v1008 = vunpack.c.l.b16 %v901
    %v1009 = vunpack.c.l.b16 %v902
    %v1010 = vunpack.c.l.b16 %v903
    %v1011 = vunpack.c.l.b16 %v904
    %v1012 = vunpack.c.l.b16 %v905
    %v1013 = vunpack.c.l.b16 %v906
    %v1014 = vunpack.c.l.b16 %v907
    %v1015 = vunpack.c.l.b16 %v908
    %v1016 = vunpack.c.l.b16 %v909
    %v1017 = vunpack.c.l.b16 %v910
    %v1018 = vunpack.c.l.b16 %v911
    %v1019 = vunpack.c.l.b16 %v912
    %v1020 = vunpack.c.l.b16 %v913
    %v1021 = vunpack.c.l.b16 %v914
    %v1022 = vunpack.c.l.b16 %v915
    %v1023 = vunpack.c.l.b16 %v916
    %v1024 = vunpack.c.l.b16 %v917
    %v1025 = vunpack.c.l.b16 %v918
    %v1026 = vunpack.c.l.b16 %v919
    %v1027 = vunpack.c.l.b16 %v920
    %v1028 = vunpack.c.l.b16 %v921
    %v1029 = vunpack.c.l.b16 %v922
    %v1030 = vunpack.c.l.b16 %v923
    %v1031 = vunpack.c.l.b16 %v924
    %v1032 = vunpack.c.l.b16 %v925
    %v1033 = vunpack.c.l.b16 %v926
    %v1034 = vpack.c.b16 %v985, %v984
    %v1035 = vpack.c.b16 %v987, %v986
    %v1036 = vpack.c.b16 %v989, %v988
    %v1037 = vpack.c.b16 %v991, %v990
    %v1038 = vpack.c.b16 %v993, %v992
    %v1039 = vpack.c.b16 %v995, %v994
    %v1040 = vpack.c.b16 %v997, %v996
    %v1041 = vpack.c.b16 %v999, %v998
    %v1042 = vpack.c.b16 %v1001, %v1000
    %v1043 = vpack.c.b16 %v1003, %v1002
    %v1044 = vpack.c.b16 %v1005, %v1004
    %v1045 = vpack.c.b16 %v1007, %v1006
    %v1046 = vpack.c.b16 %v1009, %v1008
    %v1047 = vpack.c.b16 %v1011, %v1010
    %v1048 = vpack.c.b16 %v1013, %v1012
    %v1049 = vpack.c.b16 %v1015, %v1014
    %v1050 = vpack.c.b16 %v1017, %v1016
    %v1051 = vpack.c.b16 %v1019, %v1018
    %v1052 = vpack.c.b16 %v1021, %v1020
    %v1053 = vpack.c.b16 %v1023, %v1022
    %v1054 = vpack.c.b16 %v1025, %v1024
    %v1055 = vpack.c.b16 %v1027, %v1026
    %v1056 = vpack.c.b16 %v1029, %v1028
    %v1057 = vpack.c.b16 %v1031, %v1030
    %v1058 = vpack.c.b16 %v1033, %v1032
    %1084 = vmatprep.subr.bf16.mxu0 0
    %1085 = vmatpush1.bf16.msra.mxu0 %v1041
    %1086 = vmatprep.subr.bf16.mxu0 0
    %1087 = vmatpush1.bf16.msra.mxu0 %v1040
    %1088 = vmatprep.subr.bf16.mxu0 0
    %1089 = vmatpush1.bf16.msra.mxu0 %v1039
    %1090 = vmatprep.subr.bf16.mxu0 0
    %1091 = vmatpush1.bf16.msra.mxu0 %v1038
    %1092 = vmatprep.subr.bf16.mxu0 0
    %1093 = vmatpush1.bf16.msra.mxu0 %v1037
    %1094 = vmatprep.subr.bf16.mxu0 0
    %1095 = vmatpush1.bf16.msra.mxu0 %v1036
    %1096 = vmatprep.subr.bf16.mxu0 0
    %1097 = vmatpush1.bf16.msra.mxu0 %v1035
    %1098 = vmatprep.subr.bf16.mxu0 0
    %1099 = vmatpush1.bf16.msra.mxu0 %v1034
    %1100 = vmatprep.subr.bf16.mxu0 0
    %1101 = vmatpush2.bf16.msra.mxu0 %v1049
    %1102 = vmatprep.subr.bf16.mxu0 0
    %1103 = vmatpush2.bf16.msra.mxu0 %v1048
    %1104 = vmatprep.subr.bf16.mxu0 0
    %1105 = vmatpush2.bf16.msra.mxu0 %v1047
    %1106 = vmatprep.subr.bf16.mxu0 0
    %1107 = vmatpush2.bf16.msra.mxu0 %v1046
    %1108 = vmatprep.subr.bf16.mxu0 0
    %1109 = vmatpush2.bf16.msra.mxu0 %v1045
    %1110 = vmatprep.subr.bf16.mxu0 0
    %1111 = vmatpush2.bf16.msra.mxu0 %v1044
    %1112 = vmatprep.subr.bf16.mxu0 0
    %1113 = vmatpush2.bf16.msra.mxu0 %v1043
    %1114 = vmatprep.subr.bf16.mxu0 0
    %1115 = vmatpush2.bf16.msra.mxu0 %v1042
    %1116 = vmatprep.mubr.bf16.mxu0 %v84
    %1117 = vmatmul.mubr.bf16.gmra.mxu0 %v83
    %v1118 = vpop.f32.mrf.mxu0
    %v1119 = vadd.f32 %v932, %v1118
    %v1120 = vpop.f32.mrf.mxu0
    %v1121 = vpop.f32.mrf.mxu0
    %v1122 = vpop.f32.mrf.mxu0
    %1123 = vdwg.mxu0
    %1124 = vmatprep.subr.bf16.mxu0 0
    %1125 = vmatpush1.bf16.msra.mxu0 %v1057
    %1126 = vmatprep.subr.bf16.mxu0 0
    %1127 = vmatpush1.bf16.msra.mxu0 %v1056
    %1128 = vmatprep.subr.bf16.mxu0 0
    %1129 = vmatpush1.bf16.msra.mxu0 %v1055
    %1130 = vmatprep.subr.bf16.mxu0 0
    %1131 = vmatpush1.bf16.msra.mxu0 %v1054
    %1132 = vmatprep.subr.bf16.mxu0 0
    %1133 = vmatpush1.bf16.msra.mxu0 %v1053
    %1134 = vmatprep.subr.bf16.mxu0 0
    %1135 = vmatpush1.bf16.msra.mxu0 %v1052
    %1136 = vmatprep.subr.bf16.mxu0 0
    %1137 = vmatpush1.bf16.msra.mxu0 %v1051
    %1138 = vmatprep.subr.bf16.mxu0 0
    %1139 = vmatpush1.bf16.msra.mxu0 %v1050
    %1140 = vmatprep.subr.bf16.mxu0 0
    %1141 = vmatpush2.bf16.msra.mxu0 0
    %1142 = vmatprep.subr.bf16.mxu0 0
    %1143 = vmatpush2.bf16.msra.mxu0 0
    %1144 = vmatprep.subr.bf16.mxu0 0
    %1145 = vmatpush2.bf16.msra.mxu0 0
    %1146 = vmatprep.subr.bf16.mxu0 0
    %1147 = vmatpush2.bf16.msra.mxu0 0
    %1148 = vmatprep.subr.bf16.mxu0 0
    %1149 = vmatpush2.bf16.msra.mxu0 0
    %1150 = vmatprep.subr.bf16.mxu0 0
    %1151 = vmatpush2.bf16.msra.mxu0 0
    %1152 = vmatprep.subr.bf16.mxu0 0
    %1153 = vmatpush2.bf16.msra.mxu0 0
    %1154 = vmatprep.subr.bf16.mxu0 0
    %1155 = vmatpush2.bf16.msra.mxu0 %v1058
    %1156 = vmatprep.mubr.bf16.mxu0 %v711
    %1157 = vmatmul.mubr.bf16.gmra.mxu0 %v85
    %v1158 = vpop.f32.mrf.mxu0
    %v1159 = vadd.f32 %v1119, %v1158
    %v1160 = vpop.f32.mrf.mxu0
    %v1161 = vpop.f32.mrf.mxu0
    %v1162 = vpop.f32.mrf.mxu0
    %1163 = vdwg.mxu0
    %v1164 = vpack.c.bf16 %v789, %v789
    %v1165 = vpack.c.bf16 %v791, %v791
    %v1166 = vpack.c.bf16 %v871, %v871
    %v1167 = vpack.c.bf16 %v873, %v873
    %v1168 = vpack.c.bf16 %v1159, %v1159
    %v1169 = vld [vmem:[#allocation5] sm:$0xff]
    %v1170 = vld [vmem:[#allocation5 + $0x8] sm:$0xff]
    %v1171 = vld [vmem:[#allocation5 + $0x10] sm:$0xff]
    %v1172 = vld [vmem:[#allocation5 + $0x18] sm:$0xff]
    %v1173 = vld [vmem:[#allocation5 + $0x20] sm:$0xff]
    %v1174 = vld [vmem:[#allocation5 + $0x28] sm:$0xff]
    %v1175 = vld [vmem:[#allocation5 + $0x30] sm:$0xff]
    %v1176 = vld [vmem:[#allocation5 + $0x38] sm:$0xff]
    %v1177 = vld [vmem:[#allocation5 + $0x40] sm:$0xff]
    %v1178 = vld [vmem:[#allocation5 + $0x48] sm:$0xff]
    %v1179 = vld [vmem:[#allocation5 + $0x50] sm:$0xff]
    %v1180 = vld [vmem:[#allocation5 + $0x58] sm:$0xff]
    %v1181 = vld [vmem:[#allocation5 + $0x60] sm:$0xff]
    %v1182 = vld [vmem:[#allocation5 + $0x68] sm:$0xff]
    %v1183 = vld [vmem:[#allocation5 + $0x70] sm:$0xff]
    %v1184 = vld [vmem:[#allocation5 + $0x78] sm:$0xff]
    %v1185 = vld [vmem:[#allocation5 + $0x80] sm:$0xff]
    %v1186 = vld [vmem:[#allocation5 + $0x88] sm:$0xff]
    %v1187 = vld [vmem:[#allocation5 + $0x90] sm:$0xff]
    %v1188 = vld [vmem:[#allocation5 + $0x98] sm:$0xff]
    %v1189 = vld [vmem:[#allocation5 + $0xa0] sm:$0xff]
    %v1190 = vld [vmem:[#allocation5 + $0xa8] sm:$0xff]
    %v1191 = vld [vmem:[#allocation5 + $0xb0] sm:$0xff]
    %v1192 = vld [vmem:[#allocation5 + $0xb8] sm:$0xff]
    %v1193 = vld [vmem:[#allocation5 + $0xc0] sm:$0xff]
    %v1194 = vld [vmem:[#allocation5 + $0xc8] sm:$0xff]
    %v1195 = vld [vmem:[#allocation5 + $0xd0] sm:$0xff]
    %v1196 = vld [vmem:[#allocation5 + $0xd8] sm:$0xff]
    %v1197 = vld [vmem:[#allocation5 + $0xe0] sm:$0xff]
    %v1198 = vld [vmem:[#allocation5 + $0xe8] sm:$0xff]
    %v1199 = vld [vmem:[#allocation5 + $0xf0] sm:$0xff]
    %v1200 = vld [vmem:[#allocation5 + $0xf8] sm:$0xff]
    %v1201 = vld [vmem:[#allocation5 + $0x100] sm:$0xff]
    %v1202 = vld [vmem:[#allocation5 + $0x108] sm:$0xff]
    %v1203 = vld [vmem:[#allocation5 + $0x110] sm:$0xff]
    %v1204 = vld [vmem:[#allocation5 + $0x118] sm:$0xff]
    %v1205 = vld [vmem:[#allocation5 + $0x120] sm:$0xff]
    %v1206 = vld [vmem:[#allocation5 + $0x128] sm:$0xff]
    %v1207 = vld [vmem:[#allocation5 + $0x130] sm:$0xff]
    %v1208 = vld [vmem:[#allocation5 + $0x138] sm:$0xff]
    %v1209 = vld [vmem:[#allocation5 + $0x140] sm:$0xff]
    %v1210 = vld [vmem:[#allocation5 + $0x148] sm:$0xff]
    %v1211 = vld [vmem:[#allocation5 + $0x150] sm:$0xff]
    %v1212 = vld [vmem:[#allocation5 + $0x158] sm:$0xff]
    %v1213 = vld [vmem:[#allocation5 + $0x160] sm:$0xff]
    %v1214 = vld [vmem:[#allocation5 + $0x168] sm:$0xff]
    %v1215 = vld [vmem:[#allocation5 + $0x170] sm:$0xff]
    %v1216 = vld [vmem:[#allocation5 + $0x178] sm:$0xff]
    %v1217 = vld [vmem:[#allocation5 + $0x180] sm:$0xff]
    %v1218 = vld [vmem:[#allocation5 + $0x188] sm:$0xff]
    %v1219 = vld [vmem:[#allocation5 + $0x190] sm:$0xff]
    %v1220 = vld [vmem:[#allocation5 + $0x198] sm:$0xff]
    %v1221 = vld [vmem:[#allocation5 + $0x1a0] sm:$0xff]
    %v1222 = vld [vmem:[#allocation5 + $0x1a8] sm:$0xff]
    %v1223 = vld [vmem:[#allocation5 + $0x1b0] sm:$0xff]
    %v1224 = vld [vmem:[#allocation5 + $0x1b8] sm:$0xff]
    %v1225 = vld [vmem:[#allocation5 + $0x1c0] sm:$0xff]
    %v1226 = vld [vmem:[#allocation5 + $0x1c8] sm:$0xff]
    %v1227 = vld [vmem:[#allocation5 + $0x1d0] sm:$0xff]
    %v1228 = vld [vmem:[#allocation5 + $0x1d8] sm:$0xff]
    %v1229 = vld [vmem:[#allocation5 + $0x1e0] sm:$0xff]
    %v1230 = vld [vmem:[#allocation5 + $0x1e8] sm:$0xff]
    %v1231 = vld [vmem:[#allocation5 + $0x1f0] sm:$0xff]
    %v1232 = vld [vmem:[#allocation5 + $0x1f8] sm:$0xff]
    %v1233 = vld [vmem:[#allocation5 + $0x200] sm:$0xff]
    %v1234 = vld [vmem:[#allocation5 + $0x208] sm:$0xff]
    %v1235 = vld [vmem:[#allocation5 + $0x210] sm:$0xff]
    %v1236 = vld [vmem:[#allocation5 + $0x218] sm:$0xff]
    %v1237 = vld [vmem:[#allocation5 + $0x220] sm:$0xff]
    %v1238 = vld [vmem:[#allocation5 + $0x228] sm:$0xff]
    %v1239 = vld [vmem:[#allocation5 + $0x230] sm:$0xff]
    %v1240 = vld [vmem:[#allocation5 + $0x238] sm:$0xff]
    %v1241 = vld [vmem:[#allocation5 + $0x240] sm:$0xff]
    %v1242 = vld [vmem:[#allocation5 + $0x248] sm:$0xff]
    %v1243 = vld [vmem:[#allocation5 + $0x250] sm:$0xff]
    %v1244 = vld [vmem:[#allocation5 + $0x258] sm:$0xff]
    %v1245 = vld [vmem:[#allocation5 + $0x260] sm:$0xff]
    %v1246 = vld [vmem:[#allocation5 + $0x268] sm:$0xff]
    %v1247 = vld [vmem:[#allocation5 + $0x270] sm:$0xff]
    %v1248 = vld [vmem:[#allocation5 + $0x278] sm:$0xff]
    %v1249 = vld [vmem:[#allocation5 + $0x280] sm:$0xff]
    %v1250 = vld [vmem:[#allocation5 + $0x288] sm:$0xff]
    %v1251 = vld [vmem:[#allocation5 + $0x290] sm:$0xff]
    %v1252 = vld [vmem:[#allocation5 + $0x298] sm:$0xff]
    %v1253 = vld [vmem:[#allocation5 + $0x2a0] sm:$0xff]
    %v1254 = vld [vmem:[#allocation5 + $0x2a8] sm:$0xff]
    %v1255 = vld [vmem:[#allocation5 + $0x2b0] sm:$0xff]
    %v1256 = vld [vmem:[#allocation5 + $0x2b8] sm:$0xff]
    %v1257 = vld [vmem:[#allocation5 + $0x2c0] sm:$0xff]
    %v1258 = vld [vmem:[#allocation5 + $0x2c8] sm:$0xff]
    %v1259 = vld [vmem:[#allocation5 + $0x2d0] sm:$0xff]
    %v1260 = vld [vmem:[#allocation5 + $0x2d8] sm:$0xff]
    %v1261 = vld [vmem:[#allocation5 + $0x2e0] sm:$0xff]
    %v1262 = vld [vmem:[#allocation5 + $0x2e8] sm:$0xff]
    %v1263 = vld [vmem:[#allocation5 + $0x2f0] sm:$0xff]
    %v1264 = vld [vmem:[#allocation5 + $0x2f8] sm:$0xff]
    %v1265 = vld [vmem:[#allocation5 + $0x300] sm:$0xff]
    %v1266 = vld [vmem:[#allocation5 + $0x308] sm:$0xff]
    %v1267 = vld [vmem:[#allocation5 + $0x310] sm:$0xff]
    %v1268 = vld [vmem:[#allocation5 + $0x318] sm:$0xff]
    %v1269 = vld [vmem:[%s4] sm:$0xff]
    %v1270 = vld [vmem:[%s4 + $0x8] sm:$0xff]
    %v1271 = vld [vmem:[%s4 + $0x10] sm:$0xff]
    %v1272 = vld [vmem:[%s4 + $0x18] sm:$0xff]
    %v1273 = vld [vmem:[%s4 + $0x20] sm:$0xff]
    %v1274 = vld [vmem:[%s4 + $0x28] sm:$0xff]
    %v1275 = vld [vmem:[%s4 + $0x30] sm:$0xff]
    %v1276 = vld [vmem:[%s4 + $0x38] sm:$0xff]
    %v1277 = vld [vmem:[%s4 + $0x40] sm:$0xff]
    %v1278 = vld [vmem:[%s4 + $0x48] sm:$0xff]
    %v1279 = vld [vmem:[%s4 + $0x50] sm:$0xff]
    %v1280 = vld [vmem:[%s4 + $0x58] sm:$0xff]
    %v1281 = vld [vmem:[%s4 + $0x60] sm:$0xff]
    %v1282 = vld [vmem:[%s4 + $0x68] sm:$0xff]
    %v1283 = vld [vmem:[%s4 + $0x70] sm:$0xff]
    %v1284 = vld [vmem:[%s4 + $0x78] sm:$0xff]
    %v1285 = vld [vmem:[%s4 + $0x80] sm:$0xff]
    %v1286 = vld [vmem:[%s4 + $0x88] sm:$0xff]
    %v1287 = vld [vmem:[%s4 + $0x90] sm:$0xff]
    %v1288 = vld [vmem:[%s4 + $0x98] sm:$0xff]
    %v1289 = vld [vmem:[%s4 + $0xa0] sm:$0xff]
    %v1290 = vld [vmem:[%s4 + $0xa8] sm:$0xff]
    %v1291 = vld [vmem:[%s4 + $0xb0] sm:$0xff]
    %v1292 = vld [vmem:[%s4 + $0xb8] sm:$0xff]
    %v1293 = vld [vmem:[%s4 + $0xc0] sm:$0xff]
    %v1294 = vld [vmem:[%s4 + $0xc8] sm:$0xff]
    %v1295 = vld [vmem:[%s4 + $0xd0] sm:$0xff]
    %v1296 = vld [vmem:[%s4 + $0xd8] sm:$0xff]
    %v1297 = vld [vmem:[%s4 + $0xe0] sm:$0xff]
    %v1298 = vld [vmem:[%s4 + $0xe8] sm:$0xff]
    %v1299 = vld [vmem:[%s4 + $0xf0] sm:$0xff]
    %v1300 = vld [vmem:[%s4 + $0xf8] sm:$0xff]
    %v1333 = vunpack.c.l.b16 %v1269
    %v1334 = vunpack.c.h.b16 %v1269
    %v1335 = vunpack.c.l.b16 %v1270
    %v1336 = vunpack.c.h.b16 %v1270
    %v1337 = vunpack.c.l.b16 %v1271
    %v1338 = vunpack.c.h.b16 %v1271
    %v1339 = vunpack.c.l.b16 %v1272
    %v1340 = vunpack.c.h.b16 %v1272
    %v1341 = vunpack.c.l.b16 %v1273
    %v1342 = vunpack.c.h.b16 %v1273
    %v1343 = vunpack.c.l.b16 %v1274
    %v1344 = vunpack.c.h.b16 %v1274
    %v1345 = vunpack.c.l.b16 %v1275
    %v1346 = vunpack.c.h.b16 %v1275
    %v1347 = vunpack.c.l.b16 %v1276
    %v1348 = vunpack.c.h.b16 %v1276
    %v1349 = vunpack.c.l.b16 %v1277
    %v1350 = vunpack.c.h.b16 %v1277
    %v1351 = vunpack.c.l.b16 %v1278
    %v1352 = vunpack.c.h.b16 %v1278
    %v1353 = vunpack.c.l.b16 %v1279
    %v1354 = vunpack.c.h.b16 %v1279
    %v1355 = vunpack.c.l.b16 %v1280
    %v1356 = vunpack.c.h.b16 %v1280
    %v1357 = vunpack.c.l.b16 %v1281
    %v1358 = vunpack.c.h.b16 %v1281
    %v1359 = vunpack.c.l.b16 %v1282
    %v1360 = vunpack.c.h.b16 %v1282
    %v1361 = vunpack.c.l.b16 %v1283
    %v1362 = vunpack.c.h.b16 %v1283
    %v1363 = vunpack.c.l.b16 %v1284
    %v1364 = vunpack.c.h.b16 %v1284
    %v1365 = vunpack.c.l.b16 %v1285
    %v1366 = vunpack.c.h.b16 %v1285
    %v1367 = vunpack.c.l.b16 %v1286
    %v1368 = vunpack.c.h.b16 %v1286
    %v1369 = vunpack.c.l.b16 %v1287
    %v1370 = vunpack.c.h.b16 %v1287
    %v1371 = vunpack.c.l.b16 %v1288
    %v1372 = vunpack.c.h.b16 %v1288
    %v1373 = vunpack.c.l.b16 %v1289
    %v1374 = vunpack.c.h.b16 %v1289
    %v1375 = vunpack.c.l.b16 %v1290
    %v1376 = vunpack.c.h.b16 %v1290
    %v1377 = vunpack.c.l.b16 %v1291
    %v1378 = vunpack.c.h.b16 %v1291
    %v1379 = vunpack.c.l.b16 %v1292
    %v1380 = vunpack.c.h.b16 %v1292
    %v1381 = vunpack.c.l.b16 %v1293
    %v1382 = vunpack.c.h.b16 %v1293
    %v1383 = vunpack.c.l.b16 %v1294
    %v1384 = vunpack.c.h.b16 %v1294
    %v1385 = vunpack.c.l.b16 %v1295
    %v1386 = vunpack.c.h.b16 %v1295
    %v1387 = vunpack.c.l.b16 %v1296
    %v1388 = vunpack.c.h.b16 %v1296
    %v1389 = vunpack.c.l.b16 %v1297
    %v1390 = vunpack.c.h.b16 %v1297
    %v1391 = vunpack.c.l.b16 %v1298
    %v1392 = vunpack.c.h.b16 %v1298
    %v1393 = vunpack.c.l.b16 %v1299
    %v1394 = vunpack.c.h.b16 %v1299
    %v1395 = vunpack.c.l.b16 %v1300
    %v1396 = vunpack.c.h.b16 %v1300
    %v1397 = vpack.c.b16 %v1337, %v1333
    %v1398 = vpack.c.b16 %v1338, %v1334
    %v1399 = vpack.c.b16 %v1339, %v1335
    %v1400 = vpack.c.b16 %v1340, %v1336
    %v1401 = vpack.c.b16 %v1345, %v1341
    %v1402 = vpack.c.b16 %v1346, %v1342
    %v1403 = vpack.c.b16 %v1347, %v1343
    %v1404 = vpack.c.b16 %v1348, %v1344
    %v1405 = vpack.c.b16 %v1353, %v1349
    %v1406 = vpack.c.b16 %v1354, %v1350
    %v1407 = vpack.c.b16 %v1355, %v1351
    %v1408 = vpack.c.b16 %v1356, %v1352
    %v1409 = vpack.c.b16 %v1361, %v1357
    %v1410 = vpack.c.b16 %v1362, %v1358
    %v1411 = vpack.c.b16 %v1363, %v1359
    %v1412 = vpack.c.b16 %v1364, %v1360
    %v1413 = vpack.c.b16 %v1369, %v1365
    %v1414 = vpack.c.b16 %v1370, %v1366
    %v1415 = vpack.c.b16 %v1371, %v1367
    %v1416 = vpack.c.b16 %v1372, %v1368
    %v1417 = vpack.c.b16 %v1377, %v1373
    %v1418 = vpack.c.b16 %v1378, %v1374
    %v1419 = vpack.c.b16 %v1379, %v1375
    %v1420 = vpack.c.b16 %v1380, %v1376
    %v1421 = vpack.c.b16 %v1385, %v1381
    %v1422 = vpack.c.b16 %v1386, %v1382
    %v1423 = vpack.c.b16 %v1387, %v1383
    %v1424 = vpack.c.b16 %v1388, %v1384
    %v1425 = vpack.c.b16 %v1393, %v1389
    %v1426 = vpack.c.b16 %v1394, %v1390
    %v1427 = vpack.c.b16 %v1395, %v1391
    %v1428 = vpack.c.b16 %v1396, %v1392
    %1461 = vmatprep.subr.bf16.mxu0 %v1426
    %1462 = vmatpush1.bf16.msra.mxu0 %v1425
    %1463 = vmatprep.subr.bf16.mxu0 %v1422
    %1464 = vmatpush1.bf16.msra.mxu0 %v1421
    %1465 = vmatprep.subr.bf16.mxu0 %v1418
    %1466 = vmatpush1.bf16.msra.mxu0 %v1417
    %1467 = vmatprep.subr.bf16.mxu0 %v1414
    %1468 = vmatpush1.bf16.msra.mxu0 %v1413
    %1469 = vmatprep.subr.bf16.mxu0 %v1410
    %1470 = vmatpush1.bf16.msra.mxu0 %v1409
    %1471 = vmatprep.subr.bf16.mxu0 %v1406
    %1472 = vmatpush1.bf16.msra.mxu0 %v1405
    %1473 = vmatprep.subr.bf16.mxu0 %v1402
    %1474 = vmatpush1.bf16.msra.mxu0 %v1401
    %1475 = vmatprep.subr.bf16.mxu0 %v1398
    %1476 = vmatpush1.bf16.msra.mxu0 %v1397
    %1477 = vmatprep.subr.bf16.mxu0 0
    %1478 = vmatpush2.bf16.msra.mxu0 0
    %1479 = vmatprep.subr.bf16.mxu0 0
    %1480 = vmatpush2.bf16.msra.mxu0 0
    %1481 = vmatprep.subr.bf16.mxu0 0
    %1482 = vmatpush2.bf16.msra.mxu0 0
    %1483 = vmatprep.subr.bf16.mxu0 0
    %1484 = vmatpush2.bf16.msra.mxu0 0
    %1485 = vmatprep.subr.bf16.mxu0 0
    %1486 = vmatpush2.bf16.msra.mxu0 0
    %1487 = vmatprep.subr.bf16.mxu0 0
    %1488 = vmatpush2.bf16.msra.mxu0 0
    %1489 = vmatprep.subr.bf16.mxu0 0
    %1490 = vmatpush2.bf16.msra.mxu0 0
    %1491 = vmatprep.subr.bf16.mxu0 0
    %1492 = vmatpush2.bf16.msra.mxu0 0
    %1493 = vmatprep.mubr.bf16.mxu0 0
    %1494 = vmatmul.mubr.bf16.gmra.mxu0 %v1168
    %v1495 = vpop.f32.mrf.mxu0
    %v1496 = vadd.f32 0.0, %v1495
    %v1497 = vpop.f32.mrf.mxu0
    %v1498 = vadd.f32 0.0, %v1497
    %v1499 = vpop.f32.mrf.mxu0
    %v1500 = vpop.f32.mrf.mxu0
    %1501 = vdwg.mxu0
    %1502 = vmatprep.subr.bf16.mxu0 %v1428
    %1503 = vmatpush1.bf16.msra.mxu0 %v1427
    %1504 = vmatprep.subr.bf16.mxu0 %v1424
    %1505 = vmatpush1.bf16.msra.mxu0 %v1423
    %1506 = vmatprep.subr.bf16.mxu0 %v1420
    %1507 = vmatpush1.bf16.msra.mxu0 %v1419
    %1508 = vmatprep.subr.bf16.mxu0 %v1416
    %1509 = vmatpush1.bf16.msra.mxu0 %v1415
    %1510 = vmatprep.subr.bf16.mxu0 %v1412
    %1511 = vmatpush1.bf16.msra.mxu0 %v1411
    %1512 = vmatprep.subr.bf16.mxu0 %v1408
    %1513 = vmatpush1.bf16.msra.mxu0 %v1407
    %1514 = vmatprep.subr.bf16.mxu0 %v1404
    %1515 = vmatpush1.bf16.msra.mxu0 %v1403
    %1516 = vmatprep.subr.bf16.mxu0 %v1400
    %1517 = vmatpush1.bf16.msra.mxu0 %v1399
    %1518 = vmatprep.subr.bf16.mxu0 0
    %1519 = vmatpush2.bf16.msra.mxu0 0
    %1520 = vmatprep.subr.bf16.mxu0 0
    %1521 = vmatpush2.bf16.msra.mxu0 0
    %1522 = vmatprep.subr.bf16.mxu0 0
    %1523 = vmatpush2.bf16.msra.mxu0 0
    %1524 = vmatprep.subr.bf16.mxu0 0
    %1525 = vmatpush2.bf16.msra.mxu0 0
    %1526 = vmatprep.subr.bf16.mxu0 0
    %1527 = vmatpush2.bf16.msra.mxu0 0
    %1528 = vmatprep.subr.bf16.mxu0 0
    %1529 = vmatpush2.bf16.msra.mxu0 0
    %1530 = vmatprep.subr.bf16.mxu0 0
    %1531 = vmatpush2.bf16.msra.mxu0 0
    %1532 = vmatprep.subr.bf16.mxu0 0
    %1533 = vmatpush2.bf16.msra.mxu0 0
    %1534 = vmatprep.mubr.bf16.mxu0 0
    %1535 = vmatmul.mubr.bf16.gmra.mxu0 %v1168
    %v1536 = vpop.f32.mrf.mxu0
    %v1537 = vadd.f32 0.0, %v1536
    %v1538 = vpop.f32.mrf.mxu0
    %v1539 = vadd.f32 0.0, %v1538
    %v1540 = vpop.f32.mrf.mxu0
    %v1541 = vpop.f32.mrf.mxu0
    %1542 = vdwg.mxu0
    %v1643 = vunpack.c.l.b16 %v1169
    %v1644 = vunpack.c.h.b16 %v1169
    %v1645 = vunpack.c.l.b16 %v1170
    %v1646 = vunpack.c.h.b16 %v1170
    %v1647 = vunpack.c.l.b16 %v1171
    %v1648 = vunpack.c.h.b16 %v1171
    %v1649 = vunpack.c.l.b16 %v1172
    %v1650 = vunpack.c.h.b16 %v1172
    %v1651 = vunpack.c.l.b16 %v1173
    %v1652 = vunpack.c.h.b16 %v1173
    %v1653 = vunpack.c.l.b16 %v1174
    %v1654 = vunpack.c.h.b16 %v1174
    %v1655 = vunpack.c.l.b16 %v1175
    %v1656 = vunpack.c.h.b16 %v1175
    %v1657 = vunpack.c.l.b16 %v1176
    %v1658 = vunpack.c.h.b16 %v1176
    %v1659 = vunpack.c.l.b16 %v1177
    %v1660 = vunpack.c.h.b16 %v1177
    %v1661 = vunpack.c.l.b16 %v1178
    %v1662 = vunpack.c.h.b16 %v1178
    %v1663 = vunpack.c.l.b16 %v1179
    %v1664 = vunpack.c.h.b16 %v1179
    %v1665 = vunpack.c.l.b16 %v1180
    %v1666 = vunpack.c.h.b16 %v1180
    %v1667 = vunpack.c.l.b16 %v1181
    %v1668 = vunpack.c.h.b16 %v1181
    %v1669 = vunpack.c.l.b16 %v1182
    %v1670 = vunpack.c.h.b16 %v1182
    %v1671 = vunpack.c.l.b16 %v1183
    %v1672 = vunpack.c.h.b16 %v1183
    %v1673 = vunpack.c.l.b16 %v1184
    %v1674 = vunpack.c.h.b16 %v1184
    %v1675 = vunpack.c.l.b16 %v1185
    %v1676 = vunpack.c.h.b16 %v1185
    %v1677 = vunpack.c.l.b16 %v1186
    %v1678 = vunpack.c.h.b16 %v1186
    %v1679 = vunpack.c.l.b16 %v1187
    %v1680 = vunpack.c.h.b16 %v1187
    %v1681 = vunpack.c.l.b16 %v1188
    %v1682 = vunpack.c.h.b16 %v1188
    %v1683 = vunpack.c.l.b16 %v1189
    %v1684 = vunpack.c.h.b16 %v1189
    %v1685 = vunpack.c.l.b16 %v1190
    %v1686 = vunpack.c.h.b16 %v1190
    %v1687 = vunpack.c.l.b16 %v1191
    %v1688 = vunpack.c.h.b16 %v1191
    %v1689 = vunpack.c.l.b16 %v1192
    %v1690 = vunpack.c.h.b16 %v1192
    %v1691 = vunpack.c.l.b16 %v1193
    %v1692 = vunpack.c.h.b16 %v1193
    %v1693 = vunpack.c.l.b16 %v1194
    %v1694 = vunpack.c.h.b16 %v1194
    %v1695 = vunpack.c.l.b16 %v1195
    %v1696 = vunpack.c.h.b16 %v1195
    %v1697 = vunpack.c.l.b16 %v1196
    %v1698 = vunpack.c.h.b16 %v1196
    %v1699 = vunpack.c.l.b16 %v1197
    %v1700 = vunpack.c.h.b16 %v1197
    %v1701 = vunpack.c.l.b16 %v1198
    %v1702 = vunpack.c.h.b16 %v1198
    %v1703 = vunpack.c.l.b16 %v1199
    %v1704 = vunpack.c.h.b16 %v1199
    %v1705 = vunpack.c.l.b16 %v1200
    %v1706 = vunpack.c.h.b16 %v1200
    %v1707 = vunpack.c.l.b16 %v1201
    %v1708 = vunpack.c.h.b16 %v1201
    %v1709 = vunpack.c.l.b16 %v1202
    %v1710 = vunpack.c.h.b16 %v1202
    %v1711 = vunpack.c.l.b16 %v1203
    %v1712 = vunpack.c.h.b16 %v1203
    %v1713 = vunpack.c.l.b16 %v1204
    %v1714 = vunpack.c.h.b16 %v1204
    %v1715 = vunpack.c.l.b16 %v1205
    %v1716 = vunpack.c.h.b16 %v1205
    %v1717 = vunpack.c.l.b16 %v1206
    %v1718 = vunpack.c.h.b16 %v1206
    %v1719 = vunpack.c.l.b16 %v1207
    %v1720 = vunpack.c.h.b16 %v1207
    %v1721 = vunpack.c.l.b16 %v1208
    %v1722 = vunpack.c.h.b16 %v1208
    %v1723 = vunpack.c.l.b16 %v1209
    %v1724 = vunpack.c.h.b16 %v1209
    %v1725 = vunpack.c.l.b16 %v1210
    %v1726 = vunpack.c.h.b16 %v1210
    %v1727 = vunpack.c.l.b16 %v1211
    %v1728 = vunpack.c.h.b16 %v1211
    %v1729 = vunpack.c.l.b16 %v1212
    %v1730 = vunpack.c.h.b16 %v1212
    %v1731 = vunpack.c.l.b16 %v1213
    %v1732 = vunpack.c.h.b16 %v1213
    %v1733 = vunpack.c.l.b16 %v1214
    %v1734 = vunpack.c.h.b16 %v1214
    %v1735 = vunpack.c.l.b16 %v1215
    %v1736 = vunpack.c.h.b16 %v1215
    %v1737 = vunpack.c.l.b16 %v1216
    %v1738 = vunpack.c.h.b16 %v1216
    %v1739 = vunpack.c.l.b16 %v1217
    %v1740 = vunpack.c.h.b16 %v1217
    %v1741 = vunpack.c.l.b16 %v1218
    %v1742 = vunpack.c.h.b16 %v1218
    %v1743 = vunpack.c.l.b16 %v1219
    %v1744 = vunpack.c.h.b16 %v1219
    %v1745 = vunpack.c.l.b16 %v1220
    %v1746 = vunpack.c.h.b16 %v1220
    %v1747 = vunpack.c.l.b16 %v1221
    %v1748 = vunpack.c.h.b16 %v1221
    %v1749 = vunpack.c.l.b16 %v1222
    %v1750 = vunpack.c.h.b16 %v1222
    %v1751 = vunpack.c.l.b16 %v1223
    %v1752 = vunpack.c.h.b16 %v1223
    %v1753 = vunpack.c.l.b16 %v1224
    %v1754 = vunpack.c.h.b16 %v1224
    %v1755 = vunpack.c.l.b16 %v1225
    %v1756 = vunpack.c.h.b16 %v1225
    %v1757 = vunpack.c.l.b16 %v1226
    %v1758 = vunpack.c.h.b16 %v1226
    %v1759 = vunpack.c.l.b16 %v1227
    %v1760 = vunpack.c.h.b16 %v1227
    %v1761 = vunpack.c.l.b16 %v1228
    %v1762 = vunpack.c.h.b16 %v1228
    %v1763 = vunpack.c.l.b16 %v1229
    %v1764 = vunpack.c.h.b16 %v1229
    %v1765 = vunpack.c.l.b16 %v1230
    %v1766 = vunpack.c.h.b16 %v1230
    %v1767 = vunpack.c.l.b16 %v1231
    %v1768 = vunpack.c.h.b16 %v1231
    %v1769 = vunpack.c.l.b16 %v1232
    %v1770 = vunpack.c.h.b16 %v1232
    %v1771 = vunpack.c.l.b16 %v1233
    %v1772 = vunpack.c.h.b16 %v1233
    %v1773 = vunpack.c.l.b16 %v1234
    %v1774 = vunpack.c.h.b16 %v1234
    %v1775 = vunpack.c.l.b16 %v1235
    %v1776 = vunpack.c.h.b16 %v1235
    %v1777 = vunpack.c.l.b16 %v1236
    %v1778 = vunpack.c.h.b16 %v1236
    %v1779 = vunpack.c.l.b16 %v1237
    %v1780 = vunpack.c.h.b16 %v1237
    %v1781 = vunpack.c.l.b16 %v1238
    %v1782 = vunpack.c.h.b16 %v1238
    %v1783 = vunpack.c.l.b16 %v1239
    %v1784 = vunpack.c.h.b16 %v1239
    %v1785 = vunpack.c.l.b16 %v1240
    %v1786 = vunpack.c.h.b16 %v1240
    %v1787 = vunpack.c.l.b16 %v1241
    %v1788 = vunpack.c.h.b16 %v1241
    %v1789 = vunpack.c.l.b16 %v1242
    %v1790 = vunpack.c.h.b16 %v1242
    %v1791 = vunpack.c.l.b16 %v1243
    %v1792 = vunpack.c.h.b16 %v1243
    %v1793 = vunpack.c.l.b16 %v1244
    %v1794 = vunpack.c.h.b16 %v1244
    %v1795 = vunpack.c.l.b16 %v1245
    %v1796 = vunpack.c.h.b16 %v1245
    %v1797 = vunpack.c.l.b16 %v1246
    %v1798 = vunpack.c.h.b16 %v1246
    %v1799 = vunpack.c.l.b16 %v1247
    %v1800 = vunpack.c.h.b16 %v1247
    %v1801 = vunpack.c.l.b16 %v1248
    %v1802 = vunpack.c.h.b16 %v1248
    %v1803 = vunpack.c.l.b16 %v1249
    %v1804 = vunpack.c.h.b16 %v1249
    %v1805 = vunpack.c.l.b16 %v1250
    %v1806 = vunpack.c.h.b16 %v1250
    %v1807 = vunpack.c.l.b16 %v1251
    %v1808 = vunpack.c.h.b16 %v1251
    %v1809 = vunpack.c.l.b16 %v1252
    %v1810 = vunpack.c.h.b16 %v1252
    %v1811 = vunpack.c.l.b16 %v1253
    %v1812 = vunpack.c.h.b16 %v1253
    %v1813 = vunpack.c.l.b16 %v1254
    %v1814 = vunpack.c.h.b16 %v1254
    %v1815 = vunpack.c.l.b16 %v1255
    %v1816 = vunpack.c.h.b16 %v1255
    %v1817 = vunpack.c.l.b16 %v1256
    %v1818 = vunpack.c.h.b16 %v1256
    %v1819 = vunpack.c.l.b16 %v1257
    %v1820 = vunpack.c.h.b16 %v1257
    %v1821 = vunpack.c.l.b16 %v1258
    %v1822 = vunpack.c.h.b16 %v1258
    %v1823 = vunpack.c.l.b16 %v1259
    %v1824 = vunpack.c.h.b16 %v1259
    %v1825 = vunpack.c.l.b16 %v1260
    %v1826 = vunpack.c.h.b16 %v1260
    %v1827 = vunpack.c.l.b16 %v1261
    %v1828 = vunpack.c.h.b16 %v1261
    %v1829 = vunpack.c.l.b16 %v1262
    %v1830 = vunpack.c.h.b16 %v1262
    %v1831 = vunpack.c.l.b16 %v1263
    %v1832 = vunpack.c.h.b16 %v1263
    %v1833 = vunpack.c.l.b16 %v1264
    %v1834 = vunpack.c.h.b16 %v1264
    %v1835 = vunpack.c.l.b16 %v1265
    %v1836 = vunpack.c.h.b16 %v1265
    %v1837 = vunpack.c.l.b16 %v1266
    %v1838 = vunpack.c.h.b16 %v1266
    %v1839 = vunpack.c.l.b16 %v1267
    %v1840 = vunpack.c.h.b16 %v1267
    %v1841 = vunpack.c.l.b16 %v1268
    %v1842 = vunpack.c.h.b16 %v1268
    %v1843 = vpack.c.b16 %v1647, %v1643
    %v1844 = vpack.c.b16 %v1648, %v1644
    %v1845 = vpack.c.b16 %v1649, %v1645
    %v1846 = vpack.c.b16 %v1650, %v1646
    %v1847 = vpack.c.b16 %v1655, %v1651
    %v1848 = vpack.c.b16 %v1656, %v1652
    %v1849 = vpack.c.b16 %v1657, %v1653
    %v1850 = vpack.c.b16 %v1658, %v1654
    %v1851 = vpack.c.b16 %v1663, %v1659
    %v1852 = vpack.c.b16 %v1664, %v1660
    %v1853 = vpack.c.b16 %v1665, %v1661
    %v1854 = vpack.c.b16 %v1666, %v1662
    %v1855 = vpack.c.b16 %v1671, %v1667
    %v1856 = vpack.c.b16 %v1672, %v1668
    %v1857 = vpack.c.b16 %v1673, %v1669
    %v1858 = vpack.c.b16 %v1674, %v1670
    %v1859 = vpack.c.b16 %v1679, %v1675
    %v1860 = vpack.c.b16 %v1680, %v1676
    %v1861 = vpack.c.b16 %v1681, %v1677
    %v1862 = vpack.c.b16 %v1682, %v1678
    %v1863 = vpack.c.b16 %v1687, %v1683
    %v1864 = vpack.c.b16 %v1688, %v1684
    %v1865 = vpack.c.b16 %v1689, %v1685
    %v1866 = vpack.c.b16 %v1690, %v1686
    %v1867 = vpack.c.b16 %v1695, %v1691
    %v1868 = vpack.c.b16 %v1696, %v1692
    %v1869 = vpack.c.b16 %v1697, %v1693
    %v1870 = vpack.c.b16 %v1698, %v1694
    %v1871 = vpack.c.b16 %v1703, %v1699
    %v1872 = vpack.c.b16 %v1704, %v1700
    %v1873 = vpack.c.b16 %v1705, %v1701
    %v1874 = vpack.c.b16 %v1706, %v1702
    %v1875 = vpack.c.b16 %v1711, %v1707
    %v1876 = vpack.c.b16 %v1712, %v1708
    %v1877 = vpack.c.b16 %v1713, %v1709
    %v1878 = vpack.c.b16 %v1714, %v1710
    %v1879 = vpack.c.b16 %v1719, %v1715
    %v1880 = vpack.c.b16 %v1720, %v1716
    %v1881 = vpack.c.b16 %v1721, %v1717
    %v1882 = vpack.c.b16 %v1722, %v1718
    %v1883 = vpack.c.b16 %v1727, %v1723
    %v1884 = vpack.c.b16 %v1728, %v1724
    %v1885 = vpack.c.b16 %v1729, %v1725
    %v1886 = vpack.c.b16 %v1730, %v1726
    %v1887 = vpack.c.b16 %v1735, %v1731
    %v1888 = vpack.c.b16 %v1736, %v1732
    %v1889 = vpack.c.b16 %v1737, %v1733
    %v1890 = vpack.c.b16 %v1738, %v1734
    %v1891 = vpack.c.b16 %v1743, %v1739
    %v1892 = vpack.c.b16 %v1744, %v1740
    %v1893 = vpack.c.b16 %v1745, %v1741
    %v1894 = vpack.c.b16 %v1746, %v1742
    %v1895 = vpack.c.b16 %v1751, %v1747
    %v1896 = vpack.c.b16 %v1752, %v1748
    %v1897 = vpack.c.b16 %v1753, %v1749
    %v1898 = vpack.c.b16 %v1754, %v1750
    %v1899 = vpack.c.b16 %v1759, %v1755
    %v1900 = vpack.c.b16 %v1760, %v1756
    %v1901 = vpack.c.b16 %v1761, %v1757
    %v1902 = vpack.c.b16 %v1762, %v1758
    %v1903 = vpack.c.b16 %v1767, %v1763
    %v1904 = vpack.c.b16 %v1768, %v1764
    %v1905 = vpack.c.b16 %v1769, %v1765
    %v1906 = vpack.c.b16 %v1770, %v1766
    %v1907 = vpack.c.b16 %v1775, %v1771
    %v1908 = vpack.c.b16 %v1776, %v1772
    %v1909 = vpack.c.b16 %v1777, %v1773
    %v1910 = vpack.c.b16 %v1778, %v1774
    %v1911 = vpack.c.b16 %v1783, %v1779
    %v1912 = vpack.c.b16 %v1784, %v1780
    %v1913 = vpack.c.b16 %v1785, %v1781
    %v1914 = vpack.c.b16 %v1786, %v1782
    %v1915 = vpack.c.b16 %v1791, %v1787
    %v1916 = vpack.c.b16 %v1792, %v1788
    %v1917 = vpack.c.b16 %v1793, %v1789
    %v1918 = vpack.c.b16 %v1794, %v1790
    %v1919 = vpack.c.b16 %v1799, %v1795
    %v1920 = vpack.c.b16 %v1800, %v1796
    %v1921 = vpack.c.b16 %v1801, %v1797
    %v1922 = vpack.c.b16 %v1802, %v1798
    %v1923 = vpack.c.b16 %v1807, %v1803
    %v1924 = vpack.c.b16 %v1808, %v1804
    %v1925 = vpack.c.b16 %v1809, %v1805
    %v1926 = vpack.c.b16 %v1810, %v1806
    %v1927 = vpack.c.b16 %v1815, %v1811
    %v1928 = vpack.c.b16 %v1816, %v1812
    %v1929 = vpack.c.b16 %v1817, %v1813
    %v1930 = vpack.c.b16 %v1818, %v1814
    %v1931 = vpack.c.b16 %v1823, %v1819
    %v1932 = vpack.c.b16 %v1824, %v1820
    %v1933 = vpack.c.b16 %v1825, %v1821
    %v1934 = vpack.c.b16 %v1826, %v1822
    %v1935 = vpack.c.b16 %v1831, %v1827
    %v1936 = vpack.c.b16 %v1832, %v1828
    %v1937 = vpack.c.b16 %v1833, %v1829
    %v1938 = vpack.c.b16 %v1834, %v1830
    %v1939 = vpack.c.b16 %v1839, %v1835
    %v1940 = vpack.c.b16 %v1840, %v1836
    %v1941 = vpack.c.b16 %v1841, %v1837
    %v1942 = vpack.c.b16 %v1842, %v1838
    %v2044 = vsel %vm709, %v1167, 0
    %2046 = vmatprep.subr.bf16.mxu0 %v1872
    %2047 = vmatpush1.bf16.msra.mxu0 %v1871
    %2048 = vmatprep.subr.bf16.mxu0 %v1868
    %2049 = vmatpush1.bf16.msra.mxu0 %v1867
    %2050 = vmatprep.subr.bf16.mxu0 %v1864
    %2051 = vmatpush1.bf16.msra.mxu0 %v1863
    %2052 = vmatprep.subr.bf16.mxu0 %v1860
    %2053 = vmatpush1.bf16.msra.mxu0 %v1859
    %2054 = vmatprep.subr.bf16.mxu0 %v1856
    %2055 = vmatpush1.bf16.msra.mxu0 %v1855
    %2056 = vmatprep.subr.bf16.mxu0 %v1852
    %2057 = vmatpush1.bf16.msra.mxu0 %v1851
    %2058 = vmatprep.subr.bf16.mxu0 %v1848
    %2059 = vmatpush1.bf16.msra.mxu0 %v1847
    %2060 = vmatprep.subr.bf16.mxu0 %v1844
    %2061 = vmatpush1.bf16.msra.mxu0 %v1843
    %2062 = vmatprep.subr.bf16.mxu0 %v1904
    %2063 = vmatpush2.bf16.msra.mxu0 %v1903
    %2064 = vmatprep.subr.bf16.mxu0 %v1900
    %2065 = vmatpush2.bf16.msra.mxu0 %v1899
    %2066 = vmatprep.subr.bf16.mxu0 %v1896
    %2067 = vmatpush2.bf16.msra.mxu0 %v1895
    %2068 = vmatprep.subr.bf16.mxu0 %v1892
    %2069 = vmatpush2.bf16.msra.mxu0 %v1891
    %2070 = vmatprep.subr.bf16.mxu0 %v1888
    %2071 = vmatpush2.bf16.msra.mxu0 %v1887
    %2072 = vmatprep.subr.bf16.mxu0 %v1884
    %2073 = vmatpush2.bf16.msra.mxu0 %v1883
    %2074 = vmatprep.subr.bf16.mxu0 %v1880
    %2075 = vmatpush2.bf16.msra.mxu0 %v1879
    %2076 = vmatprep.subr.bf16.mxu0 %v1876
    %2077 = vmatpush2.bf16.msra.mxu0 %v1875
    %2078 = vmatprep.mubr.bf16.mxu0 %v1165
    %2079 = vmatmul.mubr.bf16.gmra.mxu0 %v1164
    %v2080 = vpop.f32.mrf.mxu0
    %v2081 = vadd.f32 %v1496, %v2080
    %v2082 = vpop.f32.mrf.mxu0
    %v2083 = vadd.f32 %v1498, %v2082
    %v2084 = vpop.f32.mrf.mxu0
    %v2085 = vpop.f32.mrf.mxu0
    %2086 = vdwg.mxu0
    %2087 = vmatprep.subr.bf16.mxu0 %v1936
    %2088 = vmatpush1.bf16.msra.mxu0 %v1935
    %2089 = vmatprep.subr.bf16.mxu0 %v1932
    %2090 = vmatpush1.bf16.msra.mxu0 %v1931
    %2091 = vmatprep.subr.bf16.mxu0 %v1928
    %2092 = vmatpush1.bf16.msra.mxu0 %v1927
    %2093 = vmatprep.subr.bf16.mxu0 %v1924
    %2094 = vmatpush1.bf16.msra.mxu0 %v1923
    %2095 = vmatprep.subr.bf16.mxu0 %v1920
    %2096 = vmatpush1.bf16.msra.mxu0 %v1919
    %2097 = vmatprep.subr.bf16.mxu0 %v1916
    %2098 = vmatpush1.bf16.msra.mxu0 %v1915
    %2099 = vmatprep.subr.bf16.mxu0 %v1912
    %2100 = vmatpush1.bf16.msra.mxu0 %v1911
    %2101 = vmatprep.subr.bf16.mxu0 %v1908
    %2102 = vmatpush1.bf16.msra.mxu0 %v1907
    %2103 = vmatprep.subr.bf16.mxu0 0
    %2104 = vmatpush2.bf16.msra.mxu0 0
    %2105 = vmatprep.subr.bf16.mxu0 0
    %2106 = vmatpush2.bf16.msra.mxu0 0
    %2107 = vmatprep.subr.bf16.mxu0 0
    %2108 = vmatpush2.bf16.msra.mxu0 0
    %2109 = vmatprep.subr.bf16.mxu0 0
    %2110 = vmatpush2.bf16.msra.mxu0 0
    %2111 = vmatprep.subr.bf16.mxu0 0
    %2112 = vmatpush2.bf16.msra.mxu0 0
    %2113 = vmatprep.subr.bf16.mxu0 0
    %2114 = vmatpush2.bf16.msra.mxu0 0
    %2115 = vmatprep.subr.bf16.mxu0 0
    %2116 = vmatpush2.bf16.msra.mxu0 0
    %2117 = vmatprep.subr.bf16.mxu0 %v1940
    %2118 = vmatpush2.bf16.msra.mxu0 %v1939
    %2119 = vmatprep.mubr.bf16.mxu0 %v2044
    %2120 = vmatmul.mubr.bf16.gmra.mxu0 %v1166
    %v2121 = vpop.f32.mrf.mxu0
    %v2122 = vadd.f32 %v2081, %v2121
    %v2123 = vpop.f32.mrf.mxu0
    %v2124 = vadd.f32 %v2083, %v2123
    %v2125 = vpop.f32.mrf.mxu0
    %v2126 = vpop.f32.mrf.mxu0
    %2127 = vdwg.mxu0
    %2128 = vmatprep.subr.bf16.mxu0 %v1874
    %2129 = vmatpush1.bf16.msra.mxu0 %v1873
    %2130 = vmatprep.subr.bf16.mxu0 %v1870
    %2131 = vmatpush1.bf16.msra.mxu0 %v1869
    %2132 = vmatprep.subr.bf16.mxu0 %v1866
    %2133 = vmatpush1.bf16.msra.mxu0 %v1865
    %2134 = vmatprep.subr.bf16.mxu0 %v1862
    %2135 = vmatpush1.bf16.msra.mxu0 %v1861
    %2136 = vmatprep.subr.bf16.mxu0 %v1858
    %2137 = vmatpush1.bf16.msra.mxu0 %v1857
    %2138 = vmatprep.subr.bf16.mxu0 %v1854
    %2139 = vmatpush1.bf16.msra.mxu0 %v1853
    %2140 = vmatprep.subr.bf16.mxu0 %v1850
    %2141 = vmatpush1.bf16.msra.mxu0 %v1849
    %2142 = vmatprep.subr.bf16.mxu0 %v1846
    %2143 = vmatpush1.bf16.msra.mxu0 %v1845
    %2144 = vmatprep.subr.bf16.mxu0 %v1906
    %2145 = vmatpush2.bf16.msra.mxu0 %v1905
    %2146 = vmatprep.subr.bf16.mxu0 %v1902
    %2147 = vmatpush2.bf16.msra.mxu0 %v1901
    %2148 = vmatprep.subr.bf16.mxu0 %v1898
    %2149 = vmatpush2.bf16.msra.mxu0 %v1897
    %2150 = vmatprep.subr.bf16.mxu0 %v1894
    %2151 = vmatpush2.bf16.msra.mxu0 %v1893
    %2152 = vmatprep.subr.bf16.mxu0 %v1890
    %2153 = vmatpush2.bf16.msra.mxu0 %v1889
    %2154 = vmatprep.subr.bf16.mxu0 %v1886
    %2155 = vmatpush2.bf16.msra.mxu0 %v1885
    %2156 = vmatprep.subr.bf16.mxu0 %v1882
    %2157 = vmatpush2.bf16.msra.mxu0 %v1881
    %2158 = vmatprep.subr.bf16.mxu0 %v1878
    %2159 = vmatpush2.bf16.msra.mxu0 %v1877
    %2160 = vmatprep.mubr.bf16.mxu0 %v1165
    %2161 = vmatmul.mubr.bf16.gmra.mxu0 %v1164
    %v2162 = vpop.f32.mrf.mxu0
    %v2163 = vadd.f32 %v1537, %v2162
    %v2164 = vpop.f32.mrf.mxu0
    %v2165 = vadd.f32 %v1539, %v2164
    %v2166 = vpop.f32.mrf.mxu0
    %v2167 = vpop.f32.mrf.mxu0
    %2168 = vdwg.mxu0
    %2169 = vmatprep.subr.bf16.mxu0 %v1938
    %2170 = vmatpush1.bf16.msra.mxu0 %v1937
    %2171 = vmatprep.subr.bf16.mxu0 %v1934
    %2172 = vmatpush1.bf16.msra.mxu0 %v1933
    %2173 = vmatprep.subr.bf16.mxu0 %v1930
    %2174 = vmatpush1.bf16.msra.mxu0 %v1929
    %2175 = vmatprep.subr.bf16.mxu0 %v1926
    %2176 = vmatpush1.bf16.msra.mxu0 %v1925
    %2177 = vmatprep.subr.bf16.mxu0 %v1922
    %2178 = vmatpush1.bf16.msra.mxu0 %v1921
    %2179 = vmatprep.subr.bf16.mxu0 %v1918
    %2180 = vmatpush1.bf16.msra.mxu0 %v1917
    %2181 = vmatprep.subr.bf16.mxu0 %v1914
    %2182 = vmatpush1.bf16.msra.mxu0 %v1913
    %2183 = vmatprep.subr.bf16.mxu0 %v1910
    %2184 = vmatpush1.bf16.msra.mxu0 %v1909
    %2185 = vmatprep.subr.bf16.mxu0 0
    %2186 = vmatpush2.bf16.msra.mxu0 0
    %2187 = vmatprep.subr.bf16.mxu0 0
    %2188 = vmatpush2.bf16.msra.mxu0 0
    %2189 = vmatprep.subr.bf16.mxu0 0
    %2190 = vmatpush2.bf16.msra.mxu0 0
    %2191 = vmatprep.subr.bf16.mxu0 0
    %2192 = vmatpush2.bf16.msra.mxu0 0
    %2193 = vmatprep.subr.bf16.mxu0 0
    %2194 = vmatpush2.bf16.msra.mxu0 0
    %2195 = vmatprep.subr.bf16.mxu0 0
    %2196 = vmatpush2.bf16.msra.mxu0 0
    %2197 = vmatprep.subr.bf16.mxu0 0
    %2198 = vmatpush2.bf16.msra.mxu0 0
    %2199 = vmatprep.subr.bf16.mxu0 %v1942
    %2200 = vmatpush2.bf16.msra.mxu0 %v1941
    %2201 = vmatprep.mubr.bf16.mxu0 %v2044
    %2202 = vmatmul.mubr.bf16.gmra.mxu0 %v1166
    %v2203 = vpop.f32.mrf.mxu0
    %v2204 = vadd.f32 %v2163, %v2203
    %v2205 = vpop.f32.mrf.mxu0
    %v2206 = vadd.f32 %v2165, %v2205
    %v2207 = vpop.f32.mrf.mxu0
    %v2208 = vpop.f32.mrf.mxu0
    %2209 = vdwg.mxu0
    %v2210 = vld [vmem:[%s7 + $0x5] sm:$0xf]
    %v2212 = vlaneseq
    %v2213 = vshrl.u32 %v2212, 7
    %v2214 = vsub.s32 0, %v2213
    %v2215 = vrot.slane %v2210, %v2214
    %v2216 = vlaneseq
    %v2217 = vshrl.u32 %v2216, 7
    %v2218 = vsub.s32 1, %v2217
    %v2219 = vrot.slane %v2210, %v2218
    %v2220 = vlaneseq
    %v2221 = vshrl.u32 %v2220, 7
    %v2222 = vsub.s32 2, %v2221
    %v2223 = vrot.slane %v2210, %v2222
    %v2224 = vlaneseq
    %v2225 = vshrl.u32 %v2224, 7
    %v2226 = vsub.s32 3, %v2225
    %v2227 = vrot.slane %v2210, %v2226
    %v2232 = vadd.f32 %v2122, %v2215
    %v2233 = vadd.f32 %v2124, %v2219
    %v2234 = vadd.f32 %v2204, %v2223
    %v2235 = vadd.f32 %v2206, %v2227
    %v2236 = vld [vmem:[%s5] sm:$0xff]
    %v2237 = vld [vmem:[%s5 + $0x8] sm:$0xff]
    %v2238 = vld [vmem:[%s5 + $0x10] sm:$0xff]
    %v2239 = vld [vmem:[%s5 + $0x18] sm:$0xff]
    %v2240 = vld [vmem:[%s5 + $0x20] sm:$0xff]
    %v2241 = vld [vmem:[%s5 + $0x28] sm:$0xff]
    %v2242 = vld [vmem:[%s5 + $0x30] sm:$0xff]
    %v2243 = vld [vmem:[%s5 + $0x38] sm:$0xff]
    %v2244 = vld [vmem:[%s5 + $0x40] sm:$0xff]
    %v2245 = vld [vmem:[%s5 + $0x48] sm:$0xff]
    %v2246 = vld [vmem:[%s5 + $0x50] sm:$0xff]
    %v2247 = vld [vmem:[%s5 + $0x58] sm:$0xff]
    %v2248 = vld [vmem:[%s5 + $0x60] sm:$0xff]
    %v2249 = vld [vmem:[%s5 + $0x68] sm:$0xff]
    %v2250 = vld [vmem:[%s5 + $0x70] sm:$0xff]
    %v2251 = vld [vmem:[%s5 + $0x78] sm:$0xff]
    %v2252 = vld [vmem:[%s7 + $0x9] sm:$0x3]
    %v2254 = vlaneseq
    %v2255 = vshrl.u32 %v2254, 7
    %v2256 = vsub.s32 0, %v2255
    %v2257 = vrot.slane %v2252, %v2256
    %v2258 = vlaneseq
    %v2259 = vshrl.u32 %v2258, 7
    %v2260 = vsub.s32 1, %v2259
    %v2261 = vrot.slane %v2252, %v2260
    %v2280 = vunpack.c.l.b16 %v2236
    %v2281 = vunpack.c.h.b16 %v2236
    %v2282 = vunpack.c.l.b16 %v2237
    %v2283 = vunpack.c.h.b16 %v2237
    %v2284 = vunpack.c.l.b16 %v2238
    %v2285 = vunpack.c.h.b16 %v2238
    %v2286 = vunpack.c.l.b16 %v2239
    %v2287 = vunpack.c.h.b16 %v2239
    %v2288 = vunpack.c.l.b16 %v2240
    %v2289 = vunpack.c.h.b16 %v2240
    %v2290 = vunpack.c.l.b16 %v2241
    %v2291 = vunpack.c.h.b16 %v2241
    %v2292 = vunpack.c.l.b16 %v2242
    %v2293 = vunpack.c.h.b16 %v2242
    %v2294 = vunpack.c.l.b16 %v2243
    %v2295 = vunpack.c.h.b16 %v2243
    %v2296 = vunpack.c.l.b16 %v2244
    %v2297 = vunpack.c.h.b16 %v2244
    %v2298 = vunpack.c.l.b16 %v2245
    %v2299 = vunpack.c.h.b16 %v2245
    %v2300 = vunpack.c.l.b16 %v2246
    %v2301 = vunpack.c.h.b16 %v2246
    %v2302 = vunpack.c.l.b16 %v2247
    %v2303 = vunpack.c.h.b16 %v2247
    %v2304 = vunpack.c.l.b16 %v2248
    %v2305 = vunpack.c.h.b16 %v2248
    %v2306 = vunpack.c.l.b16 %v2249
    %v2307 = vunpack.c.h.b16 %v2249
    %v2308 = vunpack.c.l.b16 %v2250
    %v2309 = vunpack.c.h.b16 %v2250
    %v2310 = vunpack.c.l.b16 %v2251
    %v2311 = vunpack.c.h.b16 %v2251
    %v2312 = vpack.c.b16 %v2282, %v2280
    %v2313 = vpack.c.b16 %v2283, %v2281
    %v2314 = vpack.c.b16 %v2286, %v2284
    %v2315 = vpack.c.b16 %v2287, %v2285
    %v2316 = vpack.c.b16 %v2290, %v2288
    %v2317 = vpack.c.b16 %v2291, %v2289
    %v2318 = vpack.c.b16 %v2294, %v2292
    %v2319 = vpack.c.b16 %v2295, %v2293
    %v2320 = vpack.c.b16 %v2298, %v2296
    %v2321 = vpack.c.b16 %v2299, %v2297
    %v2322 = vpack.c.b16 %v2302, %v2300
    %v2323 = vpack.c.b16 %v2303, %v2301
    %v2324 = vpack.c.b16 %v2306, %v2304
    %v2325 = vpack.c.b16 %v2307, %v2305
    %v2326 = vpack.c.b16 %v2310, %v2308
    %v2327 = vpack.c.b16 %v2311, %v2309
    %2344 = vmatprep.subr.bf16.mxu0 %v2327
    %2345 = vmatpush1.bf16.msra.mxu0 %v2326
    %2346 = vmatprep.subr.bf16.mxu0 %v2325
    %2347 = vmatpush1.bf16.msra.mxu0 %v2324
    %2348 = vmatprep.subr.bf16.mxu0 %v2323
    %2349 = vmatpush1.bf16.msra.mxu0 %v2322
    %2350 = vmatprep.subr.bf16.mxu0 %v2321
    %2351 = vmatpush1.bf16.msra.mxu0 %v2320
    %2352 = vmatprep.subr.bf16.mxu0 %v2319
    %2353 = vmatpush1.bf16.msra.mxu0 %v2318
    %2354 = vmatprep.subr.bf16.mxu0 %v2317
    %2355 = vmatpush1.bf16.msra.mxu0 %v2316
    %2356 = vmatprep.subr.bf16.mxu0 %v2315
    %2357 = vmatpush1.bf16.msra.mxu0 %v2314
    %2358 = vmatprep.subr.bf16.mxu0 %v2313
    %2359 = vmatpush1.bf16.msra.mxu0 %v2312
    %2360 = vmatprep.subr.bf16.mxu0 0
    %2361 = vmatpush2.bf16.msra.mxu0 0
    %2362 = vmatprep.subr.bf16.mxu0 0
    %2363 = vmatpush2.bf16.msra.mxu0 0
    %2364 = vmatprep.subr.bf16.mxu0 0
    %2365 = vmatpush2.bf16.msra.mxu0 0
    %2366 = vmatprep.subr.bf16.mxu0 0
    %2367 = vmatpush2.bf16.msra.mxu0 0
    %2368 = vmatprep.subr.bf16.mxu0 0
    %2369 = vmatpush2.bf16.msra.mxu0 0
    %2370 = vmatprep.subr.bf16.mxu0 0
    %2371 = vmatpush2.bf16.msra.mxu0 0
    %2372 = vmatprep.subr.bf16.mxu0 0
    %2373 = vmatpush2.bf16.msra.mxu0 0
    %2374 = vmatprep.subr.bf16.mxu0 0
    %2375 = vmatpush2.bf16.msra.mxu0 0
    %2376 = vmatprep.mubr.bf16.mxu0 0
    %2377 = vmatmul.mubr.bf16.gmra.mxu0 %v1168
    %v2378 = vpop.f32.mrf.mxu0
    %v2379 = vadd.f32 %v2257, %v2378
    %v2380 = vpop.f32.mrf.mxu0
    %v2381 = vadd.f32 %v2261, %v2380
    %v2382 = vpop.f32.mrf.mxu0
    %v2383 = vpop.f32.mrf.mxu0
    %2384 = vdwg.mxu0
    %v2385 = vld [vmem:[#allocation7] sm:$0xff]
    %v2386 = vld [vmem:[#allocation7 + $0x8] sm:$0xff]
    %v2387 = vld [vmem:[#allocation7 + $0x10] sm:$0xff]
    %v2388 = vld [vmem:[#allocation7 + $0x18] sm:$0xf]
    %v2389 = vld [vmem:[#allocation7 + $0x1c] sm:$0xff]
    %v2390 = vld [vmem:[#allocation7 + $0x24] sm:$0xff]
    %v2391 = vld [vmem:[#allocation7 + $0x2c] sm:$0xff]
    %v2392 = vld [vmem:[#allocation7 + $0x34] sm:$0xf]
    %v2393 = vld [vmem:[#allocation7 + $0x38] sm:$0xff]
    %v2394 = vld [vmem:[#allocation7 + $0x40] sm:$0xff]
    %v2395 = vld [vmem:[#allocation7 + $0x48] sm:$0xff]
    %v2396 = vld [vmem:[#allocation7 + $0x50] sm:$0xf]
    %v2397 = vld [vmem:[#allocation7 + $0x54] sm:$0xff]
    %v2398 = vld [vmem:[#allocation7 + $0x5c] sm:$0xff]
    %v2399 = vld [vmem:[#allocation7 + $0x64] sm:$0xff]
    %v2400 = vld [vmem:[#allocation7 + $0x6c] sm:$0xf]
    %v2401 = vld [vmem:[#allocation7 + $0x70] sm:$0xff]
    %v2402 = vld [vmem:[#allocation7 + $0x78] sm:$0xff]
    %v2403 = vld [vmem:[#allocation7 + $0x80] sm:$0xff]
    %v2404 = vld [vmem:[#allocation7 + $0x88] sm:$0xf]
    %v2405 = vld [vmem:[#allocation7 + $0x8c] sm:$0xff]
    %v2406 = vld [vmem:[#allocation7 + $0x94] sm:$0xff]
    %v2407 = vld [vmem:[#allocation7 + $0x9c] sm:$0xff]
    %v2408 = vld [vmem:[#allocation7 + $0xa4] sm:$0xf]
    %v2409 = vld [vmem:[#allocation7 + $0xa8] sm:$0xff]
    %v2410 = vld [vmem:[#allocation7 + $0xb0] sm:$0xff]
    %v2411 = vld [vmem:[#allocation7 + $0xb8] sm:$0xff]
    %v2412 = vld [vmem:[#allocation7 + $0xc0] sm:$0xf]
    %v2413 = vld [vmem:[#allocation7 + $0xc4] sm:$0xff]
    %v2414 = vld [vmem:[#allocation7 + $0xcc] sm:$0xff]
    %v2415 = vld [vmem:[#allocation7 + $0xd4] sm:$0xff]
    %v2416 = vld [vmem:[#allocation7 + $0xdc] sm:$0xf]
    %v2417 = vld [vmem:[#allocation7 + $0xe0] sm:$0xff]
    %v2418 = vld [vmem:[#allocation7 + $0xe8] sm:$0xff]
    %v2419 = vld [vmem:[#allocation7 + $0xf0] sm:$0xff]
    %v2420 = vld [vmem:[#allocation7 + $0xf8] sm:$0xf]
    %v2421 = vld [vmem:[#allocation7 + $0xfc] sm:$0xff]
    %v2422 = vld [vmem:[#allocation7 + $0x104] sm:$0xff]
    %v2423 = vld [vmem:[#allocation7 + $0x10c] sm:$0xff]
    %v2424 = vld [vmem:[#allocation7 + $0x114] sm:$0xf]
    %v2425 = vld [vmem:[#allocation7 + $0x118] sm:$0xff]
    %v2426 = vld [vmem:[#allocation7 + $0x120] sm:$0xff]
    %v2427 = vld [vmem:[#allocation7 + $0x128] sm:$0xff]
    %v2428 = vld [vmem:[#allocation7 + $0x130] sm:$0xf]
    %v2429 = vld [vmem:[#allocation7 + $0x134] sm:$0xff]
    %v2430 = vld [vmem:[#allocation7 + $0x13c] sm:$0xff]
    %v2431 = vld [vmem:[#allocation7 + $0x144] sm:$0xff]
    %v2432 = vld [vmem:[#allocation7 + $0x14c] sm:$0xf]
    %v2433 = vld [vmem:[#allocation7 + $0x150] sm:$0xff]
    %v2434 = vld [vmem:[#allocation7 + $0x158] sm:$0xff]
    %v2435 = vld [vmem:[#allocation7 + $0x160] sm:$0xff]
    %v2436 = vld [vmem:[#allocation7 + $0x168] sm:$0xf]
    %v2437 = vld [vmem:[#allocation7 + $0x16c] sm:$0xff]
    %v2438 = vld [vmem:[#allocation7 + $0x174] sm:$0xff]
    %v2439 = vld [vmem:[#allocation7 + $0x17c] sm:$0xff]
    %v2440 = vld [vmem:[#allocation7 + $0x184] sm:$0xf]
    %v2441 = vld [vmem:[#allocation7 + $0x188] sm:$0xff]
    %v2442 = vld [vmem:[#allocation7 + $0x190] sm:$0xff]
    %v2443 = vld [vmem:[#allocation7 + $0x198] sm:$0xff]
    %v2444 = vld [vmem:[#allocation7 + $0x1a0] sm:$0xf]
    %v2445 = vld [vmem:[#allocation7 + $0x1a4] sm:$0xff]
    %v2446 = vld [vmem:[#allocation7 + $0x1ac] sm:$0xff]
    %v2447 = vld [vmem:[#allocation7 + $0x1b4] sm:$0xff]
    %v2448 = vld [vmem:[#allocation7 + $0x1bc] sm:$0xf]
    %v2449 = vld [vmem:[#allocation7 + $0x1c0] sm:$0xff]
    %v2450 = vld [vmem:[#allocation7 + $0x1c8] sm:$0xff]
    %v2451 = vld [vmem:[#allocation7 + $0x1d0] sm:$0xff]
    %v2452 = vld [vmem:[#allocation7 + $0x1d8] sm:$0xf]
    %v2453 = vld [vmem:[#allocation7 + $0x1dc] sm:$0xff]
    %v2454 = vld [vmem:[#allocation7 + $0x1e4] sm:$0xff]
    %v2455 = vld [vmem:[#allocation7 + $0x1ec] sm:$0xff]
    %v2456 = vld [vmem:[#allocation7 + $0x1f4] sm:$0xf]
    %v2457 = vld [vmem:[#allocation7 + $0x1f8] sm:$0xff]
    %v2458 = vld [vmem:[#allocation7 + $0x200] sm:$0xff]
    %v2459 = vld [vmem:[#allocation7 + $0x208] sm:$0xff]
    %v2460 = vld [vmem:[#allocation7 + $0x210] sm:$0xf]
    %v2461 = vld [vmem:[#allocation7 + $0x214] sm:$0xff]
    %v2462 = vld [vmem:[#allocation7 + $0x21c] sm:$0xff]
    %v2463 = vld [vmem:[#allocation7 + $0x224] sm:$0xff]
    %v2464 = vld [vmem:[#allocation7 + $0x22c] sm:$0xf]
    %v2465 = vld [vmem:[#allocation7 + $0x230] sm:$0xff]
    %v2466 = vld [vmem:[#allocation7 + $0x238] sm:$0xff]
    %v2467 = vld [vmem:[#allocation7 + $0x240] sm:$0xff]
    %v2468 = vld [vmem:[#allocation7 + $0x248] sm:$0xf]
    %v2469 = vld [vmem:[#allocation7 + $0x24c] sm:$0xff]
    %v2470 = vld [vmem:[#allocation7 + $0x254] sm:$0xff]
    %v2471 = vld [vmem:[#allocation7 + $0x25c] sm:$0xff]
    %v2472 = vld [vmem:[#allocation7 + $0x264] sm:$0xf]
    %v2473 = vld [vmem:[#allocation7 + $0x268] sm:$0xff]
    %v2474 = vld [vmem:[#allocation7 + $0x270] sm:$0xff]
    %v2475 = vld [vmem:[#allocation7 + $0x278] sm:$0xff]
    %v2476 = vld [vmem:[#allocation7 + $0x280] sm:$0xf]
    %v2477 = vld [vmem:[#allocation7 + $0x284] sm:$0xff]
    %v2478 = vld [vmem:[#allocation7 + $0x28c] sm:$0xff]
    %v2479 = vld [vmem:[#allocation7 + $0x294] sm:$0xff]
    %v2480 = vld [vmem:[#allocation7 + $0x29c] sm:$0xf]
    %v2481 = vld [vmem:[#allocation7 + $0x2a0] sm:$0xff]
    %v2482 = vld [vmem:[#allocation7 + $0x2a8] sm:$0xff]
    %v2483 = vld [vmem:[#allocation7 + $0x2b0] sm:$0xff]
    %v2484 = vld [vmem:[#allocation7 + $0x2b8] sm:$0xf]
    %v2485 = vld [vmem:[#allocation7 + $0x2bc] sm:$0xff]
    %v2486 = vld [vmem:[#allocation7 + $0x2c4] sm:$0xff]
    %v2487 = vld [vmem:[#allocation7 + $0x2cc] sm:$0xff]
    %v2488 = vld [vmem:[#allocation7 + $0x2d4] sm:$0xf]
    %v2489 = vld [vmem:[#allocation7 + $0x2d8] sm:$0xff]
    %v2490 = vld [vmem:[#allocation7 + $0x2e0] sm:$0xff]
    %v2491 = vld [vmem:[#allocation7 + $0x2e8] sm:$0xff]
    %v2492 = vld [vmem:[#allocation7 + $0x2f0] sm:$0xf]
    %v2493 = vld [vmem:[#allocation7 + $0x2f4] sm:$0xff]
    %v2494 = vld [vmem:[#allocation7 + $0x2fc] sm:$0xff]
    %v2495 = vld [vmem:[#allocation7 + $0x304] sm:$0xff]
    %v2496 = vld [vmem:[#allocation7 + $0x30c] sm:$0xf]
    %v2497 = vld [vmem:[#allocation7 + $0x310] sm:$0xff]
    %v2498 = vld [vmem:[#allocation7 + $0x318] sm:$0xff]
    %v2499 = vld [vmem:[#allocation7 + $0x320] sm:$0xff]
    %v2500 = vld [vmem:[#allocation7 + $0x328] sm:$0xf]
    %v2501 = vld [vmem:[#allocation7 + $0x32c] sm:$0xff]
    %v2502 = vld [vmem:[#allocation7 + $0x334] sm:$0xff]
    %v2503 = vld [vmem:[#allocation7 + $0x33c] sm:$0xff]
    %v2504 = vld [vmem:[#allocation7 + $0x344] sm:$0xf]
    %v2505 = vld [vmem:[#allocation7 + $0x348] sm:$0xff]
    %v2506 = vld [vmem:[#allocation7 + $0x350] sm:$0xff]
    %v2507 = vld [vmem:[#allocation7 + $0x358] sm:$0xff]
    %v2508 = vld [vmem:[#allocation7 + $0x360] sm:$0xf]
    %v2509 = vld [vmem:[#allocation7 + $0x364] sm:$0xff]
    %v2510 = vld [vmem:[#allocation7 + $0x36c] sm:$0xff]
    %v2511 = vld [vmem:[#allocation7 + $0x374] sm:$0xff]
    %v2512 = vld [vmem:[#allocation7 + $0x37c] sm:$0xf]
    %v2513 = vld [vmem:[#allocation7 + $0x380] sm:$0xff]
    %v2514 = vld [vmem:[#allocation7 + $0x388] sm:$0xff]
    %v2515 = vld [vmem:[#allocation7 + $0x390] sm:$0xff]
    %v2516 = vld [vmem:[#allocation7 + $0x398] sm:$0xf]
    %v2517 = vld [vmem:[#allocation7 + $0x39c] sm:$0xff]
    %v2518 = vld [vmem:[#allocation7 + $0x3a4] sm:$0xff]
    %v2519 = vld [vmem:[#allocation7 + $0x3ac] sm:$0xff]
    %v2520 = vld [vmem:[#allocation7 + $0x3b4] sm:$0xf]
    %v2521 = vld [vmem:[#allocation7 + $0x3b8] sm:$0xff]
    %v2522 = vld [vmem:[#allocation7 + $0x3c0] sm:$0xff]
    %v2523 = vld [vmem:[#allocation7 + $0x3c8] sm:$0xff]
    %v2524 = vld [vmem:[#allocation7 + $0x3d0] sm:$0xf]
    %v2525 = vld [vmem:[#allocation7 + $0x3d4] sm:$0xff]
    %v2526 = vld [vmem:[#allocation7 + $0x3dc] sm:$0xff]
    %v2527 = vld [vmem:[#allocation7 + $0x3e4] sm:$0xff]
    %v2528 = vld [vmem:[#allocation7 + $0x3ec] sm:$0xf]
    %v2529 = vld [vmem:[#allocation7 + $0x3f0] sm:$0xff]
    %v2530 = vld [vmem:[#allocation7 + $0x3f8] sm:$0xff]
    %v2531 = vld [vmem:[#allocation7 + $0x400] sm:$0xff]
    %v2532 = vld [vmem:[#allocation7 + $0x408] sm:$0xf]
    %v2533 = vld [vmem:[#allocation7 + $0x40c] sm:$0xff]
    %v2534 = vld [vmem:[#allocation7 + $0x414] sm:$0xff]
    %v2535 = vld [vmem:[#allocation7 + $0x41c] sm:$0xff]
    %v2536 = vld [vmem:[#allocation7 + $0x424] sm:$0xf]
    %v2537 = vld [vmem:[#allocation7 + $0x428] sm:$0xff]
    %v2538 = vld [vmem:[#allocation7 + $0x430] sm:$0xff]
    %v2539 = vld [vmem:[#allocation7 + $0x438] sm:$0xff]
    %v2540 = vld [vmem:[#allocation7 + $0x440] sm:$0xf]
    %v2541 = vld [vmem:[#allocation7 + $0x444] sm:$0xff]
    %v2542 = vld [vmem:[#allocation7 + $0x44c] sm:$0xff]
    %v2543 = vld [vmem:[#allocation7 + $0x454] sm:$0xff]
    %v2544 = vld [vmem:[#allocation7 + $0x45c] sm:$0xf]
    %v2545 = vld [vmem:[#allocation7 + $0x460] sm:$0xff]
    %v2546 = vld [vmem:[#allocation7 + $0x468] sm:$0xff]
    %v2547 = vld [vmem:[#allocation7 + $0x470] sm:$0xff]
    %v2548 = vld [vmem:[#allocation7 + $0x478] sm:$0xf]
    %v2549 = vld [vmem:[#allocation7 + $0x47c] sm:$0xff]
    %v2550 = vld [vmem:[#allocation7 + $0x484] sm:$0xff]
    %v2551 = vld [vmem:[#allocation7 + $0x48c] sm:$0xff]
    %v2552 = vld [vmem:[#allocation7 + $0x494] sm:$0xf]
    %v2553 = vld [vmem:[#allocation7 + $0x498] sm:$0xff]
    %v2554 = vld [vmem:[#allocation7 + $0x4a0] sm:$0xff]
    %v2555 = vld [vmem:[#allocation7 + $0x4a8] sm:$0xff]
    %v2556 = vld [vmem:[#allocation7 + $0x4b0] sm:$0xf]
    %v2557 = vld [vmem:[#allocation7 + $0x4b4] sm:$0xff]
    %v2558 = vld [vmem:[#allocation7 + $0x4bc] sm:$0xff]
    %v2559 = vld [vmem:[#allocation7 + $0x4c4] sm:$0xff]
    %v2560 = vld [vmem:[#allocation7 + $0x4cc] sm:$0xf]
    %v2561 = vld [vmem:[#allocation7 + $0x4d0] sm:$0xff]
    %v2562 = vld [vmem:[#allocation7 + $0x4d8] sm:$0xff]
    %v2563 = vld [vmem:[#allocation7 + $0x4e0] sm:$0xff]
    %v2564 = vld [vmem:[#allocation7 + $0x4e8] sm:$0xf]
    %v2565 = vld [vmem:[#allocation7 + $0x4ec] sm:$0xff]
    %v2566 = vld [vmem:[#allocation7 + $0x4f4] sm:$0xff]
    %v2567 = vld [vmem:[#allocation7 + $0x4fc] sm:$0xff]
    %v2568 = vld [vmem:[#allocation7 + $0x504] sm:$0xf]
    %v2569 = vld [vmem:[#allocation7 + $0x508] sm:$0xff]
    %v2570 = vld [vmem:[#allocation7 + $0x510] sm:$0xff]
    %v2571 = vld [vmem:[#allocation7 + $0x518] sm:$0xff]
    %v2572 = vld [vmem:[#allocation7 + $0x520] sm:$0xf]
    %v2573 = vld [vmem:[#allocation7 + $0x524] sm:$0xff]
    %v2574 = vld [vmem:[#allocation7 + $0x52c] sm:$0xff]
    %v2575 = vld [vmem:[#allocation7 + $0x534] sm:$0xff]
    %v2576 = vld [vmem:[#allocation7 + $0x53c] sm:$0xf]
    %v2577 = vld [vmem:[#allocation7 + $0x540] sm:$0xff]
    %v2578 = vld [vmem:[#allocation7 + $0x548] sm:$0xff]
    %v2579 = vld [vmem:[#allocation7 + $0x550] sm:$0xff]
    %v2580 = vld [vmem:[#allocation7 + $0x558] sm:$0xf]
    %v2581 = vld [vmem:[#allocation7 + $0x55c] sm:$0xff]
    %v2582 = vld [vmem:[#allocation7 + $0x564] sm:$0xff]
    %v2583 = vld [vmem:[#allocation7 + $0x56c] sm:$0xff]
    %v2584 = vld [vmem:[#allocation7 + $0x574] sm:$0xf]
    %v2585 = vld [vmem:[%s7 + $0xb] sm:$0x7f]
    %v2587 = vlaneseq
    %v2588 = vshrl.u32 %v2587, 7
    %v2589 = vsub.s32 0, %v2588
    %v2590 = vrot.slane %v2585, %v2589
    %v2591 = vlaneseq
    %v2592 = vshrl.u32 %v2591, 7
    %v2593 = vsub.s32 1, %v2592
    %v2594 = vrot.slane %v2585, %v2593
    %v2595 = vlaneseq
    %v2596 = vshrl.u32 %v2595, 7
    %v2597 = vsub.s32 2, %v2596
    %v2598 = vrot.slane %v2585, %v2597
    %v2599 = vlaneseq
    %v2600 = vshrl.u32 %v2599, 7
    %v2601 = vsub.s32 3, %v2600
    %v2602 = vrot.slane %v2585, %v2601
    %v2603 = vlaneseq
    %v2604 = vshrl.u32 %v2603, 7
    %v2605 = vsub.s32 4, %v2604
    %v2606 = vrot.slane %v2585, %v2605
    %v2607 = vlaneseq
    %v2608 = vshrl.u32 %v2607, 7
    %v2609 = vsub.s32 5, %v2608
    %v2610 = vrot.slane %v2585, %v2609
    %v2611 = vlaneseq
    %v2612 = vshrl.u32 %v2611, 7
    %v2613 = vsub.s32 6, %v2612
    %v2614 = vrot.slane %v2585, %v2613
    %v2822 = vunpack.c.l.b16 %v2385
    %v2823 = vunpack.c.h.b16 %v2385
    %v2824 = vunpack.c.l.b16 %v2386
    %v2825 = vunpack.c.h.b16 %v2386
    %v2826 = vunpack.c.l.b16 %v2387
    %v2827 = vunpack.c.h.b16 %v2387
    %v2828 = vunpack.c.l.b16 %v2388
    %v2829 = vunpack.c.l.b16 %v2389
    %v2830 = vunpack.c.h.b16 %v2389
    %v2831 = vunpack.c.l.b16 %v2390
    %v2832 = vunpack.c.h.b16 %v2390
    %v2833 = vunpack.c.l.b16 %v2391
    %v2834 = vunpack.c.h.b16 %v2391
    %v2835 = vunpack.c.l.b16 %v2392
    %v2836 = vunpack.c.l.b16 %v2393
    %v2837 = vunpack.c.h.b16 %v2393
    %v2838 = vunpack.c.l.b16 %v2394
    %v2839 = vunpack.c.h.b16 %v2394
    %v2840 = vunpack.c.l.b16 %v2395
    %v2841 = vunpack.c.h.b16 %v2395
    %v2842 = vunpack.c.l.b16 %v2396
    %v2843 = vunpack.c.l.b16 %v2397
    %v2844 = vunpack.c.h.b16 %v2397
    %v2845 = vunpack.c.l.b16 %v2398
    %v2846 = vunpack.c.h.b16 %v2398
    %v2847 = vunpack.c.l.b16 %v2399
    %v2848 = vunpack.c.h.b16 %v2399
    %v2849 = vunpack.c.l.b16 %v2400
    %v2850 = vunpack.c.l.b16 %v2401
    %v2851 = vunpack.c.h.b16 %v2401
    %v2852 = vunpack.c.l.b16 %v2402
    %v2853 = vunpack.c.h.b16 %v2402
    %v2854 = vunpack.c.l.b16 %v2403
    %v2855 = vunpack.c.h.b16 %v2403
    %v2856 = vunpack.c.l.b16 %v2404
    %v2857 = vunpack.c.l.b16 %v2405
    %v2858 = vunpack.c.h.b16 %v2405
    %v2859 = vunpack.c.l.b16 %v2406
    %v2860 = vunpack.c.h.b16 %v2406
    %v2861 = vunpack.c.l.b16 %v2407
    %v2862 = vunpack.c.h.b16 %v2407
    %v2863 = vunpack.c.l.b16 %v2408
    %v2864 = vunpack.c.l.b16 %v2409
    %v2865 = vunpack.c.h.b16 %v2409
    %v2866 = vunpack.c.l.b16 %v2410
    %v2867 = vunpack.c.h.b16 %v2410
    %v2868 = vunpack.c.l.b16 %v2411
    %v2869 = vunpack.c.h.b16 %v2411
    %v2870 = vunpack.c.l.b16 %v2412
    %v2871 = vunpack.c.l.b16 %v2413
    %v2872 = vunpack.c.h.b16 %v2413
    %v2873 = vunpack.c.l.b16 %v2414
    %v2874 = vunpack.c.h.b16 %v2414
    %v2875 = vunpack.c.l.b16 %v2415
    %v2876 = vunpack.c.h.b16 %v2415
    %v2877 = vunpack.c.l.b16 %v2416
    %v2878 = vunpack.c.l.b16 %v2417
    %v2879 = vunpack.c.h.b16 %v2417
    %v2880 = vunpack.c.l.b16 %v2418
    %v2881 = vunpack.c.h.b16 %v2418
    %v2882 = vunpack.c.l.b16 %v2419
    %v2883 = vunpack.c.h.b16 %v2419
    %v2884 = vunpack.c.l.b16 %v2420
    %v2885 = vunpack.c.l.b16 %v2421
    %v2886 = vunpack.c.h.b16 %v2421
    %v2887 = vunpack.c.l.b16 %v2422
    %v2888 = vunpack.c.h.b16 %v2422
    %v2889 = vunpack.c.l.b16 %v2423
    %v2890 = vunpack.c.h.b16 %v2423
    %v2891 = vunpack.c.l.b16 %v2424
    %v2892 = vunpack.c.l.b16 %v2425
    %v2893 = vunpack.c.h.b16 %v2425
    %v2894 = vunpack.c.l.b16 %v2426
    %v2895 = vunpack.c.h.b16 %v2426
    %v2896 = vunpack.c.l.b16 %v2427
    %v2897 = vunpack.c.h.b16 %v2427
    %v2898 = vunpack.c.l.b16 %v2428
    %v2899 = vunpack.c.l.b16 %v2429
    %v2900 = vunpack.c.h.b16 %v2429
    %v2901 = vunpack.c.l.b16 %v2430
    %v2902 = vunpack.c.h.b16 %v2430
    %v2903 = vunpack.c.l.b16 %v2431
    %v2904 = vunpack.c.h.b16 %v2431
    %v2905 = vunpack.c.l.b16 %v2432
    %v2906 = vunpack.c.l.b16 %v2433
    %v2907 = vunpack.c.h.b16 %v2433
    %v2908 = vunpack.c.l.b16 %v2434
    %v2909 = vunpack.c.h.b16 %v2434
    %v2910 = vunpack.c.l.b16 %v2435
    %v2911 = vunpack.c.h.b16 %v2435
    %v2912 = vunpack.c.l.b16 %v2436
    %v2913 = vunpack.c.l.b16 %v2437
    %v2914 = vunpack.c.h.b16 %v2437
    %v2915 = vunpack.c.l.b16 %v2438
    %v2916 = vunpack.c.h.b16 %v2438
    %v2917 = vunpack.c.l.b16 %v2439
    %v2918 = vunpack.c.h.b16 %v2439
    %v2919 = vunpack.c.l.b16 %v2440
    %v2920 = vunpack.c.l.b16 %v2441
    %v2921 = vunpack.c.h.b16 %v2441
    %v2922 = vunpack.c.l.b16 %v2442
    %v2923 = vunpack.c.h.b16 %v2442
    %v2924 = vunpack.c.l.b16 %v2443
    %v2925 = vunpack.c.h.b16 %v2443
    %v2926 = vunpack.c.l.b16 %v2444
    %v2927 = vunpack.c.l.b16 %v2445
    %v2928 = vunpack.c.h.b16 %v2445
    %v2929 = vunpack.c.l.b16 %v2446
    %v2930 = vunpack.c.h.b16 %v2446
    %v2931 = vunpack.c.l.b16 %v2447
    %v2932 = vunpack.c.h.b16 %v2447
    %v2933 = vunpack.c.l.b16 %v2448
    %v2934 = vunpack.c.l.b16 %v2449
    %v2935 = vunpack.c.h.b16 %v2449
    %v2936 = vunpack.c.l.b16 %v2450
    %v2937 = vunpack.c.h.b16 %v2450
    %v2938 = vunpack.c.l.b16 %v2451
    %v2939 = vunpack.c.h.b16 %v2451
    %v2940 = vunpack.c.l.b16 %v2452
    %v2941 = vunpack.c.l.b16 %v2453
    %v2942 = vunpack.c.h.b16 %v2453
    %v2943 = vunpack.c.l.b16 %v2454
    %v2944 = vunpack.c.h.b16 %v2454
    %v2945 = vunpack.c.l.b16 %v2455
    %v2946 = vunpack.c.h.b16 %v2455
    %v2947 = vunpack.c.l.b16 %v2456
    %v2948 = vunpack.c.l.b16 %v2457
    %v2949 = vunpack.c.h.b16 %v2457
    %v2950 = vunpack.c.l.b16 %v2458
    %v2951 = vunpack.c.h.b16 %v2458
    %v2952 = vunpack.c.l.b16 %v2459
    %v2953 = vunpack.c.h.b16 %v2459
    %v2954 = vunpack.c.l.b16 %v2460
    %v2955 = vunpack.c.l.b16 %v2461
    %v2956 = vunpack.c.h.b16 %v2461
    %v2957 = vunpack.c.l.b16 %v2462
    %v2958 = vunpack.c.h.b16 %v2462
    %v2959 = vunpack.c.l.b16 %v2463
    %v2960 = vunpack.c.h.b16 %v2463
    %v2961 = vunpack.c.l.b16 %v2464
    %v2962 = vunpack.c.l.b16 %v2465
    %v2963 = vunpack.c.h.b16 %v2465
    %v2964 = vunpack.c.l.b16 %v2466
    %v2965 = vunpack.c.h.b16 %v2466
    %v2966 = vunpack.c.l.b16 %v2467
    %v2967 = vunpack.c.h.b16 %v2467
    %v2968 = vunpack.c.l.b16 %v2468
    %v2969 = vunpack.c.l.b16 %v2469
    %v2970 = vunpack.c.h.b16 %v2469
    %v2971 = vunpack.c.l.b16 %v2470
    %v2972 = vunpack.c.h.b16 %v2470
    %v2973 = vunpack.c.l.b16 %v2471
    %v2974 = vunpack.c.h.b16 %v2471
    %v2975 = vunpack.c.l.b16 %v2472
    %v2976 = vunpack.c.l.b16 %v2473
    %v2977 = vunpack.c.h.b16 %v2473
    %v2978 = vunpack.c.l.b16 %v2474
    %v2979 = vunpack.c.h.b16 %v2474
    %v2980 = vunpack.c.l.b16 %v2475
    %v2981 = vunpack.c.h.b16 %v2475
    %v2982 = vunpack.c.l.b16 %v2476
    %v2983 = vunpack.c.l.b16 %v2477
    %v2984 = vunpack.c.h.b16 %v2477
    %v2985 = vunpack.c.l.b16 %v2478
    %v2986 = vunpack.c.h.b16 %v2478
    %v2987 = vunpack.c.l.b16 %v2479
    %v2988 = vunpack.c.h.b16 %v2479
    %v2989 = vunpack.c.l.b16 %v2480
    %v2990 = vunpack.c.l.b16 %v2481
    %v2991 = vunpack.c.h.b16 %v2481
    %v2992 = vunpack.c.l.b16 %v2482
    %v2993 = vunpack.c.h.b16 %v2482
    %v2994 = vunpack.c.l.b16 %v2483
    %v2995 = vunpack.c.h.b16 %v2483
    %v2996 = vunpack.c.l.b16 %v2484
    %v2997 = vunpack.c.l.b16 %v2485
    %v2998 = vunpack.c.h.b16 %v2485
    %v2999 = vunpack.c.l.b16 %v2486
    %v3000 = vunpack.c.h.b16 %v2486
    %v3001 = vunpack.c.l.b16 %v2487
    %v3002 = vunpack.c.h.b16 %v2487
    %v3003 = vunpack.c.l.b16 %v2488
    %v3004 = vunpack.c.l.b16 %v2489
    %v3005 = vunpack.c.h.b16 %v2489
    %v3006 = vunpack.c.l.b16 %v2490
    %v3007 = vunpack.c.h.b16 %v2490
    %v3008 = vunpack.c.l.b16 %v2491
    %v3009 = vunpack.c.h.b16 %v2491
    %v3010 = vunpack.c.l.b16 %v2492
    %v3011 = vunpack.c.l.b16 %v2493
    %v3012 = vunpack.c.h.b16 %v2493
    %v3013 = vunpack.c.l.b16 %v2494
    %v3014 = vunpack.c.h.b16 %v2494
    %v3015 = vunpack.c.l.b16 %v2495
    %v3016 = vunpack.c.h.b16 %v2495
    %v3017 = vunpack.c.l.b16 %v2496
    %v3018 = vunpack.c.l.b16 %v2497
    %v3019 = vunpack.c.h.b16 %v2497
    %v3020 = vunpack.c.l.b16 %v2498
    %v3021 = vunpack.c.h.b16 %v2498
    %v3022 = vunpack.c.l.b16 %v2499
    %v3023 = vunpack.c.h.b16 %v2499
    %v3024 = vunpack.c.l.b16 %v2500
    %v3025 = vunpack.c.l.b16 %v2501
    %v3026 = vunpack.c.h.b16 %v2501
    %v3027 = vunpack.c.l.b16 %v2502
    %v3028 = vunpack.c.h.b16 %v2502
    %v3029 = vunpack.c.l.b16 %v2503
    %v3030 = vunpack.c.h.b16 %v2503
    %v3031 = vunpack.c.l.b16 %v2504
    %v3032 = vunpack.c.l.b16 %v2505
    %v3033 = vunpack.c.h.b16 %v2505
    %v3034 = vunpack.c.l.b16 %v2506
    %v3035 = vunpack.c.h.b16 %v2506
    %v3036 = vunpack.c.l.b16 %v2507
    %v3037 = vunpack.c.h.b16 %v2507
    %v3038 = vunpack.c.l.b16 %v2508
    %v3039 = vunpack.c.l.b16 %v2509
    %v3040 = vunpack.c.h.b16 %v2509
    %v3041 = vunpack.c.l.b16 %v2510
    %v3042 = vunpack.c.h.b16 %v2510
    %v3043 = vunpack.c.l.b16 %v2511
    %v3044 = vunpack.c.h.b16 %v2511
    %v3045 = vunpack.c.l.b16 %v2512
    %v3046 = vunpack.c.l.b16 %v2513
    %v3047 = vunpack.c.h.b16 %v2513
    %v3048 = vunpack.c.l.b16 %v2514
    %v3049 = vunpack.c.h.b16 %v2514
    %v3050 = vunpack.c.l.b16 %v2515
    %v3051 = vunpack.c.h.b16 %v2515
    %v3052 = vunpack.c.l.b16 %v2516
    %v3053 = vunpack.c.l.b16 %v2517
    %v3054 = vunpack.c.h.b16 %v2517
    %v3055 = vunpack.c.l.b16 %v2518
    %v3056 = vunpack.c.h.b16 %v2518
    %v3057 = vunpack.c.l.b16 %v2519
    %v3058 = vunpack.c.h.b16 %v2519
    %v3059 = vunpack.c.l.b16 %v2520
    %v3060 = vunpack.c.l.b16 %v2521
    %v3061 = vunpack.c.h.b16 %v2521
    %v3062 = vunpack.c.l.b16 %v2522
    %v3063 = vunpack.c.h.b16 %v2522
    %v3064 = vunpack.c.l.b16 %v2523
    %v3065 = vunpack.c.h.b16 %v2523
    %v3066 = vunpack.c.l.b16 %v2524
    %v3067 = vunpack.c.l.b16 %v2525
    %v3068 = vunpack.c.h.b16 %v2525
    %v3069 = vunpack.c.l.b16 %v2526
    %v3070 = vunpack.c.h.b16 %v2526
    %v3071 = vunpack.c.l.b16 %v2527
    %v3072 = vunpack.c.h.b16 %v2527
    %v3073 = vunpack.c.l.b16 %v2528
    %v3074 = vunpack.c.l.b16 %v2529
    %v3075 = vunpack.c.h.b16 %v2529
    %v3076 = vunpack.c.l.b16 %v2530
    %v3077 = vunpack.c.h.b16 %v2530
    %v3078 = vunpack.c.l.b16 %v2531
    %v3079 = vunpack.c.h.b16 %v2531
    %v3080 = vunpack.c.l.b16 %v2532
    %v3081 = vunpack.c.l.b16 %v2533
    %v3082 = vunpack.c.h.b16 %v2533
    %v3083 = vunpack.c.l.b16 %v2534
    %v3084 = vunpack.c.h.b16 %v2534
    %v3085 = vunpack.c.l.b16 %v2535
    %v3086 = vunpack.c.h.b16 %v2535
    %v3087 = vunpack.c.l.b16 %v2536
    %v3088 = vunpack.c.l.b16 %v2537
    %v3089 = vunpack.c.h.b16 %v2537
    %v3090 = vunpack.c.l.b16 %v2538
    %v3091 = vunpack.c.h.b16 %v2538
    %v3092 = vunpack.c.l.b16 %v2539
    %v3093 = vunpack.c.h.b16 %v2539
    %v3094 = vunpack.c.l.b16 %v2540
    %v3095 = vunpack.c.l.b16 %v2541
    %v3096 = vunpack.c.h.b16 %v2541
    %v3097 = vunpack.c.l.b16 %v2542
    %v3098 = vunpack.c.h.b16 %v2542
    %v3099 = vunpack.c.l.b16 %v2543
    %v3100 = vunpack.c.h.b16 %v2543
    %v3101 = vunpack.c.l.b16 %v2544
    %v3102 = vunpack.c.l.b16 %v2545
    %v3103 = vunpack.c.h.b16 %v2545
    %v3104 = vunpack.c.l.b16 %v2546
    %v3105 = vunpack.c.h.b16 %v2546
    %v3106 = vunpack.c.l.b16 %v2547
    %v3107 = vunpack.c.h.b16 %v2547
    %v3108 = vunpack.c.l.b16 %v2548
    %v3109 = vunpack.c.l.b16 %v2549
    %v3110 = vunpack.c.h.b16 %v2549
    %v3111 = vunpack.c.l.b16 %v2550
    %v3112 = vunpack.c.h.b16 %v2550
    %v3113 = vunpack.c.l.b16 %v2551
    %v3114 = vunpack.c.h.b16 %v2551
    %v3115 = vunpack.c.l.b16 %v2552
    %v3116 = vunpack.c.l.b16 %v2553
    %v3117 = vunpack.c.h.b16 %v2553
    %v3118 = vunpack.c.l.b16 %v2554
    %v3119 = vunpack.c.h.b16 %v2554
    %v3120 = vunpack.c.l.b16 %v2555
    %v3121 = vunpack.c.h.b16 %v2555
    %v3122 = vunpack.c.l.b16 %v2556
    %v3123 = vunpack.c.l.b16 %v2557
    %v3124 = vunpack.c.h.b16 %v2557
    %v3125 = vunpack.c.l.b16 %v2558
    %v3126 = vunpack.c.h.b16 %v2558
    %v3127 = vunpack.c.l.b16 %v2559
    %v3128 = vunpack.c.h.b16 %v2559
    %v3129 = vunpack.c.l.b16 %v2560
    %v3130 = vunpack.c.l.b16 %v2561
    %v3131 = vunpack.c.h.b16 %v2561
    %v3132 = vunpack.c.l.b16 %v2562
    %v3133 = vunpack.c.h.b16 %v2562
    %v3134 = vunpack.c.l.b16 %v2563
    %v3135 = vunpack.c.h.b16 %v2563
    %v3136 = vunpack.c.l.b16 %v2564
    %v3137 = vunpack.c.l.b16 %v2565
    %v3138 = vunpack.c.h.b16 %v2565
    %v3139 = vunpack.c.l.b16 %v2566
    %v3140 = vunpack.c.h.b16 %v2566
    %v3141 = vunpack.c.l.b16 %v2567
    %v3142 = vunpack.c.h.b16 %v2567
    %v3143 = vunpack.c.l.b16 %v2568
    %v3144 = vunpack.c.l.b16 %v2569
    %v3145 = vunpack.c.h.b16 %v2569
    %v3146 = vunpack.c.l.b16 %v2570
    %v3147 = vunpack.c.h.b16 %v2570
    %v3148 = vunpack.c.l.b16 %v2571
    %v3149 = vunpack.c.h.b16 %v2571
    %v3150 = vunpack.c.l.b16 %v2572
    %v3151 = vunpack.c.l.b16 %v2573
    %v3152 = vunpack.c.h.b16 %v2573
    %v3153 = vunpack.c.l.b16 %v2574
    %v3154 = vunpack.c.h.b16 %v2574
    %v3155 = vunpack.c.l.b16 %v2575
    %v3156 = vunpack.c.h.b16 %v2575
    %v3157 = vunpack.c.l.b16 %v2576
    %v3158 = vunpack.c.l.b16 %v2577
    %v3159 = vunpack.c.h.b16 %v2577
    %v3160 = vunpack.c.l.b16 %v2578
    %v3161 = vunpack.c.h.b16 %v2578
    %v3162 = vunpack.c.l.b16 %v2579
    %v3163 = vunpack.c.h.b16 %v2579
    %v3164 = vunpack.c.l.b16 %v2580
    %v3165 = vunpack.c.l.b16 %v2581
    %v3166 = vunpack.c.h.b16 %v2581
    %v3167 = vunpack.c.l.b16 %v2582
    %v3168 = vunpack.c.h.b16 %v2582
    %v3169 = vunpack.c.l.b16 %v2583
    %v3170 = vunpack.c.h.b16 %v2583
    %v3171 = vunpack.c.l.b16 %v2584
    %v3172 = vpack.c.b16 %v2829, %v2822
    %v3173 = vpack.c.b16 %v2830, %v2823
    %v3174 = vpack.c.b16 %v2831, %v2824
    %v3175 = vpack.c.b16 %v2832, %v2825
    %v3176 = vpack.c.b16 %v2833, %v2826
    %v3177 = vpack.c.b16 %v2834, %v2827
    %v3178 = vpack.c.b16 %v2835, %v2828
    %v3179 = vpack.c.b16 %v2843, %v2836
    %v3180 = vpack.c.b16 %v2844, %v2837
    %v3181 = vpack.c.b16 %v2845, %v2838
    %v3182 = vpack.c.b16 %v2846, %v2839
    %v3183 = vpack.c.b16 %v2847, %v2840
    %v3184 = vpack.c.b16 %v2848, %v2841
    %v3185 = vpack.c.b16 %v2849, %v2842
    %v3186 = vpack.c.b16 %v2857, %v2850
    %v3187 = vpack.c.b16 %v2858, %v2851
    %v3188 = vpack.c.b16 %v2859, %v2852
    %v3189 = vpack.c.b16 %v2860, %v2853
    %v3190 = vpack.c.b16 %v2861, %v2854
    %v3191 = vpack.c.b16 %v2862, %v2855
    %v3192 = vpack.c.b16 %v2863, %v2856
    %v3193 = vpack.c.b16 %v2871, %v2864
    %v3194 = vpack.c.b16 %v2872, %v2865
    %v3195 = vpack.c.b16 %v2873, %v2866
    %v3196 = vpack.c.b16 %v2874, %v2867
    %v3197 = vpack.c.b16 %v2875, %v2868
    %v3198 = vpack.c.b16 %v2876, %v2869
    %v3199 = vpack.c.b16 %v2877, %v2870
    %v3200 = vpack.c.b16 %v2885, %v2878
    %v3201 = vpack.c.b16 %v2886, %v2879
    %v3202 = vpack.c.b16 %v2887, %v2880
    %v3203 = vpack.c.b16 %v2888, %v2881
    %v3204 = vpack.c.b16 %v2889, %v2882
    %v3205 = vpack.c.b16 %v2890, %v2883
    %v3206 = vpack.c.b16 %v2891, %v2884
    %v3207 = vpack.c.b16 %v2899, %v2892
    %v3208 = vpack.c.b16 %v2900, %v2893
    %v3209 = vpack.c.b16 %v2901, %v2894
    %v3210 = vpack.c.b16 %v2902, %v2895
    %v3211 = vpack.c.b16 %v2903, %v2896
    %v3212 = vpack.c.b16 %v2904, %v2897
    %v3213 = vpack.c.b16 %v2905, %v2898
    %v3214 = vpack.c.b16 %v2913, %v2906
    %v3215 = vpack.c.b16 %v2914, %v2907
    %v3216 = vpack.c.b16 %v2915, %v2908
    %v3217 = vpack.c.b16 %v2916, %v2909
    %v3218 = vpack.c.b16 %v2917, %v2910
    %v3219 = vpack.c.b16 %v2918, %v2911
    %v3220 = vpack.c.b16 %v2919, %v2912
    %v3221 = vpack.c.b16 %v2927, %v2920
    %v3222 = vpack.c.b16 %v2928, %v2921
    %v3223 = vpack.c.b16 %v2929, %v2922
    %v3224 = vpack.c.b16 %v2930, %v2923
    %v3225 = vpack.c.b16 %v2931, %v2924
    %v3226 = vpack.c.b16 %v2932, %v2925
    %v3227 = vpack.c.b16 %v2933, %v2926
    %v3228 = vpack.c.b16 %v2941, %v2934
    %v3229 = vpack.c.b16 %v2942, %v2935
    %v3230 = vpack.c.b16 %v2943, %v2936
    %v3231 = vpack.c.b16 %v2944, %v2937
    %v3232 = vpack.c.b16 %v2945, %v2938
    %v3233 = vpack.c.b16 %v2946, %v2939
    %v3234 = vpack.c.b16 %v2947, %v2940
    %v3235 = vpack.c.b16 %v2955, %v2948
    %v3236 = vpack.c.b16 %v2956, %v2949
    %v3237 = vpack.c.b16 %v2957, %v2950
    %v3238 = vpack.c.b16 %v2958, %v2951
    %v3239 = vpack.c.b16 %v2959, %v2952
    %v3240 = vpack.c.b16 %v2960, %v2953
    %v3241 = vpack.c.b16 %v2961, %v2954
    %v3242 = vpack.c.b16 %v2969, %v2962
    %v3243 = vpack.c.b16 %v2970, %v2963
    %v3244 = vpack.c.b16 %v2971, %v2964
    %v3245 = vpack.c.b16 %v2972, %v2965
    %v3246 = vpack.c.b16 %v2973, %v2966
    %v3247 = vpack.c.b16 %v2974, %v2967
    %v3248 = vpack.c.b16 %v2975, %v2968
    %v3249 = vpack.c.b16 %v2983, %v2976
    %v3250 = vpack.c.b16 %v2984, %v2977
    %v3251 = vpack.c.b16 %v2985, %v2978
    %v3252 = vpack.c.b16 %v2986, %v2979
    %v3253 = vpack.c.b16 %v2987, %v2980
    %v3254 = vpack.c.b16 %v2988, %v2981
    %v3255 = vpack.c.b16 %v2989, %v2982
    %v3256 = vpack.c.b16 %v2997, %v2990
    %v3257 = vpack.c.b16 %v2998, %v2991
    %v3258 = vpack.c.b16 %v2999, %v2992
    %v3259 = vpack.c.b16 %v3000, %v2993
    %v3260 = vpack.c.b16 %v3001, %v2994
    %v3261 = vpack.c.b16 %v3002, %v2995
    %v3262 = vpack.c.b16 %v3003, %v2996
    %v3263 = vpack.c.b16 %v3011, %v3004
    %v3264 = vpack.c.b16 %v3012, %v3005
    %v3265 = vpack.c.b16 %v3013, %v3006
    %v3266 = vpack.c.b16 %v3014, %v3007
    %v3267 = vpack.c.b16 %v3015, %v3008
    %v3268 = vpack.c.b16 %v3016, %v3009
    %v3269 = vpack.c.b16 %v3017, %v3010
    %v3270 = vpack.c.b16 %v3025, %v3018
    %v3271 = vpack.c.b16 %v3026, %v3019
    %v3272 = vpack.c.b16 %v3027, %v3020
    %v3273 = vpack.c.b16 %v3028, %v3021
    %v3274 = vpack.c.b16 %v3029, %v3022
    %v3275 = vpack.c.b16 %v3030, %v3023
    %v3276 = vpack.c.b16 %v3031, %v3024
    %v3277 = vpack.c.b16 %v3039, %v3032
    %v3278 = vpack.c.b16 %v3040, %v3033
    %v3279 = vpack.c.b16 %v3041, %v3034
    %v3280 = vpack.c.b16 %v3042, %v3035
    %v3281 = vpack.c.b16 %v3043, %v3036
    %v3282 = vpack.c.b16 %v3044, %v3037
    %v3283 = vpack.c.b16 %v3045, %v3038
    %v3284 = vpack.c.b16 %v3053, %v3046
    %v3285 = vpack.c.b16 %v3054, %v3047
    %v3286 = vpack.c.b16 %v3055, %v3048
    %v3287 = vpack.c.b16 %v3056, %v3049
    %v3288 = vpack.c.b16 %v3057, %v3050
    %v3289 = vpack.c.b16 %v3058, %v3051
    %v3290 = vpack.c.b16 %v3059, %v3052
    %v3291 = vpack.c.b16 %v3067, %v3060
    %v3292 = vpack.c.b16 %v3068, %v3061
    %v3293 = vpack.c.b16 %v3069, %v3062
    %v3294 = vpack.c.b16 %v3070, %v3063
    %v3295 = vpack.c.b16 %v3071, %v3064
    %v3296 = vpack.c.b16 %v3072, %v3065
    %v3297 = vpack.c.b16 %v3073, %v3066
    %v3298 = vpack.c.b16 %v3081, %v3074
    %v3299 = vpack.c.b16 %v3082, %v3075
    %v3300 = vpack.c.b16 %v3083, %v3076
    %v3301 = vpack.c.b16 %v3084, %v3077
    %v3302 = vpack.c.b16 %v3085, %v3078
    %v3303 = vpack.c.b16 %v3086, %v3079
    %v3304 = vpack.c.b16 %v3087, %v3080
    %v3305 = vpack.c.b16 %v3095, %v3088
    %v3306 = vpack.c.b16 %v3096, %v3089
    %v3307 = vpack.c.b16 %v3097, %v3090
    %v3308 = vpack.c.b16 %v3098, %v3091
    %v3309 = vpack.c.b16 %v3099, %v3092
    %v3310 = vpack.c.b16 %v3100, %v3093
    %v3311 = vpack.c.b16 %v3101, %v3094
    %v3312 = vpack.c.b16 %v3109, %v3102
    %v3313 = vpack.c.b16 %v3110, %v3103
    %v3314 = vpack.c.b16 %v3111, %v3104
    %v3315 = vpack.c.b16 %v3112, %v3105
    %v3316 = vpack.c.b16 %v3113, %v3106
    %v3317 = vpack.c.b16 %v3114, %v3107
    %v3318 = vpack.c.b16 %v3115, %v3108
    %v3319 = vpack.c.b16 %v3123, %v3116
    %v3320 = vpack.c.b16 %v3124, %v3117
    %v3321 = vpack.c.b16 %v3125, %v3118
    %v3322 = vpack.c.b16 %v3126, %v3119
    %v3323 = vpack.c.b16 %v3127, %v3120
    %v3324 = vpack.c.b16 %v3128, %v3121
    %v3325 = vpack.c.b16 %v3129, %v3122
    %v3326 = vpack.c.b16 %v3137, %v3130
    %v3327 = vpack.c.b16 %v3138, %v3131
    %v3328 = vpack.c.b16 %v3139, %v3132
    %v3329 = vpack.c.b16 %v3140, %v3133
    %v3330 = vpack.c.b16 %v3141, %v3134
    %v3331 = vpack.c.b16 %v3142, %v3135
    %v3332 = vpack.c.b16 %v3143, %v3136
    %v3333 = vpack.c.b16 %v3151, %v3144
    %v3334 = vpack.c.b16 %v3152, %v3145
    %v3335 = vpack.c.b16 %v3153, %v3146
    %v3336 = vpack.c.b16 %v3154, %v3147
    %v3337 = vpack.c.b16 %v3155, %v3148
    %v3338 = vpack.c.b16 %v3156, %v3149
    %v3339 = vpack.c.b16 %v3157, %v3150
    %v3340 = vpack.c.b16 %v3165, %v3158
    %v3341 = vpack.c.b16 %v3166, %v3159
    %v3342 = vpack.c.b16 %v3167, %v3160
    %v3343 = vpack.c.b16 %v3168, %v3161
    %v3344 = vpack.c.b16 %v3169, %v3162
    %v3345 = vpack.c.b16 %v3170, %v3163
    %v3346 = vpack.c.b16 %v3171, %v3164
    %3522 = vmatprep.subr.bf16.mxu0 %v3222
    %3523 = vmatpush1.bf16.msra.mxu0 %v3221
    %3524 = vmatprep.subr.bf16.mxu0 %v3215
    %3525 = vmatpush1.bf16.msra.mxu0 %v3214
    %3526 = vmatprep.subr.bf16.mxu0 %v3208
    %3527 = vmatpush1.bf16.msra.mxu0 %v3207
    %3528 = vmatprep.subr.bf16.mxu0 %v3201
    %3529 = vmatpush1.bf16.msra.mxu0 %v3200
    %3530 = vmatprep.subr.bf16.mxu0 %v3194
    %3531 = vmatpush1.bf16.msra.mxu0 %v3193
    %3532 = vmatprep.subr.bf16.mxu0 %v3187
    %3533 = vmatpush1.bf16.msra.mxu0 %v3186
    %3534 = vmatprep.subr.bf16.mxu0 %v3180
    %3535 = vmatpush1.bf16.msra.mxu0 %v3179
    %3536 = vmatprep.subr.bf16.mxu0 %v3173
    %3537 = vmatpush1.bf16.msra.mxu0 %v3172
    %3538 = vmatprep.subr.bf16.mxu0 %v3278
    %3539 = vmatpush2.bf16.msra.mxu0 %v3277
    %3540 = vmatprep.subr.bf16.mxu0 %v3271
    %3541 = vmatpush2.bf16.msra.mxu0 %v3270
    %3542 = vmatprep.subr.bf16.mxu0 %v3264
    %3543 = vmatpush2.bf16.msra.mxu0 %v3263
    %3544 = vmatprep.subr.bf16.mxu0 %v3257
    %3545 = vmatpush2.bf16.msra.mxu0 %v3256
    %3546 = vmatprep.subr.bf16.mxu0 %v3250
    %3547 = vmatpush2.bf16.msra.mxu0 %v3249
    %3548 = vmatprep.subr.bf16.mxu0 %v3243
    %3549 = vmatpush2.bf16.msra.mxu0 %v3242
    %3550 = vmatprep.subr.bf16.mxu0 %v3236
    %3551 = vmatpush2.bf16.msra.mxu0 %v3235
    %3552 = vmatprep.subr.bf16.mxu0 %v3229
    %3553 = vmatpush2.bf16.msra.mxu0 %v3228
    %3554 = vmatprep.mubr.bf16.mxu0 %v1165
    %3555 = vmatmul.mubr.bf16.gmra.mxu0 %v1164
    %v3556 = vpop.f32.mrf.mxu0
    %v3557 = vadd.f32 %v2590, %v3556
    %v3558 = vpop.f32.mrf.mxu0
    %v3559 = vadd.f32 %v2594, %v3558
    %v3560 = vpop.f32.mrf.mxu0
    %v3561 = vpop.f32.mrf.mxu0
    %3562 = vdwg.mxu0
    %3563 = vmatprep.subr.bf16.mxu0 %v3334
    %3564 = vmatpush1.bf16.msra.mxu0 %v3333
    %3565 = vmatprep.subr.bf16.mxu0 %v3327
    %3566 = vmatpush1.bf16.msra.mxu0 %v3326
    %3567 = vmatprep.subr.bf16.mxu0 %v3320
    %3568 = vmatpush1.bf16.msra.mxu0 %v3319
    %3569 = vmatprep.subr.bf16.mxu0 %v3313
    %3570 = vmatpush1.bf16.msra.mxu0 %v3312
    %3571 = vmatprep.subr.bf16.mxu0 %v3306
    %3572 = vmatpush1.bf16.msra.mxu0 %v3305
    %3573 = vmatprep.subr.bf16.mxu0 %v3299
    %3574 = vmatpush1.bf16.msra.mxu0 %v3298
    %3575 = vmatprep.subr.bf16.mxu0 %v3292
    %3576 = vmatpush1.bf16.msra.mxu0 %v3291
    %3577 = vmatprep.subr.bf16.mxu0 %v3285
    %3578 = vmatpush1.bf16.msra.mxu0 %v3284
    %3579 = vmatprep.subr.bf16.mxu0 0
    %3580 = vmatpush2.bf16.msra.mxu0 0
    %3581 = vmatprep.subr.bf16.mxu0 0
    %3582 = vmatpush2.bf16.msra.mxu0 0
    %3583 = vmatprep.subr.bf16.mxu0 0
    %3584 = vmatpush2.bf16.msra.mxu0 0
    %3585 = vmatprep.subr.bf16.mxu0 0
    %3586 = vmatpush2.bf16.msra.mxu0 0
    %3587 = vmatprep.subr.bf16.mxu0 0
    %3588 = vmatpush2.bf16.msra.mxu0 0
    %3589 = vmatprep.subr.bf16.mxu0 0
    %3590 = vmatpush2.bf16.msra.mxu0 0
    %3591 = vmatprep.subr.bf16.mxu0 0
    %3592 = vmatpush2.bf16.msra.mxu0 0
    %3593 = vmatprep.subr.bf16.mxu0 %v3341
    %3594 = vmatpush2.bf16.msra.mxu0 %v3340
    %3595 = vmatprep.mubr.bf16.mxu0 %v2044
    %3596 = vmatmul.mubr.bf16.gmra.mxu0 %v1166
    %v3597 = vpop.f32.mrf.mxu0
    %v3598 = vadd.f32 %v3557, %v3597
    %v3599 = vpop.f32.mrf.mxu0
    %v3600 = vadd.f32 %v3559, %v3599
    %v3601 = vpop.f32.mrf.mxu0
    %v3602 = vpop.f32.mrf.mxu0
    %3603 = vdwg.mxu0
    %3604 = vmatprep.subr.bf16.mxu0 %v3224
    %3605 = vmatpush1.bf16.msra.mxu0 %v3223
    %3606 = vmatprep.subr.bf16.mxu0 %v3217
    %3607 = vmatpush1.bf16.msra.mxu0 %v3216
    %3608 = vmatprep.subr.bf16.mxu0 %v3210
    %3609 = vmatpush1.bf16.msra.mxu0 %v3209
    %3610 = vmatprep.subr.bf16.mxu0 %v3203
    %3611 = vmatpush1.bf16.msra.mxu0 %v3202
    %3612 = vmatprep.subr.bf16.mxu0 %v3196
    %3613 = vmatpush1.bf16.msra.mxu0 %v3195
    %3614 = vmatprep.subr.bf16.mxu0 %v3189
    %3615 = vmatpush1.bf16.msra.mxu0 %v3188
    %3616 = vmatprep.subr.bf16.mxu0 %v3182
    %3617 = vmatpush1.bf16.msra.mxu0 %v3181
    %3618 = vmatprep.subr.bf16.mxu0 %v3175
    %3619 = vmatpush1.bf16.msra.mxu0 %v3174
    %3620 = vmatprep.subr.bf16.mxu0 %v3280
    %3621 = vmatpush2.bf16.msra.mxu0 %v3279
    %3622 = vmatprep.subr.bf16.mxu0 %v3273
    %3623 = vmatpush2.bf16.msra.mxu0 %v3272
    %3624 = vmatprep.subr.bf16.mxu0 %v3266
    %3625 = vmatpush2.bf16.msra.mxu0 %v3265
    %3626 = vmatprep.subr.bf16.mxu0 %v3259
    %3627 = vmatpush2.bf16.msra.mxu0 %v3258
    %3628 = vmatprep.subr.bf16.mxu0 %v3252
    %3629 = vmatpush2.bf16.msra.mxu0 %v3251
    %3630 = vmatprep.subr.bf16.mxu0 %v3245
    %3631 = vmatpush2.bf16.msra.mxu0 %v3244
    %3632 = vmatprep.subr.bf16.mxu0 %v3238
    %3633 = vmatpush2.bf16.msra.mxu0 %v3237
    %3634 = vmatprep.subr.bf16.mxu0 %v3231
    %3635 = vmatpush2.bf16.msra.mxu0 %v3230
    %3636 = vmatprep.mubr.bf16.mxu0 %v1165
    %3637 = vmatmul.mubr.bf16.gmra.mxu0 %v1164
    %v3638 = vpop.f32.mrf.mxu0
    %v3639 = vadd.f32 %v2598, %v3638
    %v3640 = vpop.f32.mrf.mxu0
    %v3641 = vadd.f32 %v2602, %v3640
    %v3642 = vpop.f32.mrf.mxu0
    %v3643 = vpop.f32.mrf.mxu0
    %3644 = vdwg.mxu0
    %3645 = vmatprep.subr.bf16.mxu0 %v3336
    %3646 = vmatpush1.bf16.msra.mxu0 %v3335
    %3647 = vmatprep.subr.bf16.mxu0 %v3329
    %3648 = vmatpush1.bf16.msra.mxu0 %v3328
    %3649 = vmatprep.subr.bf16.mxu0 %v3322
    %3650 = vmatpush1.bf16.msra.mxu0 %v3321
    %3651 = vmatprep.subr.bf16.mxu0 %v3315
    %3652 = vmatpush1.bf16.msra.mxu0 %v3314
    %3653 = vmatprep.subr.bf16.mxu0 %v3308
    %3654 = vmatpush1.bf16.msra.mxu0 %v3307
    %3655 = vmatprep.subr.bf16.mxu0 %v3301
    %3656 = vmatpush1.bf16.msra.mxu0 %v3300
    %3657 = vmatprep.subr.bf16.mxu0 %v3294
    %3658 = vmatpush1.bf16.msra.mxu0 %v3293
    %3659 = vmatprep.subr.bf16.mxu0 %v3287
    %3660 = vmatpush1.bf16.msra.mxu0 %v3286
    %3661 = vmatprep.subr.bf16.mxu0 0
    %3662 = vmatpush2.bf16.msra.mxu0 0
    %3663 = vmatprep.subr.bf16.mxu0 0
    %3664 = vmatpush2.bf16.msra.mxu0 0
    %3665 = vmatprep.subr.bf16.mxu0 0
    %3666 = vmatpush2.bf16.msra.mxu0 0
    %3667 = vmatprep.subr.bf16.mxu0 0
    %3668 = vmatpush2.bf16.msra.mxu0 0
    %3669 = vmatprep.subr.bf16.mxu0 0
    %3670 = vmatpush2.bf16.msra.mxu0 0
    %3671 = vmatprep.subr.bf16.mxu0 0
    %3672 = vmatpush2.bf16.msra.mxu0 0
    %3673 = vmatprep.subr.bf16.mxu0 0
    %3674 = vmatpush2.bf16.msra.mxu0 0
    %3675 = vmatprep.subr.bf16.mxu0 %v3343
    %3676 = vmatpush2.bf16.msra.mxu0 %v3342
    %3677 = vmatprep.mubr.bf16.mxu0 %v2044
    %3678 = vmatmul.mubr.bf16.gmra.mxu0 %v1166
    %v3679 = vpop.f32.mrf.mxu0
    %v3680 = vadd.f32 %v3639, %v3679
    %v3681 = vpop.f32.mrf.mxu0
    %v3682 = vadd.f32 %v3641, %v3681
    %v3683 = vpop.f32.mrf.mxu0
    %v3684 = vpop.f32.mrf.mxu0
    %3685 = vdwg.mxu0
    %3686 = vmatprep.subr.bf16.mxu0 %v3226
    %3687 = vmatpush1.bf16.msra.mxu0 %v3225
    %3688 = vmatprep.subr.bf16.mxu0 %v3219
    %3689 = vmatpush1.bf16.msra.mxu0 %v3218
    %3690 = vmatprep.subr.bf16.mxu0 %v3212
    %3691 = vmatpush1.bf16.msra.mxu0 %v3211
    %3692 = vmatprep.subr.bf16.mxu0 %v3205
    %3693 = vmatpush1.bf16.msra.mxu0 %v3204
    %3694 = vmatprep.subr.bf16.mxu0 %v3198
    %3695 = vmatpush1.bf16.msra.mxu0 %v3197
    %3696 = vmatprep.subr.bf16.mxu0 %v3191
    %3697 = vmatpush1.bf16.msra.mxu0 %v3190
    %3698 = vmatprep.subr.bf16.mxu0 %v3184
    %3699 = vmatpush1.bf16.msra.mxu0 %v3183
    %3700 = vmatprep.subr.bf16.mxu0 %v3177
    %3701 = vmatpush1.bf16.msra.mxu0 %v3176
    %3702 = vmatprep.subr.bf16.mxu0 %v3282
    %3703 = vmatpush2.bf16.msra.mxu0 %v3281
    %3704 = vmatprep.subr.bf16.mxu0 %v3275
    %3705 = vmatpush2.bf16.msra.mxu0 %v3274
    %3706 = vmatprep.subr.bf16.mxu0 %v3268
    %3707 = vmatpush2.bf16.msra.mxu0 %v3267
    %3708 = vmatprep.subr.bf16.mxu0 %v3261
    %3709 = vmatpush2.bf16.msra.mxu0 %v3260
    %3710 = vmatprep.subr.bf16.mxu0 %v3254
    %3711 = vmatpush2.bf16.msra.mxu0 %v3253
    %3712 = vmatprep.subr.bf16.mxu0 %v3247
    %3713 = vmatpush2.bf16.msra.mxu0 %v3246
    %3714 = vmatprep.subr.bf16.mxu0 %v3240
    %3715 = vmatpush2.bf16.msra.mxu0 %v3239
    %3716 = vmatprep.subr.bf16.mxu0 %v3233
    %3717 = vmatpush2.bf16.msra.mxu0 %v3232
    %3718 = vmatprep.mubr.bf16.mxu0 %v1165
    %3719 = vmatmul.mubr.bf16.gmra.mxu0 %v1164
    %v3720 = vpop.f32.mrf.mxu0
    %v3721 = vadd.f32 %v2606, %v3720
    %v3722 = vpop.f32.mrf.mxu0
    %v3723 = vadd.f32 %v2610, %v3722
    %v3724 = vpop.f32.mrf.mxu0
    %v3725 = vpop.f32.mrf.mxu0
    %3726 = vdwg.mxu0
    %3727 = vmatprep.subr.bf16.mxu0 %v3338
    %3728 = vmatpush1.bf16.msra.mxu0 %v3337
    %3729 = vmatprep.subr.bf16.mxu0 %v3331
    %3730 = vmatpush1.bf16.msra.mxu0 %v3330
    %3731 = vmatprep.subr.bf16.mxu0 %v3324
    %3732 = vmatpush1.bf16.msra.mxu0 %v3323
    %3733 = vmatprep.subr.bf16.mxu0 %v3317
    %3734 = vmatpush1.bf16.msra.mxu0 %v3316
    %3735 = vmatprep.subr.bf16.mxu0 %v3310
    %3736 = vmatpush1.bf16.msra.mxu0 %v3309
    %3737 = vmatprep.subr.bf16.mxu0 %v3303
    %3738 = vmatpush1.bf16.msra.mxu0 %v3302
    %3739 = vmatprep.subr.bf16.mxu0 %v3296
    %3740 = vmatpush1.bf16.msra.mxu0 %v3295
    %3741 = vmatprep.subr.bf16.mxu0 %v3289
    %3742 = vmatpush1.bf16.msra.mxu0 %v3288
    %3743 = vmatprep.subr.bf16.mxu0 0
    %3744 = vmatpush2.bf16.msra.mxu0 0
    %3745 = vmatprep.subr.bf16.mxu0 0
    %3746 = vmatpush2.bf16.msra.mxu0 0
    %3747 = vmatprep.subr.bf16.mxu0 0
    %3748 = vmatpush2.bf16.msra.mxu0 0
    %3749 = vmatprep.subr.bf16.mxu0 0
    %3750 = vmatpush2.bf16.msra.mxu0 0
    %3751 = vmatprep.subr.bf16.mxu0 0
    %3752 = vmatpush2.bf16.msra.mxu0 0
    %3753 = vmatprep.subr.bf16.mxu0 0
    %3754 = vmatpush2.bf16.msra.mxu0 0
    %3755 = vmatprep.subr.bf16.mxu0 0
    %3756 = vmatpush2.bf16.msra.mxu0 0
    %3757 = vmatprep.subr.bf16.mxu0 %v3345
    %3758 = vmatpush2.bf16.msra.mxu0 %v3344
    %3759 = vmatprep.mubr.bf16.mxu0 %v2044
    %3760 = vmatmul.mubr.bf16.gmra.mxu0 %v1166
    %v3761 = vpop.f32.mrf.mxu0
    %v3762 = vadd.f32 %v3721, %v3761
    %v3763 = vpop.f32.mrf.mxu0
    %v3764 = vadd.f32 %v3723, %v3763
    %v3765 = vpop.f32.mrf.mxu0
    %v3766 = vpop.f32.mrf.mxu0
    %3767 = vdwg.mxu0
    %3768 = vmatprep.subr.bf16.mxu0 0
    %3769 = vmatpush1.bf16.msra.mxu0 %v3227
    %3770 = vmatprep.subr.bf16.mxu0 0
    %3771 = vmatpush1.bf16.msra.mxu0 %v3220
    %3772 = vmatprep.subr.bf16.mxu0 0
    %3773 = vmatpush1.bf16.msra.mxu0 %v3213
    %3774 = vmatprep.subr.bf16.mxu0 0
    %3775 = vmatpush1.bf16.msra.mxu0 %v3206
    %3776 = vmatprep.subr.bf16.mxu0 0
    %3777 = vmatpush1.bf16.msra.mxu0 %v3199
    %3778 = vmatprep.subr.bf16.mxu0 0
    %3779 = vmatpush1.bf16.msra.mxu0 %v3192
    %3780 = vmatprep.subr.bf16.mxu0 0
    %3781 = vmatpush1.bf16.msra.mxu0 %v3185
    %3782 = vmatprep.subr.bf16.mxu0 0
    %3783 = vmatpush1.bf16.msra.mxu0 %v3178
    %3784 = vmatprep.subr.bf16.mxu0 0
    %3785 = vmatpush2.bf16.msra.mxu0 %v3283
    %3786 = vmatprep.subr.bf16.mxu0 0
    %3787 = vmatpush2.bf16.msra.mxu0 %v3276
    %3788 = vmatprep.subr.bf16.mxu0 0
    %3789 = vmatpush2.bf16.msra.mxu0 %v3269
    %3790 = vmatprep.subr.bf16.mxu0 0
    %3791 = vmatpush2.bf16.msra.mxu0 %v3262
    %3792 = vmatprep.subr.bf16.mxu0 0
    %3793 = vmatpush2.bf16.msra.mxu0 %v3255
    %3794 = vmatprep.subr.bf16.mxu0 0
    %3795 = vmatpush2.bf16.msra.mxu0 %v3248
    %3796 = vmatprep.subr.bf16.mxu0 0
    %3797 = vmatpush2.bf16.msra.mxu0 %v3241
    %3798 = vmatprep.subr.bf16.mxu0 0
    %3799 = vmatpush2.bf16.msra.mxu0 %v3234
    %3800 = vmatprep.mubr.bf16.mxu0 %v1165
    %3801 = vmatmul.mubr.bf16.gmra.mxu0 %v1164
    %v3802 = vpop.f32.mrf.mxu0
    %v3803 = vadd.f32 %v2614, %v3802
    %v3804 = vpop.f32.mrf.mxu0
    %v3805 = vpop.f32.mrf.mxu0
    %v3806 = vpop.f32.mrf.mxu0
    %3807 = vdwg.mxu0
    %3808 = vmatprep.subr.bf16.mxu0 0
    %3809 = vmatpush1.bf16.msra.mxu0 %v3339
    %3810 = vmatprep.subr.bf16.mxu0 0
    %3811 = vmatpush1.bf16.msra.mxu0 %v3332
    %3812 = vmatprep.subr.bf16.mxu0 0
    %3813 = vmatpush1.bf16.msra.mxu0 %v3325
    %3814 = vmatprep.subr.bf16.mxu0 0
    %3815 = vmatpush1.bf16.msra.mxu0 %v3318
    %3816 = vmatprep.subr.bf16.mxu0 0
    %3817 = vmatpush1.bf16.msra.mxu0 %v3311
    %3818 = vmatprep.subr.bf16.mxu0 0
    %3819 = vmatpush1.bf16.msra.mxu0 %v3304
    %3820 = vmatprep.subr.bf16.mxu0 0
    %3821 = vmatpush1.bf16.msra.mxu0 %v3297
    %3822 = vmatprep.subr.bf16.mxu0 0
    %3823 = vmatpush1.bf16.msra.mxu0 %v3290
    %3824 = vmatprep.subr.bf16.mxu0 0
    %3825 = vmatpush2.bf16.msra.mxu0 0
    %3826 = vmatprep.subr.bf16.mxu0 0
    %3827 = vmatpush2.bf16.msra.mxu0 0
    %3828 = vmatprep.subr.bf16.mxu0 0
    %3829 = vmatpush2.bf16.msra.mxu0 0
    %3830 = vmatprep.subr.bf16.mxu0 0
    %3831 = vmatpush2.bf16.msra.mxu0 0
    %3832 = vmatprep.subr.bf16.mxu0 0
    %3833 = vmatpush2.bf16.msra.mxu0 0
    %3834 = vmatprep.subr.bf16.mxu0 0
    %3835 = vmatpush2.bf16.msra.mxu0 0
    %3836 = vmatprep.subr.bf16.mxu0 0
    %3837 = vmatpush2.bf16.msra.mxu0 0
    %3838 = vmatprep.subr.bf16.mxu0 0
    %3839 = vmatpush2.bf16.msra.mxu0 %v3346
    %3840 = vmatprep.mubr.bf16.mxu0 %v2044
    %3841 = vmatmul.mubr.bf16.gmra.mxu0 %v1166
    %v3842 = vpop.f32.mrf.mxu0
    %v3843 = vadd.f32 %v3803, %v3842
    %v3844 = vpop.f32.mrf.mxu0
    %v3845 = vpop.f32.mrf.mxu0
    %v3846 = vpop.f32.mrf.mxu0
    %3847 = vdwg.mxu0
    %3848 = vst [vmem:[#allocation8] sm:$0xff] %v789
    %3849 = vst [vmem:[#allocation8 + $0x8] sm:$0xff] %v791
    %3850 = vst [vmem:[#allocation8 + $0x10] sm:$0xff] %v871
    %3851 = vst.msk [vmem:[#allocation8 + $0x18] sm:$0xff] %vm709, %v873
    %3852 = vst [vmem:[#allocation9] sm:$0xff] %v1159
    %3853 = vst [vmem:[#allocation11] sm:$0xff] %v2232
    %3854 = vst [vmem:[#allocation11 + $0x8] sm:$0xff] %v2233
    %3855 = vst [vmem:[#allocation11 + $0x10] sm:$0xff] %v2234
    %3856 = vst.msk [vmem:[#allocation11 + $0x18] sm:$0xff] %vm709, %v2235
    %3857 = vst [vmem:[#allocation12] sm:$0xff] %v2379
    %vm3858 = vcmask 588800
    %3859 = vst.msk [vmem:[#allocation12 + $0x8] sm:$0xff] %vm3858, %v2381
    %3860 = vst [vmem:[#allocation14] sm:$0xff] %v3598
    %3861 = vst [vmem:[#allocation14 + $0x8] sm:$0xff] %v3600
    %3862 = vst [vmem:[#allocation14 + $0x10] sm:$0xff] %v3680
    %3863 = vst [vmem:[#allocation14 + $0x18] sm:$0xff] %v3682
    %3864 = vst [vmem:[#allocation14 + $0x20] sm:$0xff] %v3762
    %3865 = vst [vmem:[#allocation14 + $0x28] sm:$0xff] %v3764
    %vm3866 = vcmask 261120
    %3867 = vst.msk [vmem:[#allocation14 + $0x30] sm:$0xff] %vm3866, %v3843
    // Predicated region
    $region46: #{fwd.1} parent=1 // pred_check
      _
    $region47: #{fwd.1} parent=1 // pred_check_branch
      %3869 = sbr.rel (0) target = $region49
    $region48: #{fwd.1} parent=1 // pred_region
      %s3871 = ssub.s32 512, 512
      %3872 = vsyncadd [#allocation4], %s3871
      %s3874 = sshll.u32 [#allocation8], 4
      %s3875 = int_to_ptr.vmem [resolvable:$true] %s3874
      %3877 = dma.vmem_to_hbm [thread:$0]  %s3875, 512, %s8, [#allocation4]
    $region49: #{fwd.1} parent=1 // pred_fallthru
      _
    // Predicated region
    $region50: #{fwd.1} parent=1 // pred_check
      _
    $region51: #{fwd.1} parent=1 // pred_check_branch
      %3879 = sbr.rel (0) target = $region53
    $region52: #{fwd.1} parent=1 // pred_region
      %s3881 = ssub.s32 128, 128
      %3882 = vsyncadd [#allocation10], %s3881
      %s3884 = sshll.u32 [#allocation9], 4
      %s3885 = int_to_ptr.vmem [resolvable:$true] %s3884
      %3887 = dma.vmem_to_hbm [thread:$0]  %s3885, 128, %s9, [#allocation10]
    $region53: #{fwd.1} parent=1 // pred_fallthru
      _
    // Predicated region
    $region54: #{fwd.1} parent=1 // pred_check
      _
    $region55: #{fwd.1} parent=1 // pred_check_branch
      %3889 = sbr.rel (0) target = $region57
    $region56: #{fwd.1} parent=1 // pred_region
      %s3891 = ssub.s32 512, 512
      %3892 = vsyncadd [#allocation10], %s3891
      %s3894 = sshll.u32 [#allocation11], 4
      %s3895 = int_to_ptr.vmem [resolvable:$true] %s3894
      %3897 = dma.vmem_to_hbm [thread:$0]  %s3895, 512, %s10, [#allocation10]
    $region57: #{fwd.1} parent=1 // pred_fallthru
      _
    // Predicated region
    $region58: #{fwd.1} parent=1 // pred_check
      _
    $region59: #{fwd.1} parent=1 // pred_check_branch
      %3899 = sbr.rel (0) target = $region61
    $region60: #{fwd.1} parent=1 // pred_region
      %s3901 = ssub.s32 256, 256
      %3902 = vsyncadd [#allocation13], %s3901
      %s3904 = sshll.u32 [#allocation12], 4
      %s3905 = int_to_ptr.vmem [resolvable:$true] %s3904
      %3907 = dma.vmem_to_hbm [thread:$0]  %s3905, 256, %s11, [#allocation13]
    $region61: #{fwd.1} parent=1 // pred_fallthru
      _
    // Predicated region
    $region62: #{fwd.1} parent=1 // pred_check
      _
    $region63: #{fwd.1} parent=1 // pred_check_branch
      %3909 = sbr.rel (0) target = $region65
    $region64: #{fwd.1} parent=1 // pred_region
      %s3911 = ssub.s32 896, 896
      %3912 = vsyncadd [#allocation13], %s3911
      %s3914 = sshll.u32 [#allocation14], 4
      %s3915 = int_to_ptr.vmem [resolvable:$true] %s3914
      %3917 = dma.vmem_to_hbm [thread:$0]  %s3915, 896, %s12, [#allocation13]
    $region65: #{fwd.1} parent=1 // pred_fallthru
      _
    // Predicated region
    $region66: #{fwd.1} parent=1 // pred_check
      _
    $region67: #{fwd.1} parent=1 // pred_check_branch
      %3919 = sbr.rel (0) target = $region69
    $region68: #{fwd.1} parent=1 // pred_region
      %3920 = dma.done [#allocation4], 512
    $region69: #{fwd.1} parent=1 // pred_fallthru
      _
    // Predicated region
    $region70: #{fwd.1} parent=1 // pred_check
      _
    $region71: #{fwd.1} parent=1 // pred_check_branch
      %3922 = sbr.rel (0) target = $region73
    $region72: #{fwd.1} parent=1 // pred_region
      %3923 = dma.done [#allocation10], 128
    $region73: #{fwd.1} parent=1 // pred_fallthru
      _
    // Predicated region
    $region74: #{fwd.1} parent=1 // pred_check
      _
    $region75: #{fwd.1} parent=1 // pred_check_branch
      %3925 = sbr.rel (0) target = $region77
    $region76: #{fwd.1} parent=1 // pred_region
      %3926 = dma.done [#allocation10], 512
    $region77: #{fwd.1} parent=1 // pred_fallthru
      _
    // Predicated region
    $region78: #{fwd.1} parent=1 // pred_check
      _
    $region79: #{fwd.1} parent=1 // pred_check_branch
      %3928 = sbr.rel (0) target = $region81
    $region80: #{fwd.1} parent=1 // pred_region
      %3929 = dma.done [#allocation13], 256
    $region81: #{fwd.1} parent=1 // pred_fallthru
      _
    // Predicated region
    $region82: #{fwd.1} parent=1 // pred_check
      _
    $region83: #{fwd.1} parent=1 // pred_check_branch
      %3931 = sbr.rel (0) target = $region85
    $region84: #{fwd.1} parent=1 // pred_region
      %3932 = dma.done [#allocation13], 896
    $region85: #{fwd.1} parent=1 // pred_fallthru
      _
    %3933 = vsyncpa [#allocation3], 1
    %3934 = vsyncpa [#allocation6], 1
    %3935 = vsyncpa [#allocation4], 1
    %3936 = vsyncpa [#allocation10], 1
    %3937 = vsyncpa [#allocation13], 1

</llo_original>
